<compile_context>
chip_gen: v7x
topology: tpu7x:2x2x1
jax: 0.10.0
libtpu: 0.0.40
codegen_flags: <defaults>
</compile_context>

<pallas_src>
import functools
import math

import jax
import jax.numpy as jnp
from jax.experimental import pallas as pl
from jax.experimental.pallas import tpu as pltpu


# ----------------------------------------------------------------------------
# Fused decoder-block kernel (one batch element per grid step)
# ----------------------------------------------------------------------------
def decoder_block_kernel(
    x_ref, sm_ref, em_ref,
    sa_wqkv_ref, sa_bqkv_ref, sa_wo_ref, sa_bo_ref,
    ca_wqkv_ref, ca_bqkv_ref, ca_wo_ref, ca_bo_ref,
    w1_ref, b1_ref, w2_ref, b2_ref,
    g1_ref, be1_ref, g2_ref, be2_ref, g3_ref, be3_ref,
    out_ref, *, num_heads, head_dim, eps):
    x = x_ref[0]                      # (S, D) float32
    S, D = x.shape
    scale = 1.0 / math.sqrt(head_dim)

    def layer_norm(y, g, b):
        # matches reference LayerNormalization: unbiased std, divide by (std+eps)
        mean = jnp.mean(y, axis=-1, keepdims=True)
        d = y - mean
        var = jnp.sum(d * d, axis=-1, keepdims=True) * (1.0 / (D - 1))
        inv = pl.reciprocal(jnp.sqrt(var) + eps, approx=True)
        return g * d * inv + b

    def mha(h, mask, wqkv_ref, bqkv_ref, wo_ref, bo_ref):
        # Fused QKV projection: (S, D) @ (D, 3D), bf16 operands, f32 accumulate.
        qkv = jnp.dot(h.astype(jnp.bfloat16), wqkv_ref[...],
                      preferred_element_type=jnp.float32) + bqkv_ref[...]
        q = (qkv[:, :D] * scale).astype(jnp.bfloat16)   # fold 1/sqrt(hd) into q
        k = qkv[:, D:2 * D].astype(jnp.bfloat16)
        v = qkv[:, 2 * D:].astype(jnp.bfloat16)
        wo = wo_ref[...]                                # (D, D) bf16, pre-transposed
        acc = jnp.zeros((S, D), jnp.float32)
        # TODO(synk): for production sizes (head_dim >= 128, large S) the heads
        # should be batched into a single (H, S, hd) matmul / flash-style KV
        # tiling; at demo size this static, fully-unrolled loop is fine.
        for hh in range(num_heads):
            sl = slice(hh * head_dim, (hh + 1) * head_dim)
            # q_h @ k_h^T without materializing a transpose.
            scores = jax.lax.dot_general(
                q[:, sl], k[:, sl], (((1,), (1,)), ((), ())),
                preferred_element_type=jnp.float32)      # (S, S)
            scores = jnp.where(mask == 0.0, -1e30, scores)   # finite -> no NaN rows
            scores = scores - jnp.max(scores, axis=-1, keepdims=True)
            p = jnp.exp(scores)
            p = p * pl.reciprocal(jnp.sum(p, axis=-1, keepdims=True), approx=True)
            ctx = jnp.dot(p.astype(jnp.bfloat16), v[:, sl],
                          preferred_element_type=jnp.float32)  # (S, hd)
            # Fold the head concat into the output projection: acc += ctx_h @ Wo_h
            acc = acc + jnp.dot(ctx.astype(jnp.bfloat16), wo[sl, :],
                                preferred_element_type=jnp.float32)
        return acc + bo_ref[...]

    sm = sm_ref[...]          # (S, S) shared across batch & heads
    em = em_ref[...]

    # 1) masked self-attention + residual + LayerNorm
    h = layer_norm(x + mha(x, sm, sa_wqkv_ref, sa_bqkv_ref, sa_wo_ref, sa_bo_ref),
                   g1_ref[...], be1_ref[...])
    # 2) "encoder-decoder" attention + residual + LayerNorm
    # TODO(synk): reference MultiHeadAttentionBlock has no cross-attention path
    # (forward only consumes `x`), so this is self-attention with the
    # encoder-decoder mask and `encoder_output` is unused, matching the module.
    h = layer_norm(h + mha(h, em, ca_wqkv_ref, ca_bqkv_ref, ca_wo_ref, ca_bo_ref),
                   g2_ref[...], be2_ref[...])
    # 3) FFN (Linear-ReLU-Linear) + residual + LayerNorm
    f = jnp.dot(h.astype(jnp.bfloat16), w1_ref[...],
                preferred_element_type=jnp.float32) + b1_ref[...]
    f = jnp.maximum(f, 0.0)
    f = jnp.dot(f.astype(jnp.bfloat16), w2_ref[...],
                preferred_element_type=jnp.float32) + b2_ref[...]
    h = layer_norm(h + f, g3_ref[...], be3_ref[...])

    out_ref[0] = h


# ----------------------------------------------------------------------------
# pallas_call wrapper: one call per DecoderBlock, grid over batch ("parallel")
# ----------------------------------------------------------------------------
def decoder_block_pallas(x, self_mask, ed_mask, blk, *, num_heads):
    B, S, D = x.shape
    head_dim = D // num_heads
    kernel = functools.partial(decoder_block_kernel, num_heads=num_heads,
                               head_dim=head_dim, eps=1e-6)

    def const_spec(a):
        nd = a.ndim
        return pl.BlockSpec(a.shape, lambda b, _nd=nd: (0,) * _nd)

    weights = [
        blk["sa"]["wqkv"], blk["sa"]["bqkv"], blk["sa"]["wo"], blk["sa"]["bo"],
        blk["ca"]["wqkv"], blk["ca"]["bqkv"], blk["ca"]["wo"], blk["ca"]["bo"],
        blk["ffn_w1"], blk["ffn_b1"], blk["ffn_w2"], blk["ffn_b2"],
        blk["ln1_g"], blk["ln1_b"], blk["ln2_g"], blk["ln2_b"],
        blk["ln3_g"], blk["ln3_b"],
    ]
    in_specs = ([pl.BlockSpec((1, S, D), lambda b: (b, 0, 0)),
                 const_spec(self_mask), const_spec(ed_mask)]
                + [const_spec(w) for w in weights])

    # TODO(synk): for large S/F, add flash-style KV / hidden-dim tiling and an
    # explicit vmem_limit_bytes (v7x has only 64 MiB physical VMEM); at demo
    # sizes everything fits comfortably in the default scoped VMEM.
    return pl.pallas_call(
        kernel,
        out_shape=jax.ShapeDtypeStruct((B, S, D), jnp.float32),
        grid=(B,),
        in_specs=in_specs,
        out_specs=pl.BlockSpec((1, S, D), lambda b: (b, 0, 0)),
        compiler_params=pltpu.CompilerParams(dimension_semantics=("parallel",)),
    )(x, self_mask, ed_mask, *weights)


# ----------------------------------------------------------------------------
# Parameter construction (PyTorch-default-style init, then kernel-ready layout)
# ----------------------------------------------------------------------------
def init_linear(key, out_dim, in_dim):
    k1, k2 = jax.random.split(key)
    bound = 1.0 / math.sqrt(in_dim)
    w = jax.random.uniform(k1, (out_dim, in_dim), jnp.float32, -bound, bound)
    b = jax.random.uniform(k2, (1, out_dim), jnp.float32, -bound, bound)
    return w, b


def _prep_mha(keys, d):
    (wq, bq), (wk, bk), (wv, bv), (wo, bo) = [init_linear(k, d, d) for k in keys]
    return {
        # pre-transposed to (in, out) and fused Q|K|V -> (D, 3D), bf16
        "wqkv": jnp.concatenate([wq.T, wk.T, wv.T], axis=1).astype(jnp.bfloat16),
        "bqkv": jnp.concatenate([bq, bk, bv], axis=1),        # (1, 3D) f32
        "wo": wo.T.astype(jnp.bfloat16),                      # (D, D) bf16
        "bo": bo,                                             # (1, D) f32
    }


def make_positional_encoding(max_seq_len, d_model):
    position = jnp.arange(max_seq_len, dtype=jnp.float32)[:, None]
    div_term = jnp.exp(jnp.arange(0, d_model, 2, dtype=jnp.float32)
                       * -(math.log(10000.0) / d_model))
    pe = jnp.zeros((max_seq_len, d_model), jnp.float32)
    pe = pe.at[:, 0::2].set(jnp.sin(position * div_term))
    pe = pe.at[:, 1::2].set(jnp.cos(position * div_term))
    return pe


def init_decoder_params(key, num_blocks, embed_dim, hidden_dim, vocab_size, max_seq_len):
    keys = jax.random.split(key, 1 + num_blocks)
    params = {
        "emb": jax.random.normal(keys[0], (vocab_size, embed_dim), jnp.float32),
        "pe": make_positional_encoding(max_seq_len, embed_dim),
        "blocks": [],
    }
    for bi in range(num_blocks):
        bk = jax.random.split(keys[1 + bi], 10)
        w1, b1 = init_linear(bk[8], hidden_dim, embed_dim)
        w2, b2 = init_linear(bk[9], embed_dim, hidden_dim)
        ones = jnp.ones((1, embed_dim), jnp.float32)
        zeros = jnp.zeros((1, embed_dim), jnp.float32)
        params["blocks"].append({
            "sa": _prep_mha(bk[0:4], embed_dim),
            "ca": _prep_mha(bk[4:8], embed_dim),
            "ffn_w1": w1.T.astype(jnp.bfloat16), "ffn_b1": b1,   # (D, F), (1, F)
            "ffn_w2": w2.T.astype(jnp.bfloat16), "ffn_b2": b2,   # (F, D), (1, D)
            "ln1_g": ones, "ln1_b": zeros,
            "ln2_g": ones, "ln2_b": zeros,
            "ln3_g": ones, "ln3_b": zeros,
        })
    return params


# ----------------------------------------------------------------------------
# Decoder forward
# ----------------------------------------------------------------------------
def _normalize_mask(mask, S):
    # One (S, S) mask shared across batch & heads (0 => masked out).
    # TODO(synk): per-batch masks would need a (B, S, S) input with a per-batch
    # BlockSpec; the demo (and typical causal/padding masks) broadcast anyway.
    if mask is None:
        return jnp.ones((S, S), jnp.float32)
    m = jnp.asarray(mask, jnp.float32)
    m = m.reshape(m.shape[-2:])
    return jnp.broadcast_to(m, (S, S))


def decoder_forward(tokens, encoder_output, params, num_heads,
                    self_mask=None, encoder_decoder_mask=None):
    del encoder_output  # unused: reference MHA block has no cross-attention path
    B, S = tokens.shape
    D = params["emb"].shape[1]

    # glue: embedding gather, sqrt(D) scaling, positional encoding (dropout = identity)
    h = (params["emb"][tokens] * math.sqrt(D) + params["pe"][None, :S, :]).astype(jnp.float32)

    sm = _normalize_mask(self_mask, S)
    em = _normalize_mask(encoder_decoder_mask, S)

    for blk in params["blocks"]:
        h = decoder_block_pallas(h, sm, em, blk, num_heads=num_heads)
    return h


# ----------------------------------------------------------------------------
# Main
# ----------------------------------------------------------------------------
if __name__ == "__main__":
    B, S = 2, 8
    D, H, F = 32, 4, 64
    V = 100
    NUM_BLOCKS = 2
    MAX_SEQ_LEN = 64

    root = jax.random.PRNGKey(0)
    k_tok, k_enc, k_par = jax.random.split(root, 3)

    tokens = jax.random.randint(k_tok, (B, S), 0, V)
    encoder_output = jax.random.normal(k_enc, (B, S, D), jnp.float32)
    params = init_decoder_params(k_par, NUM_BLOCKS, D, F, V, MAX_SEQ_LEN)

    # causal self-attention mask, (S, S), 0 => masked out
    causal = jnp.tril(jnp.ones((S, S), jnp.float32))

    out = decoder_forward(tokens, encoder_output, params, H,
                          self_mask=causal, encoder_decoder_mask=None)
    out = jax.block_until_ready(out)

    assert out.shape == (B, S, D), out.shape
    assert jnp.all(jnp.isfinite(out)), "non-finite output"
    print("KERNEL_OK")
</pallas_src>

<mosaic_0001>
module attributes {stable_mosaic.version = 11 : i64} {
  func.func @decoder_block_kernel(%arg0: i32, %arg1: memref<1x8x32xf32, #tpu.memory_space<vmem>>, %arg2: memref<8x8xf32, #tpu.memory_space<vmem>>, %arg3: memref<8x8xf32, #tpu.memory_space<vmem>>, %arg4: memref<32x96xbf16, #tpu.memory_space<vmem>>, %arg5: memref<1x96xf32, #tpu.memory_space<vmem>>, %arg6: memref<32x32xbf16, #tpu.memory_space<vmem>>, %arg7: memref<1x32xf32, #tpu.memory_space<vmem>>, %arg8: memref<32x96xbf16, #tpu.memory_space<vmem>>, %arg9: memref<1x96xf32, #tpu.memory_space<vmem>>, %arg10: memref<32x32xbf16, #tpu.memory_space<vmem>>, %arg11: memref<1x32xf32, #tpu.memory_space<vmem>>, %arg12: memref<32x64xbf16, #tpu.memory_space<vmem>>, %arg13: memref<1x64xf32, #tpu.memory_space<vmem>>, %arg14: memref<64x32xbf16, #tpu.memory_space<vmem>>, %arg15: memref<1x32xf32, #tpu.memory_space<vmem>>, %arg16: memref<1x32xf32, #tpu.memory_space<vmem>>, %arg17: memref<1x32xf32, #tpu.memory_space<vmem>>, %arg18: memref<1x32xf32, #tpu.memory_space<vmem>>, %arg19: memref<1x32xf32, #tpu.memory_space<vmem>>, %arg20: memref<1x32xf32, #tpu.memory_space<vmem>>, %arg21: memref<1x32xf32, #tpu.memory_space<vmem>>, %arg22: memref<1x8x32xf32, #tpu.memory_space<vmem>>) attributes {dimension_semantics = [#tpu.dimension_semantics<parallel>], iteration_bounds = array<i64: 2>, scalar_prefetch = 0 : i64, scratch_operands = 0 : i64, tpu.core_type = #tpu.core_type<tc>, window_params = [{transform_indices = @transform_0, window_bounds = array<i64: 1, 8, 32>}, {pipeline_mode = #tpu.pipeline_mode<synchronous>, transform_indices = @transform_1, window_bounds = array<i64: 8, 8>}, {pipeline_mode = #tpu.pipeline_mode<synchronous>, transform_indices = @transform_2, window_bounds = array<i64: 8, 8>}, {pipeline_mode = #tpu.pipeline_mode<synchronous>, transform_indices = @transform_3, window_bounds = array<i64: 32, 96>}, {pipeline_mode = #tpu.pipeline_mode<synchronous>, transform_indices = @transform_4, window_bounds = array<i64: 1, 96>}, {pipeline_mode = #tpu.pipeline_mode<synchronous>, transform_indices = @transform_5, window_bounds = array<i64: 32, 32>}, {pipeline_mode = #tpu.pipeline_mode<synchronous>, transform_indices = @transform_6, window_bounds = array<i64: 1, 32>}, {pipeline_mode = #tpu.pipeline_mode<synchronous>, transform_indices = @transform_7, window_bounds = array<i64: 32, 96>}, {pipeline_mode = #tpu.pipeline_mode<synchronous>, transform_indices = @transform_8, window_bounds = array<i64: 1, 96>}, {pipeline_mode = #tpu.pipeline_mode<synchronous>, transform_indices = @transform_9, window_bounds = array<i64: 32, 32>}, {pipeline_mode = #tpu.pipeline_mode<synchronous>, transform_indices = @transform_10, window_bounds = array<i64: 1, 32>}, {pipeline_mode = #tpu.pipeline_mode<synchronous>, transform_indices = @transform_11, window_bounds = array<i64: 32, 64>}, {pipeline_mode = #tpu.pipeline_mode<synchronous>, transform_indices = @transform_12, window_bounds = array<i64: 1, 64>}, {pipeline_mode = #tpu.pipeline_mode<synchronous>, transform_indices = @transform_13, window_bounds = array<i64: 64, 32>}, {pipeline_mode = #tpu.pipeline_mode<synchronous>, transform_indices = @transform_14, window_bounds = array<i64: 1, 32>}, {pipeline_mode = #tpu.pipeline_mode<synchronous>, transform_indices = @transform_15, window_bounds = array<i64: 1, 32>}, {pipeline_mode = #tpu.pipeline_mode<synchronous>, transform_indices = @transform_16, window_bounds = array<i64: 1, 32>}, {pipeline_mode = #tpu.pipeline_mode<synchronous>, transform_indices = @transform_17, window_bounds = array<i64: 1, 32>}, {pipeline_mode = #tpu.pipeline_mode<synchronous>, transform_indices = @transform_18, window_bounds = array<i64: 1, 32>}, {pipeline_mode = #tpu.pipeline_mode<synchronous>, transform_indices = @transform_19, window_bounds = array<i64: 1, 32>}, {pipeline_mode = #tpu.pipeline_mode<synchronous>, transform_indices = @transform_20, window_bounds = array<i64: 1, 32>}, {transform_indices = @transform_21, window_bounds = array<i64: 1, 8, 32>}]} {
    %c0 = arith.constant 0 : index
    %c0_0 = arith.constant 0 : index
    %c0_1 = arith.constant 0 : index
    %0 = vector.load %arg1[%c0, %c0_0, %c0_1] : memref<1x8x32xf32, #tpu.memory_space<vmem>>, vector<1x8x32xf32>
    %1 = vector.shape_cast %0 : vector<1x8x32xf32> to vector<8x32xf32>
    %c0_2 = arith.constant 0 : index
    %c0_3 = arith.constant 0 : index
    %2 = vector.load %arg2[%c0_2, %c0_3] : memref<8x8xf32, #tpu.memory_space<vmem>>, vector<8x8xf32>
    %c0_4 = arith.constant 0 : index
    %c0_5 = arith.constant 0 : index
    %3 = vector.load %arg3[%c0_4, %c0_5] : memref<8x8xf32, #tpu.memory_space<vmem>>, vector<8x8xf32>
    %4 = arith.truncf %1 : vector<8x32xf32> to vector<8x32xbf16>
    %c0_6 = arith.constant 0 : index
    %c0_7 = arith.constant 0 : index
    %5 = vector.load %arg4[%c0_6, %c0_7] : memref<32x96xbf16, #tpu.memory_space<vmem>>, vector<32x96xbf16>
    %cst = arith.constant dense<0.000000e+00> : vector<8x96xf32>
    %6 = tpu.matmul %4, %5, %cst {dimension_numbers = #tpu.dot_dimension_numbers<[1], [0], [0], [1], [0, 0, 1, 1], [], []>} : vector<8x32xbf16>, vector<32x96xbf16>, vector<8x96xf32> -> vector<8x96xf32>
    %c0_8 = arith.constant 0 : index
    %c0_9 = arith.constant 0 : index
    %7 = vector.load %arg5[%c0_8, %c0_9] : memref<1x96xf32, #tpu.memory_space<vmem>>, vector<1x96xf32>
    %8 = vector.broadcast %7 : vector<1x96xf32> to vector<8x96xf32>
    %9 = arith.addf %6, %8 : vector<8x96xf32>
    %10 = vector.extract_strided_slice %9 {offsets = [0, 0], sizes = [8, 32], strides = [1, 1]} : vector<8x96xf32> to vector<8x32xf32>
    %cst_10 = arith.constant 0.353553385 : f32
    %11 = vector.broadcast %cst_10 : f32 to vector<8x32xf32>
    %12 = arith.mulf %10, %11 : vector<8x32xf32>
    %13 = arith.truncf %12 : vector<8x32xf32> to vector<8x32xbf16>
    %14 = vector.extract_strided_slice %9 {offsets = [0, 32], sizes = [8, 32], strides = [1, 1]} : vector<8x96xf32> to vector<8x32xf32>
    %15 = arith.truncf %14 : vector<8x32xf32> to vector<8x32xbf16>
    %16 = vector.extract_strided_slice %9 {offsets = [0, 64], sizes = [8, 32], strides = [1, 1]} : vector<8x96xf32> to vector<8x32xf32>
    %17 = arith.truncf %16 : vector<8x32xf32> to vector<8x32xbf16>
    %c0_11 = arith.constant 0 : index
    %c0_12 = arith.constant 0 : index
    %18 = vector.load %arg6[%c0_11, %c0_12] : memref<32x32xbf16, #tpu.memory_space<vmem>>, vector<32x32xbf16>
    %cst_13 = arith.constant 0.000000e+00 : f32
    %19 = vector.broadcast %cst_13 : f32 to vector<8x32xf32>
    %20 = vector.extract_strided_slice %13 {offsets = [0, 0], sizes = [8, 8], strides = [1, 1]} : vector<8x32xbf16> to vector<8x8xbf16>
    %21 = vector.extract_strided_slice %15 {offsets = [0, 0], sizes = [8, 8], strides = [1, 1]} : vector<8x32xbf16> to vector<8x8xbf16>
    %cst_14 = arith.constant dense<0.000000e+00> : vector<8x8xf32>
    %22 = tpu.matmul %20, %21, %cst_14 {dimension_numbers = #tpu.dot_dimension_numbers<[1], [1], [0], [0], [0, 0, 1, 0], [], []>} : vector<8x8xbf16>, vector<8x8xbf16>, vector<8x8xf32> -> vector<8x8xf32>
    %cst_15 = arith.constant 0.000000e+00 : f32
    %23 = vector.broadcast %cst_15 : f32 to vector<8x8xf32>
    %24 = arith.cmpf oeq, %2, %23 : vector<8x8xf32>
    %cst_16 = arith.constant -1.000000e+30 : f32
    %25 = vector.broadcast %cst_16 : f32 to vector<8x8xf32>
    %26 = arith.select %24, %25, %22 : vector<8x8xi1>, vector<8x8xf32>
    %cst_17 = arith.constant dense<0xFF800000> : vector<8xf32>
    %27 = vector.multi_reduction <maximumf>, %26, %cst_17 [1] : vector<8x8xf32> to vector<8xf32>
    %28 = vector.shape_cast %27 : vector<8xf32> to vector<8x1xf32>
    %29 = vector.broadcast %28 : vector<8x1xf32> to vector<8x8xf32>
    %30 = arith.subf %26, %29 : vector<8x8xf32>
    %31 = math.exp %30 : vector<8x8xf32>
    %cst_18 = arith.constant dense<0.000000e+00> : vector<8xf32>
    %32 = vector.multi_reduction <add>, %31, %cst_18 [1] : vector<8x8xf32> to vector<8xf32>
    %33 = vector.shape_cast %32 : vector<8xf32> to vector<8x1xf32>
    %34 = tpu.reciprocal %33 {approx = true} : vector<8x1xf32> -> vector<8x1xf32>
    %35 = vector.broadcast %34 : vector<8x1xf32> to vector<8x8xf32>
    %36 = arith.mulf %31, %35 : vector<8x8xf32>
    %37 = arith.truncf %36 : vector<8x8xf32> to vector<8x8xbf16>
    %38 = vector.extract_strided_slice %17 {offsets = [0, 0], sizes = [8, 8], strides = [1, 1]} : vector<8x32xbf16> to vector<8x8xbf16>
    %cst_19 = arith.constant dense<0.000000e+00> : vector<8x8xf32>
    %39 = tpu.matmul %37, %38, %cst_19 {dimension_numbers = #tpu.dot_dimension_numbers<[1], [0], [0], [1], [0, 0, 1, 1], [], []>} : vector<8x8xbf16>, vector<8x8xbf16>, vector<8x8xf32> -> vector<8x8xf32>
    %40 = arith.truncf %39 : vector<8x8xf32> to vector<8x8xbf16>
    %41 = vector.extract_strided_slice %18 {offsets = [0, 0], sizes = [8, 32], strides = [1, 1]} : vector<32x32xbf16> to vector<8x32xbf16>
    %cst_20 = arith.constant dense<0.000000e+00> : vector<8x32xf32>
    %42 = tpu.matmul %40, %41, %cst_20 {dimension_numbers = #tpu.dot_dimension_numbers<[1], [0], [0], [1], [0, 0, 1, 1], [], []>} : vector<8x8xbf16>, vector<8x32xbf16>, vector<8x32xf32> -> vector<8x32xf32>
    %43 = arith.addf %19, %42 : vector<8x32xf32>
    %44 = vector.extract_strided_slice %13 {offsets = [0, 8], sizes = [8, 8], strides = [1, 1]} : vector<8x32xbf16> to vector<8x8xbf16>
    %45 = vector.extract_strided_slice %15 {offsets = [0, 8], sizes = [8, 8], strides = [1, 1]} : vector<8x32xbf16> to vector<8x8xbf16>
    %cst_21 = arith.constant dense<0.000000e+00> : vector<8x8xf32>
    %46 = tpu.matmul %44, %45, %cst_21 {dimension_numbers = #tpu.dot_dimension_numbers<[1], [1], [0], [0], [0, 0, 1, 0], [], []>} : vector<8x8xbf16>, vector<8x8xbf16>, vector<8x8xf32> -> vector<8x8xf32>
    %cst_22 = arith.constant 0.000000e+00 : f32
    %47 = vector.broadcast %cst_22 : f32 to vector<8x8xf32>
    %48 = arith.cmpf oeq, %2, %47 : vector<8x8xf32>
    %cst_23 = arith.constant -1.000000e+30 : f32
    %49 = vector.broadcast %cst_23 : f32 to vector<8x8xf32>
    %50 = arith.select %48, %49, %46 : vector<8x8xi1>, vector<8x8xf32>
    %cst_24 = arith.constant dense<0xFF800000> : vector<8xf32>
    %51 = vector.multi_reduction <maximumf>, %50, %cst_24 [1] : vector<8x8xf32> to vector<8xf32>
    %52 = vector.shape_cast %51 : vector<8xf32> to vector<8x1xf32>
    %53 = vector.broadcast %52 : vector<8x1xf32> to vector<8x8xf32>
    %54 = arith.subf %50, %53 : vector<8x8xf32>
    %55 = math.exp %54 : vector<8x8xf32>
    %cst_25 = arith.constant dense<0.000000e+00> : vector<8xf32>
    %56 = vector.multi_reduction <add>, %55, %cst_25 [1] : vector<8x8xf32> to vector<8xf32>
    %57 = vector.shape_cast %56 : vector<8xf32> to vector<8x1xf32>
    %58 = tpu.reciprocal %57 {approx = true} : vector<8x1xf32> -> vector<8x1xf32>
    %59 = vector.broadcast %58 : vector<8x1xf32> to vector<8x8xf32>
    %60 = arith.mulf %55, %59 : vector<8x8xf32>
    %61 = arith.truncf %60 : vector<8x8xf32> to vector<8x8xbf16>
    %62 = vector.extract_strided_slice %17 {offsets = [0, 8], sizes = [8, 8], strides = [1, 1]} : vector<8x32xbf16> to vector<8x8xbf16>
    %cst_26 = arith.constant dense<0.000000e+00> : vector<8x8xf32>
    %63 = tpu.matmul %61, %62, %cst_26 {dimension_numbers = #tpu.dot_dimension_numbers<[1], [0], [0], [1], [0, 0, 1, 1], [], []>} : vector<8x8xbf16>, vector<8x8xbf16>, vector<8x8xf32> -> vector<8x8xf32>
    %64 = arith.truncf %63 : vector<8x8xf32> to vector<8x8xbf16>
    %65 = vector.extract_strided_slice %18 {offsets = [8, 0], sizes = [8, 32], strides = [1, 1]} : vector<32x32xbf16> to vector<8x32xbf16>
    %cst_27 = arith.constant dense<0.000000e+00> : vector<8x32xf32>
    %66 = tpu.matmul %64, %65, %cst_27 {dimension_numbers = #tpu.dot_dimension_numbers<[1], [0], [0], [1], [0, 0, 1, 1], [], []>} : vector<8x8xbf16>, vector<8x32xbf16>, vector<8x32xf32> -> vector<8x32xf32>
    %67 = arith.addf %43, %66 : vector<8x32xf32>
    %68 = vector.extract_strided_slice %13 {offsets = [0, 16], sizes = [8, 8], strides = [1, 1]} : vector<8x32xbf16> to vector<8x8xbf16>
    %69 = vector.extract_strided_slice %15 {offsets = [0, 16], sizes = [8, 8], strides = [1, 1]} : vector<8x32xbf16> to vector<8x8xbf16>
    %cst_28 = arith.constant dense<0.000000e+00> : vector<8x8xf32>
    %70 = tpu.matmul %68, %69, %cst_28 {dimension_numbers = #tpu.dot_dimension_numbers<[1], [1], [0], [0], [0, 0, 1, 0], [], []>} : vector<8x8xbf16>, vector<8x8xbf16>, vector<8x8xf32> -> vector<8x8xf32>
    %cst_29 = arith.constant 0.000000e+00 : f32
    %71 = vector.broadcast %cst_29 : f32 to vector<8x8xf32>
    %72 = arith.cmpf oeq, %2, %71 : vector<8x8xf32>
    %cst_30 = arith.constant -1.000000e+30 : f32
    %73 = vector.broadcast %cst_30 : f32 to vector<8x8xf32>
    %74 = arith.select %72, %73, %70 : vector<8x8xi1>, vector<8x8xf32>
    %cst_31 = arith.constant dense<0xFF800000> : vector<8xf32>
    %75 = vector.multi_reduction <maximumf>, %74, %cst_31 [1] : vector<8x8xf32> to vector<8xf32>
    %76 = vector.shape_cast %75 : vector<8xf32> to vector<8x1xf32>
    %77 = vector.broadcast %76 : vector<8x1xf32> to vector<8x8xf32>
    %78 = arith.subf %74, %77 : vector<8x8xf32>
    %79 = math.exp %78 : vector<8x8xf32>
    %cst_32 = arith.constant dense<0.000000e+00> : vector<8xf32>
    %80 = vector.multi_reduction <add>, %79, %cst_32 [1] : vector<8x8xf32> to vector<8xf32>
    %81 = vector.shape_cast %80 : vector<8xf32> to vector<8x1xf32>
    %82 = tpu.reciprocal %81 {approx = true} : vector<8x1xf32> -> vector<8x1xf32>
    %83 = vector.broadcast %82 : vector<8x1xf32> to vector<8x8xf32>
    %84 = arith.mulf %79, %83 : vector<8x8xf32>
    %85 = arith.truncf %84 : vector<8x8xf32> to vector<8x8xbf16>
    %86 = vector.extract_strided_slice %17 {offsets = [0, 16], sizes = [8, 8], strides = [1, 1]} : vector<8x32xbf16> to vector<8x8xbf16>
    %cst_33 = arith.constant dense<0.000000e+00> : vector<8x8xf32>
    %87 = tpu.matmul %85, %86, %cst_33 {dimension_numbers = #tpu.dot_dimension_numbers<[1], [0], [0], [1], [0, 0, 1, 1], [], []>} : vector<8x8xbf16>, vector<8x8xbf16>, vector<8x8xf32> -> vector<8x8xf32>
    %88 = arith.truncf %87 : vector<8x8xf32> to vector<8x8xbf16>
    %89 = vector.extract_strided_slice %18 {offsets = [16, 0], sizes = [8, 32], strides = [1, 1]} : vector<32x32xbf16> to vector<8x32xbf16>
    %cst_34 = arith.constant dense<0.000000e+00> : vector<8x32xf32>
    %90 = tpu.matmul %88, %89, %cst_34 {dimension_numbers = #tpu.dot_dimension_numbers<[1], [0], [0], [1], [0, 0, 1, 1], [], []>} : vector<8x8xbf16>, vector<8x32xbf16>, vector<8x32xf32> -> vector<8x32xf32>
    %91 = arith.addf %67, %90 : vector<8x32xf32>
    %92 = vector.extract_strided_slice %13 {offsets = [0, 24], sizes = [8, 8], strides = [1, 1]} : vector<8x32xbf16> to vector<8x8xbf16>
    %93 = vector.extract_strided_slice %15 {offsets = [0, 24], sizes = [8, 8], strides = [1, 1]} : vector<8x32xbf16> to vector<8x8xbf16>
    %cst_35 = arith.constant dense<0.000000e+00> : vector<8x8xf32>
    %94 = tpu.matmul %92, %93, %cst_35 {dimension_numbers = #tpu.dot_dimension_numbers<[1], [1], [0], [0], [0, 0, 1, 0], [], []>} : vector<8x8xbf16>, vector<8x8xbf16>, vector<8x8xf32> -> vector<8x8xf32>
    %cst_36 = arith.constant 0.000000e+00 : f32
    %95 = vector.broadcast %cst_36 : f32 to vector<8x8xf32>
    %96 = arith.cmpf oeq, %2, %95 : vector<8x8xf32>
    %cst_37 = arith.constant -1.000000e+30 : f32
    %97 = vector.broadcast %cst_37 : f32 to vector<8x8xf32>
    %98 = arith.select %96, %97, %94 : vector<8x8xi1>, vector<8x8xf32>
    %cst_38 = arith.constant dense<0xFF800000> : vector<8xf32>
    %99 = vector.multi_reduction <maximumf>, %98, %cst_38 [1] : vector<8x8xf32> to vector<8xf32>
    %100 = vector.shape_cast %99 : vector<8xf32> to vector<8x1xf32>
    %101 = vector.broadcast %100 : vector<8x1xf32> to vector<8x8xf32>
    %102 = arith.subf %98, %101 : vector<8x8xf32>
    %103 = math.exp %102 : vector<8x8xf32>
    %cst_39 = arith.constant dense<0.000000e+00> : vector<8xf32>
    %104 = vector.multi_reduction <add>, %103, %cst_39 [1] : vector<8x8xf32> to vector<8xf32>
    %105 = vector.shape_cast %104 : vector<8xf32> to vector<8x1xf32>
    %106 = tpu.reciprocal %105 {approx = true} : vector<8x1xf32> -> vector<8x1xf32>
    %107 = vector.broadcast %106 : vector<8x1xf32> to vector<8x8xf32>
    %108 = arith.mulf %103, %107 : vector<8x8xf32>
    %109 = arith.truncf %108 : vector<8x8xf32> to vector<8x8xbf16>
    %110 = vector.extract_strided_slice %17 {offsets = [0, 24], sizes = [8, 8], strides = [1, 1]} : vector<8x32xbf16> to vector<8x8xbf16>
    %cst_40 = arith.constant dense<0.000000e+00> : vector<8x8xf32>
    %111 = tpu.matmul %109, %110, %cst_40 {dimension_numbers = #tpu.dot_dimension_numbers<[1], [0], [0], [1], [0, 0, 1, 1], [], []>} : vector<8x8xbf16>, vector<8x8xbf16>, vector<8x8xf32> -> vector<8x8xf32>
    %112 = arith.truncf %111 : vector<8x8xf32> to vector<8x8xbf16>
    %113 = vector.extract_strided_slice %18 {offsets = [24, 0], sizes = [8, 32], strides = [1, 1]} : vector<32x32xbf16> to vector<8x32xbf16>
    %cst_41 = arith.constant dense<0.000000e+00> : vector<8x32xf32>
    %114 = tpu.matmul %112, %113, %cst_41 {dimension_numbers = #tpu.dot_dimension_numbers<[1], [0], [0], [1], [0, 0, 1, 1], [], []>} : vector<8x8xbf16>, vector<8x32xbf16>, vector<8x32xf32> -> vector<8x32xf32>
    %115 = arith.addf %91, %114 : vector<8x32xf32>
    %c0_42 = arith.constant 0 : index
    %c0_43 = arith.constant 0 : index
    %116 = vector.load %arg7[%c0_42, %c0_43] : memref<1x32xf32, #tpu.memory_space<vmem>>, vector<1x32xf32>
    %117 = vector.broadcast %116 : vector<1x32xf32> to vector<8x32xf32>
    %118 = arith.addf %115, %117 : vector<8x32xf32>
    %119 = arith.addf %1, %118 : vector<8x32xf32>
    %c0_44 = arith.constant 0 : index
    %c0_45 = arith.constant 0 : index
    %120 = vector.load %arg16[%c0_44, %c0_45] : memref<1x32xf32, #tpu.memory_space<vmem>>, vector<1x32xf32>
    %c0_46 = arith.constant 0 : index
    %c0_47 = arith.constant 0 : index
    %121 = vector.load %arg17[%c0_46, %c0_47] : memref<1x32xf32, #tpu.memory_space<vmem>>, vector<1x32xf32>
    %cst_48 = arith.constant dense<0.000000e+00> : vector<8xf32>
    %122 = vector.multi_reduction <add>, %119, %cst_48 [1] : vector<8x32xf32> to vector<8xf32>
    %123 = vector.shape_cast %122 : vector<8xf32> to vector<8x1xf32>
    %cst_49 = arith.constant 3.200000e+01 : f32
    %124 = vector.broadcast %cst_49 : f32 to vector<8x1xf32>
    %125 = arith.divf %123, %124 : vector<8x1xf32>
    %126 = vector.broadcast %125 : vector<8x1xf32> to vector<8x32xf32>
    %127 = arith.subf %119, %126 : vector<8x32xf32>
    %128 = arith.mulf %127, %127 : vector<8x32xf32>
    %cst_50 = arith.constant dense<0.000000e+00> : vector<8xf32>
    %129 = vector.multi_reduction <add>, %128, %cst_50 [1] : vector<8x32xf32> to vector<8xf32>
    %130 = vector.shape_cast %129 : vector<8xf32> to vector<8x1xf32>
    %cst_51 = arith.constant 0.0322580636 : f32
    %131 = vector.broadcast %cst_51 : f32 to vector<8x1xf32>
    %132 = arith.mulf %130, %131 : vector<8x1xf32>
    %133 = math.sqrt %132 : vector<8x1xf32>
    %cst_52 = arith.constant 9.99999997E-7 : f32
    %134 = vector.broadcast %cst_52 : f32 to vector<8x1xf32>
    %135 = arith.addf %133, %134 : vector<8x1xf32>
    %136 = tpu.reciprocal %135 {approx = true} : vector<8x1xf32> -> vector<8x1xf32>
    %137 = vector.broadcast %120 : vector<1x32xf32> to vector<8x32xf32>
    %138 = arith.mulf %137, %127 : vector<8x32xf32>
    %139 = vector.broadcast %136 : vector<8x1xf32> to vector<8x32xf32>
    %140 = arith.mulf %138, %139 : vector<8x32xf32>
    %141 = vector.broadcast %121 : vector<1x32xf32> to vector<8x32xf32>
    %142 = arith.addf %140, %141 : vector<8x32xf32>
    %143 = arith.truncf %142 : vector<8x32xf32> to vector<8x32xbf16>
    %c0_53 = arith.constant 0 : index
    %c0_54 = arith.constant 0 : index
    %144 = vector.load %arg8[%c0_53, %c0_54] : memref<32x96xbf16, #tpu.memory_space<vmem>>, vector<32x96xbf16>
    %cst_55 = arith.constant dense<0.000000e+00> : vector<8x96xf32>
    %145 = tpu.matmul %143, %144, %cst_55 {dimension_numbers = #tpu.dot_dimension_numbers<[1], [0], [0], [1], [0, 0, 1, 1], [], []>} : vector<8x32xbf16>, vector<32x96xbf16>, vector<8x96xf32> -> vector<8x96xf32>
    %c0_56 = arith.constant 0 : index
    %c0_57 = arith.constant 0 : index
    %146 = vector.load %arg9[%c0_56, %c0_57] : memref<1x96xf32, #tpu.memory_space<vmem>>, vector<1x96xf32>
    %147 = vector.broadcast %146 : vector<1x96xf32> to vector<8x96xf32>
    %148 = arith.addf %145, %147 : vector<8x96xf32>
    %149 = vector.extract_strided_slice %148 {offsets = [0, 0], sizes = [8, 32], strides = [1, 1]} : vector<8x96xf32> to vector<8x32xf32>
    %cst_58 = arith.constant 0.353553385 : f32
    %150 = vector.broadcast %cst_58 : f32 to vector<8x32xf32>
    %151 = arith.mulf %149, %150 : vector<8x32xf32>
    %152 = arith.truncf %151 : vector<8x32xf32> to vector<8x32xbf16>
    %153 = vector.extract_strided_slice %148 {offsets = [0, 32], sizes = [8, 32], strides = [1, 1]} : vector<8x96xf32> to vector<8x32xf32>
    %154 = arith.truncf %153 : vector<8x32xf32> to vector<8x32xbf16>
    %155 = vector.extract_strided_slice %148 {offsets = [0, 64], sizes = [8, 32], strides = [1, 1]} : vector<8x96xf32> to vector<8x32xf32>
    %156 = arith.truncf %155 : vector<8x32xf32> to vector<8x32xbf16>
    %c0_59 = arith.constant 0 : index
    %c0_60 = arith.constant 0 : index
    %157 = vector.load %arg10[%c0_59, %c0_60] : memref<32x32xbf16, #tpu.memory_space<vmem>>, vector<32x32xbf16>
    %cst_61 = arith.constant 0.000000e+00 : f32
    %158 = vector.broadcast %cst_61 : f32 to vector<8x32xf32>
    %159 = vector.extract_strided_slice %152 {offsets = [0, 0], sizes = [8, 8], strides = [1, 1]} : vector<8x32xbf16> to vector<8x8xbf16>
    %160 = vector.extract_strided_slice %154 {offsets = [0, 0], sizes = [8, 8], strides = [1, 1]} : vector<8x32xbf16> to vector<8x8xbf16>
    %cst_62 = arith.constant dense<0.000000e+00> : vector<8x8xf32>
    %161 = tpu.matmul %159, %160, %cst_62 {dimension_numbers = #tpu.dot_dimension_numbers<[1], [1], [0], [0], [0, 0, 1, 0], [], []>} : vector<8x8xbf16>, vector<8x8xbf16>, vector<8x8xf32> -> vector<8x8xf32>
    %cst_63 = arith.constant 0.000000e+00 : f32
    %162 = vector.broadcast %cst_63 : f32 to vector<8x8xf32>
    %163 = arith.cmpf oeq, %3, %162 : vector<8x8xf32>
    %cst_64 = arith.constant -1.000000e+30 : f32
    %164 = vector.broadcast %cst_64 : f32 to vector<8x8xf32>
    %165 = arith.select %163, %164, %161 : vector<8x8xi1>, vector<8x8xf32>
    %cst_65 = arith.constant dense<0xFF800000> : vector<8xf32>
    %166 = vector.multi_reduction <maximumf>, %165, %cst_65 [1] : vector<8x8xf32> to vector<8xf32>
    %167 = vector.shape_cast %166 : vector<8xf32> to vector<8x1xf32>
    %168 = vector.broadcast %167 : vector<8x1xf32> to vector<8x8xf32>
    %169 = arith.subf %165, %168 : vector<8x8xf32>
    %170 = math.exp %169 : vector<8x8xf32>
    %cst_66 = arith.constant dense<0.000000e+00> : vector<8xf32>
    %171 = vector.multi_reduction <add>, %170, %cst_66 [1] : vector<8x8xf32> to vector<8xf32>
    %172 = vector.shape_cast %171 : vector<8xf32> to vector<8x1xf32>
    %173 = tpu.reciprocal %172 {approx = true} : vector<8x1xf32> -> vector<8x1xf32>
    %174 = vector.broadcast %173 : vector<8x1xf32> to vector<8x8xf32>
    %175 = arith.mulf %170, %174 : vector<8x8xf32>
    %176 = arith.truncf %175 : vector<8x8xf32> to vector<8x8xbf16>
    %177 = vector.extract_strided_slice %156 {offsets = [0, 0], sizes = [8, 8], strides = [1, 1]} : vector<8x32xbf16> to vector<8x8xbf16>
    %cst_67 = arith.constant dense<0.000000e+00> : vector<8x8xf32>
    %178 = tpu.matmul %176, %177, %cst_67 {dimension_numbers = #tpu.dot_dimension_numbers<[1], [0], [0], [1], [0, 0, 1, 1], [], []>} : vector<8x8xbf16>, vector<8x8xbf16>, vector<8x8xf32> -> vector<8x8xf32>
    %179 = arith.truncf %178 : vector<8x8xf32> to vector<8x8xbf16>
    %180 = vector.extract_strided_slice %157 {offsets = [0, 0], sizes = [8, 32], strides = [1, 1]} : vector<32x32xbf16> to vector<8x32xbf16>
    %cst_68 = arith.constant dense<0.000000e+00> : vector<8x32xf32>
    %181 = tpu.matmul %179, %180, %cst_68 {dimension_numbers = #tpu.dot_dimension_numbers<[1], [0], [0], [1], [0, 0, 1, 1], [], []>} : vector<8x8xbf16>, vector<8x32xbf16>, vector<8x32xf32> -> vector<8x32xf32>
    %182 = arith.addf %158, %181 : vector<8x32xf32>
    %183 = vector.extract_strided_slice %152 {offsets = [0, 8], sizes = [8, 8], strides = [1, 1]} : vector<8x32xbf16> to vector<8x8xbf16>
    %184 = vector.extract_strided_slice %154 {offsets = [0, 8], sizes = [8, 8], strides = [1, 1]} : vector<8x32xbf16> to vector<8x8xbf16>
    %cst_69 = arith.constant dense<0.000000e+00> : vector<8x8xf32>
    %185 = tpu.matmul %183, %184, %cst_69 {dimension_numbers = #tpu.dot_dimension_numbers<[1], [1], [0], [0], [0, 0, 1, 0], [], []>} : vector<8x8xbf16>, vector<8x8xbf16>, vector<8x8xf32> -> vector<8x8xf32>
    %cst_70 = arith.constant 0.000000e+00 : f32
    %186 = vector.broadcast %cst_70 : f32 to vector<8x8xf32>
    %187 = arith.cmpf oeq, %3, %186 : vector<8x8xf32>
    %cst_71 = arith.constant -1.000000e+30 : f32
    %188 = vector.broadcast %cst_71 : f32 to vector<8x8xf32>
    %189 = arith.select %187, %188, %185 : vector<8x8xi1>, vector<8x8xf32>
    %cst_72 = arith.constant dense<0xFF800000> : vector<8xf32>
    %190 = vector.multi_reduction <maximumf>, %189, %cst_72 [1] : vector<8x8xf32> to vector<8xf32>
    %191 = vector.shape_cast %190 : vector<8xf32> to vector<8x1xf32>
    %192 = vector.broadcast %191 : vector<8x1xf32> to vector<8x8xf32>
    %193 = arith.subf %189, %192 : vector<8x8xf32>
    %194 = math.exp %193 : vector<8x8xf32>
    %cst_73 = arith.constant dense<0.000000e+00> : vector<8xf32>
    %195 = vector.multi_reduction <add>, %194, %cst_73 [1] : vector<8x8xf32> to vector<8xf32>
    %196 = vector.shape_cast %195 : vector<8xf32> to vector<8x1xf32>
    %197 = tpu.reciprocal %196 {approx = true} : vector<8x1xf32> -> vector<8x1xf32>
    %198 = vector.broadcast %197 : vector<8x1xf32> to vector<8x8xf32>
    %199 = arith.mulf %194, %198 : vector<8x8xf32>
    %200 = arith.truncf %199 : vector<8x8xf32> to vector<8x8xbf16>
    %201 = vector.extract_strided_slice %156 {offsets = [0, 8], sizes = [8, 8], strides = [1, 1]} : vector<8x32xbf16> to vector<8x8xbf16>
    %cst_74 = arith.constant dense<0.000000e+00> : vector<8x8xf32>
    %202 = tpu.matmul %200, %201, %cst_74 {dimension_numbers = #tpu.dot_dimension_numbers<[1], [0], [0], [1], [0, 0, 1, 1], [], []>} : vector<8x8xbf16>, vector<8x8xbf16>, vector<8x8xf32> -> vector<8x8xf32>
    %203 = arith.truncf %202 : vector<8x8xf32> to vector<8x8xbf16>
    %204 = vector.extract_strided_slice %157 {offsets = [8, 0], sizes = [8, 32], strides = [1, 1]} : vector<32x32xbf16> to vector<8x32xbf16>
    %cst_75 = arith.constant dense<0.000000e+00> : vector<8x32xf32>
    %205 = tpu.matmul %203, %204, %cst_75 {dimension_numbers = #tpu.dot_dimension_numbers<[1], [0], [0], [1], [0, 0, 1, 1], [], []>} : vector<8x8xbf16>, vector<8x32xbf16>, vector<8x32xf32> -> vector<8x32xf32>
    %206 = arith.addf %182, %205 : vector<8x32xf32>
    %207 = vector.extract_strided_slice %152 {offsets = [0, 16], sizes = [8, 8], strides = [1, 1]} : vector<8x32xbf16> to vector<8x8xbf16>
    %208 = vector.extract_strided_slice %154 {offsets = [0, 16], sizes = [8, 8], strides = [1, 1]} : vector<8x32xbf16> to vector<8x8xbf16>
    %cst_76 = arith.constant dense<0.000000e+00> : vector<8x8xf32>
    %209 = tpu.matmul %207, %208, %cst_76 {dimension_numbers = #tpu.dot_dimension_numbers<[1], [1], [0], [0], [0, 0, 1, 0], [], []>} : vector<8x8xbf16>, vector<8x8xbf16>, vector<8x8xf32> -> vector<8x8xf32>
    %cst_77 = arith.constant 0.000000e+00 : f32
    %210 = vector.broadcast %cst_77 : f32 to vector<8x8xf32>
    %211 = arith.cmpf oeq, %3, %210 : vector<8x8xf32>
    %cst_78 = arith.constant -1.000000e+30 : f32
    %212 = vector.broadcast %cst_78 : f32 to vector<8x8xf32>
    %213 = arith.select %211, %212, %209 : vector<8x8xi1>, vector<8x8xf32>
    %cst_79 = arith.constant dense<0xFF800000> : vector<8xf32>
    %214 = vector.multi_reduction <maximumf>, %213, %cst_79 [1] : vector<8x8xf32> to vector<8xf32>
    %215 = vector.shape_cast %214 : vector<8xf32> to vector<8x1xf32>
    %216 = vector.broadcast %215 : vector<8x1xf32> to vector<8x8xf32>
    %217 = arith.subf %213, %216 : vector<8x8xf32>
    %218 = math.exp %217 : vector<8x8xf32>
    %cst_80 = arith.constant dense<0.000000e+00> : vector<8xf32>
    %219 = vector.multi_reduction <add>, %218, %cst_80 [1] : vector<8x8xf32> to vector<8xf32>
    %220 = vector.shape_cast %219 : vector<8xf32> to vector<8x1xf32>
    %221 = tpu.reciprocal %220 {approx = true} : vector<8x1xf32> -> vector<8x1xf32>
    %222 = vector.broadcast %221 : vector<8x1xf32> to vector<8x8xf32>
    %223 = arith.mulf %218, %222 : vector<8x8xf32>
    %224 = arith.truncf %223 : vector<8x8xf32> to vector<8x8xbf16>
    %225 = vector.extract_strided_slice %156 {offsets = [0, 16], sizes = [8, 8], strides = [1, 1]} : vector<8x32xbf16> to vector<8x8xbf16>
    %cst_81 = arith.constant dense<0.000000e+00> : vector<8x8xf32>
    %226 = tpu.matmul %224, %225, %cst_81 {dimension_numbers = #tpu.dot_dimension_numbers<[1], [0], [0], [1], [0, 0, 1, 1], [], []>} : vector<8x8xbf16>, vector<8x8xbf16>, vector<8x8xf32> -> vector<8x8xf32>
    %227 = arith.truncf %226 : vector<8x8xf32> to vector<8x8xbf16>
    %228 = vector.extract_strided_slice %157 {offsets = [16, 0], sizes = [8, 32], strides = [1, 1]} : vector<32x32xbf16> to vector<8x32xbf16>
    %cst_82 = arith.constant dense<0.000000e+00> : vector<8x32xf32>
    %229 = tpu.matmul %227, %228, %cst_82 {dimension_numbers = #tpu.dot_dimension_numbers<[1], [0], [0], [1], [0, 0, 1, 1], [], []>} : vector<8x8xbf16>, vector<8x32xbf16>, vector<8x32xf32> -> vector<8x32xf32>
    %230 = arith.addf %206, %229 : vector<8x32xf32>
    %231 = vector.extract_strided_slice %152 {offsets = [0, 24], sizes = [8, 8], strides = [1, 1]} : vector<8x32xbf16> to vector<8x8xbf16>
    %232 = vector.extract_strided_slice %154 {offsets = [0, 24], sizes = [8, 8], strides = [1, 1]} : vector<8x32xbf16> to vector<8x8xbf16>
    %cst_83 = arith.constant dense<0.000000e+00> : vector<8x8xf32>
    %233 = tpu.matmul %231, %232, %cst_83 {dimension_numbers = #tpu.dot_dimension_numbers<[1], [1], [0], [0], [0, 0, 1, 0], [], []>} : vector<8x8xbf16>, vector<8x8xbf16>, vector<8x8xf32> -> vector<8x8xf32>
    %cst_84 = arith.constant 0.000000e+00 : f32
    %234 = vector.broadcast %cst_84 : f32 to vector<8x8xf32>
    %235 = arith.cmpf oeq, %3, %234 : vector<8x8xf32>
    %cst_85 = arith.constant -1.000000e+30 : f32
    %236 = vector.broadcast %cst_85 : f32 to vector<8x8xf32>
    %237 = arith.select %235, %236, %233 : vector<8x8xi1>, vector<8x8xf32>
    %cst_86 = arith.constant dense<0xFF800000> : vector<8xf32>
    %238 = vector.multi_reduction <maximumf>, %237, %cst_86 [1] : vector<8x8xf32> to vector<8xf32>
    %239 = vector.shape_cast %238 : vector<8xf32> to vector<8x1xf32>
    %240 = vector.broadcast %239 : vector<8x1xf32> to vector<8x8xf32>
    %241 = arith.subf %237, %240 : vector<8x8xf32>
    %242 = math.exp %241 : vector<8x8xf32>
    %cst_87 = arith.constant dense<0.000000e+00> : vector<8xf32>
    %243 = vector.multi_reduction <add>, %242, %cst_87 [1] : vector<8x8xf32> to vector<8xf32>
    %244 = vector.shape_cast %243 : vector<8xf32> to vector<8x1xf32>
    %245 = tpu.reciprocal %244 {approx = true} : vector<8x1xf32> -> vector<8x1xf32>
    %246 = vector.broadcast %245 : vector<8x1xf32> to vector<8x8xf32>
    %247 = arith.mulf %242, %246 : vector<8x8xf32>
    %248 = arith.truncf %247 : vector<8x8xf32> to vector<8x8xbf16>
    %249 = vector.extract_strided_slice %156 {offsets = [0, 24], sizes = [8, 8], strides = [1, 1]} : vector<8x32xbf16> to vector<8x8xbf16>
    %cst_88 = arith.constant dense<0.000000e+00> : vector<8x8xf32>
    %250 = tpu.matmul %248, %249, %cst_88 {dimension_numbers = #tpu.dot_dimension_numbers<[1], [0], [0], [1], [0, 0, 1, 1], [], []>} : vector<8x8xbf16>, vector<8x8xbf16>, vector<8x8xf32> -> vector<8x8xf32>
    %251 = arith.truncf %250 : vector<8x8xf32> to vector<8x8xbf16>
    %252 = vector.extract_strided_slice %157 {offsets = [24, 0], sizes = [8, 32], strides = [1, 1]} : vector<32x32xbf16> to vector<8x32xbf16>
    %cst_89 = arith.constant dense<0.000000e+00> : vector<8x32xf32>
    %253 = tpu.matmul %251, %252, %cst_89 {dimension_numbers = #tpu.dot_dimension_numbers<[1], [0], [0], [1], [0, 0, 1, 1], [], []>} : vector<8x8xbf16>, vector<8x32xbf16>, vector<8x32xf32> -> vector<8x32xf32>
    %254 = arith.addf %230, %253 : vector<8x32xf32>
    %c0_90 = arith.constant 0 : index
    %c0_91 = arith.constant 0 : index
    %255 = vector.load %arg11[%c0_90, %c0_91] : memref<1x32xf32, #tpu.memory_space<vmem>>, vector<1x32xf32>
    %256 = vector.broadcast %255 : vector<1x32xf32> to vector<8x32xf32>
    %257 = arith.addf %254, %256 : vector<8x32xf32>
    %258 = arith.addf %142, %257 : vector<8x32xf32>
    %c0_92 = arith.constant 0 : index
    %c0_93 = arith.constant 0 : index
    %259 = vector.load %arg18[%c0_92, %c0_93] : memref<1x32xf32, #tpu.memory_space<vmem>>, vector<1x32xf32>
    %c0_94 = arith.constant 0 : index
    %c0_95 = arith.constant 0 : index
    %260 = vector.load %arg19[%c0_94, %c0_95] : memref<1x32xf32, #tpu.memory_space<vmem>>, vector<1x32xf32>
    %cst_96 = arith.constant dense<0.000000e+00> : vector<8xf32>
    %261 = vector.multi_reduction <add>, %258, %cst_96 [1] : vector<8x32xf32> to vector<8xf32>
    %262 = vector.shape_cast %261 : vector<8xf32> to vector<8x1xf32>
    %cst_97 = arith.constant 3.200000e+01 : f32
    %263 = vector.broadcast %cst_97 : f32 to vector<8x1xf32>
    %264 = arith.divf %262, %263 : vector<8x1xf32>
    %265 = vector.broadcast %264 : vector<8x1xf32> to vector<8x32xf32>
    %266 = arith.subf %258, %265 : vector<8x32xf32>
    %267 = arith.mulf %266, %266 : vector<8x32xf32>
    %cst_98 = arith.constant dense<0.000000e+00> : vector<8xf32>
    %268 = vector.multi_reduction <add>, %267, %cst_98 [1] : vector<8x32xf32> to vector<8xf32>
    %269 = vector.shape_cast %268 : vector<8xf32> to vector<8x1xf32>
    %cst_99 = arith.constant 0.0322580636 : f32
    %270 = vector.broadcast %cst_99 : f32 to vector<8x1xf32>
    %271 = arith.mulf %269, %270 : vector<8x1xf32>
    %272 = math.sqrt %271 : vector<8x1xf32>
    %cst_100 = arith.constant 9.99999997E-7 : f32
    %273 = vector.broadcast %cst_100 : f32 to vector<8x1xf32>
    %274 = arith.addf %272, %273 : vector<8x1xf32>
    %275 = tpu.reciprocal %274 {approx = true} : vector<8x1xf32> -> vector<8x1xf32>
    %276 = vector.broadcast %259 : vector<1x32xf32> to vector<8x32xf32>
    %277 = arith.mulf %276, %266 : vector<8x32xf32>
    %278 = vector.broadcast %275 : vector<8x1xf32> to vector<8x32xf32>
    %279 = arith.mulf %277, %278 : vector<8x32xf32>
    %280 = vector.broadcast %260 : vector<1x32xf32> to vector<8x32xf32>
    %281 = arith.addf %279, %280 : vector<8x32xf32>
    %282 = arith.truncf %281 : vector<8x32xf32> to vector<8x32xbf16>
    %c0_101 = arith.constant 0 : index
    %c0_102 = arith.constant 0 : index
    %283 = vector.load %arg12[%c0_101, %c0_102] : memref<32x64xbf16, #tpu.memory_space<vmem>>, vector<32x64xbf16>
    %cst_103 = arith.constant dense<0.000000e+00> : vector<8x64xf32>
    %284 = tpu.matmul %282, %283, %cst_103 {dimension_numbers = #tpu.dot_dimension_numbers<[1], [0], [0], [1], [0, 0, 1, 1], [], []>} : vector<8x32xbf16>, vector<32x64xbf16>, vector<8x64xf32> -> vector<8x64xf32>
    %c0_104 = arith.constant 0 : index
    %c0_105 = arith.constant 0 : index
    %285 = vector.load %arg13[%c0_104, %c0_105] : memref<1x64xf32, #tpu.memory_space<vmem>>, vector<1x64xf32>
    %286 = vector.broadcast %285 : vector<1x64xf32> to vector<8x64xf32>
    %287 = arith.addf %284, %286 : vector<8x64xf32>
    %cst_106 = arith.constant 0.000000e+00 : f32
    %288 = vector.broadcast %cst_106 : f32 to vector<8x64xf32>
    %289 = arith.maximumf %287, %288 : vector<8x64xf32>
    %290 = arith.truncf %289 : vector<8x64xf32> to vector<8x64xbf16>
    %c0_107 = arith.constant 0 : index
    %c0_108 = arith.constant 0 : index
    %291 = vector.load %arg14[%c0_107, %c0_108] : memref<64x32xbf16, #tpu.memory_space<vmem>>, vector<64x32xbf16>
    %cst_109 = arith.constant dense<0.000000e+00> : vector<8x32xf32>
    %292 = tpu.matmul %290, %291, %cst_109 {dimension_numbers = #tpu.dot_dimension_numbers<[1], [0], [0], [1], [0, 0, 1, 1], [], []>} : vector<8x64xbf16>, vector<64x32xbf16>, vector<8x32xf32> -> vector<8x32xf32>
    %c0_110 = arith.constant 0 : index
    %c0_111 = arith.constant 0 : index
    %293 = vector.load %arg15[%c0_110, %c0_111] : memref<1x32xf32, #tpu.memory_space<vmem>>, vector<1x32xf32>
    %294 = vector.broadcast %293 : vector<1x32xf32> to vector<8x32xf32>
    %295 = arith.addf %292, %294 : vector<8x32xf32>
    %296 = arith.addf %281, %295 : vector<8x32xf32>
    %c0_112 = arith.constant 0 : index
    %c0_113 = arith.constant 0 : index
    %297 = vector.load %arg20[%c0_112, %c0_113] : memref<1x32xf32, #tpu.memory_space<vmem>>, vector<1x32xf32>
    %c0_114 = arith.constant 0 : index
    %c0_115 = arith.constant 0 : index
    %298 = vector.load %arg21[%c0_114, %c0_115] : memref<1x32xf32, #tpu.memory_space<vmem>>, vector<1x32xf32>
    %cst_116 = arith.constant dense<0.000000e+00> : vector<8xf32>
    %299 = vector.multi_reduction <add>, %296, %cst_116 [1] : vector<8x32xf32> to vector<8xf32>
    %300 = vector.shape_cast %299 : vector<8xf32> to vector<8x1xf32>
    %cst_117 = arith.constant 3.200000e+01 : f32
    %301 = vector.broadcast %cst_117 : f32 to vector<8x1xf32>
    %302 = arith.divf %300, %301 : vector<8x1xf32>
    %303 = vector.broadcast %302 : vector<8x1xf32> to vector<8x32xf32>
    %304 = arith.subf %296, %303 : vector<8x32xf32>
    %305 = arith.mulf %304, %304 : vector<8x32xf32>
    %cst_118 = arith.constant dense<0.000000e+00> : vector<8xf32>
    %306 = vector.multi_reduction <add>, %305, %cst_118 [1] : vector<8x32xf32> to vector<8xf32>
    %307 = vector.shape_cast %306 : vector<8xf32> to vector<8x1xf32>
    %cst_119 = arith.constant 0.0322580636 : f32
    %308 = vector.broadcast %cst_119 : f32 to vector<8x1xf32>
    %309 = arith.mulf %307, %308 : vector<8x1xf32>
    %310 = math.sqrt %309 : vector<8x1xf32>
    %cst_120 = arith.constant 9.99999997E-7 : f32
    %311 = vector.broadcast %cst_120 : f32 to vector<8x1xf32>
    %312 = arith.addf %310, %311 : vector<8x1xf32>
    %313 = tpu.reciprocal %312 {approx = true} : vector<8x1xf32> -> vector<8x1xf32>
    %314 = vector.broadcast %297 : vector<1x32xf32> to vector<8x32xf32>
    %315 = arith.mulf %314, %304 : vector<8x32xf32>
    %316 = vector.broadcast %313 : vector<8x1xf32> to vector<8x32xf32>
    %317 = arith.mulf %315, %316 : vector<8x32xf32>
    %318 = vector.broadcast %298 : vector<1x32xf32> to vector<8x32xf32>
    %319 = arith.addf %317, %318 : vector<8x32xf32>
    %c0_121 = arith.constant 0 : index
    %c0_122 = arith.constant 0 : index
    %c0_123 = arith.constant 0 : index
    %320 = vector.load %arg22[%c0_121, %c0_122, %c0_123] : memref<1x8x32xf32, #tpu.memory_space<vmem>>, vector<1x8x32xf32>
    %321 = vector.shape_cast %320 : vector<1x8x32xf32> to vector<8x32xf32>
    %322 = vector.shape_cast %319 : vector<8x32xf32> to vector<1x8x32xf32>
    tpu.vector_store %arg22[%c0_121, %c0_122, %c0_123], %322 {strides = array<i32>} : memref<1x8x32xf32, #tpu.memory_space<vmem>>, vector<1x8x32xf32>,
    return
  }
  func.func @transform_0(%arg0: i32) -> (i32, i32, i32) {
    %c0_i32 = arith.constant 0 : i32
    %c0_i32_0 = arith.constant 0 : i32
    %c0_i32_1 = arith.constant 0 : i32
    return %arg0, %c0_i32, %c0_i32_0 : i32, i32, i32
  }
  func.func @transform_1(%arg0: i32) -> (i32, i32) {
    %c0_i32 = arith.constant 0 : i32
    %c0_i32_0 = arith.constant 0 : i32
    %c0_i32_1 = arith.constant 0 : i32
    return %c0_i32, %c0_i32_0 : i32, i32
  }
  func.func @transform_2(%arg0: i32) -> (i32, i32) {
    %c0_i32 = arith.constant 0 : i32
    %c0_i32_0 = arith.constant 0 : i32
    %c0_i32_1 = arith.constant 0 : i32
    return %c0_i32, %c0_i32_0 : i32, i32
  }
  func.func @transform_3(%arg0: i32) -> (i32, i32) {
    %c0_i32 = arith.constant 0 : i32
    %c0_i32_0 = arith.constant 0 : i32
    %c0_i32_1 = arith.constant 0 : i32
    return %c0_i32, %c0_i32_0 : i32, i32
  }
  func.func @transform_4(%arg0: i32) -> (i32, i32) {
    %c0_i32 = arith.constant 0 : i32
    %c0_i32_0 = arith.constant 0 : i32
    %c0_i32_1 = arith.constant 0 : i32
    return %c0_i32, %c0_i32_0 : i32, i32
  }
  func.func @transform_5(%arg0: i32) -> (i32, i32) {
    %c0_i32 = arith.constant 0 : i32
    %c0_i32_0 = arith.constant 0 : i32
    %c0_i32_1 = arith.constant 0 : i32
    return %c0_i32, %c0_i32_0 : i32, i32
  }
  func.func @transform_6(%arg0: i32) -> (i32, i32) {
    %c0_i32 = arith.constant 0 : i32
    %c0_i32_0 = arith.constant 0 : i32
    %c0_i32_1 = arith.constant 0 : i32
    return %c0_i32, %c0_i32_0 : i32, i32
  }
  func.func @transform_7(%arg0: i32) -> (i32, i32) {
    %c0_i32 = arith.constant 0 : i32
    %c0_i32_0 = arith.constant 0 : i32
    %c0_i32_1 = arith.constant 0 : i32
    return %c0_i32, %c0_i32_0 : i32, i32
  }
  func.func @transform_8(%arg0: i32) -> (i32, i32) {
    %c0_i32 = arith.constant 0 : i32
    %c0_i32_0 = arith.constant 0 : i32
    %c0_i32_1 = arith.constant 0 : i32
    return %c0_i32, %c0_i32_0 : i32, i32
  }
  func.func @transform_9(%arg0: i32) -> (i32, i32) {
    %c0_i32 = arith.constant 0 : i32
    %c0_i32_0 = arith.constant 0 : i32
    %c0_i32_1 = arith.constant 0 : i32
    return %c0_i32, %c0_i32_0 : i32, i32
  }
  func.func @transform_10(%arg0: i32) -> (i32, i32) {
    %c0_i32 = arith.constant 0 : i32
    %c0_i32_0 = arith.constant 0 : i32
    %c0_i32_1 = arith.constant 0 : i32
    return %c0_i32, %c0_i32_0 : i32, i32
  }
  func.func @transform_11(%arg0: i32) -> (i32, i32) {
    %c0_i32 = arith.constant 0 : i32
    %c0_i32_0 = arith.constant 0 : i32
    %c0_i32_1 = arith.constant 0 : i32
    return %c0_i32, %c0_i32_0 : i32, i32
  }
  func.func @transform_12(%arg0: i32) -> (i32, i32) {
    %c0_i32 = arith.constant 0 : i32
    %c0_i32_0 = arith.constant 0 : i32
    %c0_i32_1 = arith.constant 0 : i32
    return %c0_i32, %c0_i32_0 : i32, i32
  }
  func.func @transform_13(%arg0: i32) -> (i32, i32) {
    %c0_i32 = arith.constant 0 : i32
    %c0_i32_0 = arith.constant 0 : i32
    %c0_i32_1 = arith.constant 0 : i32
    return %c0_i32, %c0_i32_0 : i32, i32
  }
  func.func @transform_14(%arg0: i32) -> (i32, i32) {
    %c0_i32 = arith.constant 0 : i32
    %c0_i32_0 = arith.constant 0 : i32
    %c0_i32_1 = arith.constant 0 : i32
    return %c0_i32, %c0_i32_0 : i32, i32
  }
  func.func @transform_15(%arg0: i32) -> (i32, i32) {
    %c0_i32 = arith.constant 0 : i32
    %c0_i32_0 = arith.constant 0 : i32
    %c0_i32_1 = arith.constant 0 : i32
    return %c0_i32, %c0_i32_0 : i32, i32
  }
  func.func @transform_16(%arg0: i32) -> (i32, i32) {
    %c0_i32 = arith.constant 0 : i32
    %c0_i32_0 = arith.constant 0 : i32
    %c0_i32_1 = arith.constant 0 : i32
    return %c0_i32, %c0_i32_0 : i32, i32
  }
  func.func @transform_17(%arg0: i32) -> (i32, i32) {
    %c0_i32 = arith.constant 0 : i32
    %c0_i32_0 = arith.constant 0 : i32
    %c0_i32_1 = arith.constant 0 : i32
    return %c0_i32, %c0_i32_0 : i32, i32
  }
  func.func @transform_18(%arg0: i32) -> (i32, i32) {
    %c0_i32 = arith.constant 0 : i32
    %c0_i32_0 = arith.constant 0 : i32
    %c0_i32_1 = arith.constant 0 : i32
    return %c0_i32, %c0_i32_0 : i32, i32
  }
  func.func @transform_19(%arg0: i32) -> (i32, i32) {
    %c0_i32 = arith.constant 0 : i32
    %c0_i32_0 = arith.constant 0 : i32
    %c0_i32_1 = arith.constant 0 : i32
    return %c0_i32, %c0_i32_0 : i32, i32
  }
  func.func @transform_20(%arg0: i32) -> (i32, i32) {
    %c0_i32 = arith.constant 0 : i32
    %c0_i32_0 = arith.constant 0 : i32
    %c0_i32_1 = arith.constant 0 : i32
    return %c0_i32, %c0_i32_0 : i32, i32
  }
  func.func @transform_21(%arg0: i32) -> (i32, i32, i32) {
    %c0_i32 = arith.constant 0 : i32
    %c0_i32_0 = arith.constant 0 : i32
    %c0_i32_1 = arith.constant 0 : i32
    return %arg0, %c0_i32, %c0_i32_0 : i32, i32, i32
  }
}

</mosaic_0001>

<llo_original>
// kernel: tpu_custom_call.1
$region0: #{tpu_custom_call.1}
  #allocation0 [shape = 'u32[]', space=smem, size = 0x4, offset = 0x4, fixed_abs, tag = 'smem constant byte address 0x4 - core index']
  #allocation1 [shape = 'u32[144,128]{1,0:T(1,128)}', space=vmem, size = 0x12000, scoped, tag = 'internal scratch']
  %s0 = inlined_call_operand.vmem [shape: f32[2,8,32], index: 0, kind: input, shape index: {}]
  %s1 = inlined_call_operand.hbm [shape: f32[8,8], index: 1, kind: input, shape index: {}]
  %s2 = inlined_call_operand.hbm [shape: f32[8,8], index: 2, kind: input, shape index: {}]
  %s3 = inlined_call_operand.vmem [shape: bf16[32,96], index: 3, kind: input, shape index: {}]
  %s4 = inlined_call_operand.vmem [shape: f32[1,96], index: 4, kind: input, shape index: {}]
  %s5 = inlined_call_operand.vmem [shape: bf16[32,32], index: 5, kind: input, shape index: {}]
  %s6 = inlined_call_operand.vmem [shape: f32[1,32], index: 6, kind: input, shape index: {}]
  %s7 = inlined_call_operand.hbm [shape: bf16[32,96], index: 7, kind: input, shape index: {}]
  %s8 = inlined_call_operand.hbm [shape: f32[1,96], index: 8, kind: input, shape index: {}]
  %s9 = inlined_call_operand.vmem [shape: bf16[32,32], index: 9, kind: input, shape index: {}]
  %s10 = inlined_call_operand.vmem [shape: f32[1,32], index: 10, kind: input, shape index: {}]
  %s11 = inlined_call_operand.hbm [shape: bf16[32,64], index: 11, kind: input, shape index: {}]
  %s12 = inlined_call_operand.vmem [shape: f32[1,64], index: 12, kind: input, shape index: {}]
  %s13 = inlined_call_operand.vmem [shape: bf16[64,32], index: 13, kind: input, shape index: {}]
  %s14 = inlined_call_operand.vmem [shape: f32[1,32], index: 14, kind: input, shape index: {}]
  %s15 = inlined_call_operand.vmem [shape: f32[1,32], index: 15, kind: input, shape index: {}]
  %s16 = inlined_call_operand.vmem [shape: f32[1,32], index: 16, kind: input, shape index: {}]
  %s17 = inlined_call_operand.vmem [shape: f32[1,32], index: 17, kind: input, shape index: {}]
  %s18 = inlined_call_operand.vmem [shape: f32[1,32], index: 18, kind: input, shape index: {}]
  %s19 = inlined_call_operand.vmem [shape: f32[1,32], index: 19, kind: input, shape index: {}]
  %s20 = inlined_call_operand.vmem [shape: f32[1,32], index: 20, kind: input, shape index: {}]
  %s21 = inlined_call_operand.hbm [shape: f32[2,8,32], index: 21, kind: output, shape index: {}]
  %s22 = sld [smem:[#allocation0]]
  $region137: #{tpu_custom_call.1} parent=0
    _
  %s24 = ssub.s32 1, %s22
  %s25 = scalar_select 0, %s24, %s22
  $region1: #{tpu_custom_call.1} parent=0
    #allocation2 [shape = 'u8[4096]{0}', space=vmem, size = 0x1000, scoped, tag = 'input window, operand 1, single buffered']
    #allocation3 [shape = 's32[2]{0}', space=sflag, size = 0x8, scoped, tag = 'scoped memory for tpu_custom_call.1']
    #allocation4 [shape = 's32[2]{0}', space=sflag, size = 0x8, scoped, tag = 'scoped memory for tpu_custom_call.1']
    #allocation5 [shape = 'u8[4096]{0}', space=vmem, size = 0x1000, scoped, tag = 'input window, operand 2, single buffered']
    #allocation6 [shape = 's32[1]{0}', space=sflag, size = 0x4, scoped, tag = 'scoped memory for tpu_custom_call.1']
    #allocation7 [shape = 'u8[8192]{0}', space=vmem, size = 0x2000, scoped, tag = 'input window, operand 7, single buffered']
    #allocation8 [shape = 'u8[512]{0}', space=vmem, size = 0x400, scoped, tag = 'input window, operand 8, single buffered']
    #allocation9 [shape = 's32[1]{0}', space=sflag, size = 0x4, scoped, tag = 'scoped memory for tpu_custom_call.1']
    #allocation10 [shape = 'u8[8192]{0}', space=vmem, size = 0x2000, scoped, tag = 'input window, operand 11, single buffered']
    #allocation11 [shape = 'u8[8192]{0}', space=vmem, size = 0x2000, scoped, tag = 'output window, operand 0']
    %26 = vsyncpa [#allocation3], 0
    %27 = vsyncpa [#allocation6], 0
    %28 = vsyncpa [#allocation9], 0
    %29 = vsyncpa [#allocation4], 0
    %s30 = scalar_lea.sflag [#allocation4], 1
    %31 = vsyncpa %s30, 0
    loop: start=0, step=1, limit=4
    $region2: #{tpu_custom_call.1} parent=1 // loop_pre_header
      _
    $region3: #{tpu_custom_call.1} parent=1 // loop_header
      %s33 = sphi 0, %s37
      %p34 = scmp.ge.s32.totalorder %s33, 4
      %s43 = sphi 0, %s45
      %s46 = sphi 0, %s43
      %s47 = sphi 0, %s46
      %s63 = sphi 0, %s47
      %s67 = sphi 0, %s67
      %s69 = sphi 0, %s67
      %s70 = sphi 0, %s69
      %s84 = sphi 0, %s70
      %s88 = sphi 0, %s88
      %s90 = sphi 0, %s88
      %s91 = sphi 0, %s90
      %s105 = sphi 0, %s91
      %s109 = sphi 0, %s109
      %s111 = sphi 0, %s109
      %s112 = sphi 0, %s111
      %s126 = sphi 0, %s112
      %s130 = sphi 0, %s130
      %s132 = sphi 0, %s130
      %s133 = sphi 0, %s132
      %s147 = sphi 0, %s133
      %s151 = sphi 0, %s151
      %s153 = sphi 0, %s151
      %s154 = sphi 0, %s153
      %s168 = sphi 0, %s154
      %s172 = sphi 0, %s172
      %s174 = sphi 0, %s172
      %s175 = sphi 0, %s174
      %s189 = sphi 0, %s175
      %s193 = sphi 0, %s193
      %s195 = sphi 0, %s193
      %s196 = sphi 0, %s195
      %s210 = sphi 0, %s196
      %s214 = sphi 0, %s214
      %s216 = sphi 0, %s214
      %s217 = sphi 0, %s216
      %s231 = sphi 0, %s217
      %s235 = sphi 0, %s235
      %s237 = sphi 0, %s235
      %s238 = sphi 0, %s237
      %s252 = sphi 0, %s238
      %s256 = sphi 0, %s256
      %s258 = sphi 0, %s256
      %s259 = sphi 0, %s258
      %s273 = sphi 0, %s259
      %s277 = sphi 0, %s277
      %s279 = sphi 0, %s277
      %s280 = sphi 0, %s279
      %s294 = sphi 0, %s280
      %s298 = sphi 0, %s298
      %s300 = sphi 0, %s298
      %s301 = sphi 0, %s300
      %s315 = sphi 0, %s301
      %s319 = sphi 0, %s319
      %s321 = sphi 0, %s319
      %s322 = sphi 0, %s321
      %s336 = sphi 0, %s322
      %s340 = sphi 0, %s340
      %s342 = sphi 0, %s340
      %s343 = sphi 0, %s342
      %s357 = sphi 0, %s343
      %s361 = sphi 0, %s361
      %s363 = sphi 0, %s361
      %s364 = sphi 0, %s363
      %s378 = sphi 0, %s364
      %s382 = sphi 0, %s382
      %s384 = sphi 0, %s382
      %s385 = sphi 0, %s384
      %s399 = sphi 0, %s385
      %s403 = sphi 0, %s403
      %s405 = sphi 0, %s403
      %s406 = sphi 0, %s405
      %s420 = sphi 0, %s406
      %s424 = sphi 0, %s424
      %s426 = sphi 0, %s424
      %s427 = sphi 0, %s426
      %s441 = sphi 0, %s427
      %s445 = sphi 0, %s445
      %s447 = sphi 0, %s445
      %s448 = sphi 0, %s447
      %s462 = sphi 0, %s448
      %s466 = sphi 0, %s466
      %s468 = sphi 0, %s466
      %s469 = sphi 0, %s468
      %s483 = sphi 0, %s469
      %s489 = sphi 0, %s491
      %s492 = sphi 0, %s489
      %s493 = sphi 0, %s492
      %s509 = sphi 0, %s493
    $region4: #{tpu_custom_call.1} parent=1 // loop_header_branch
      %36 = sbr.rel (%p34) target = $region8
    $region5: #{tpu_custom_call.1} parent=1 // loop_body
      %s38 = ssub.s32 %s33, 1
      %s39 = ssub.s32 %s33, 2
      %s40 = sadd.s32 %s33, 1
      %s41 = ssub.s32 %s33, %s40
      %p42 = scmp.eq.s32.totalorder %s41, 0
      %s44 = sadd.s32 %s43, 1
      %s45 = scalar_select %p42, %s43, %s44
      %p48 = pneg %p42
      %p49 = scmp.eq.s32.totalorder %s33, 1
      %p50 = por %p48, %p49
      %p51 = scmp.ne.s32.totalorder %s43, %s46
      %p52 = scmp.eq.s32.totalorder %s33, 0
      %p53 = por %p51, %p52
      %p54 = scmp.ne.s32.totalorder %s43, %s46
      %p55 = scmp.eq.s32.totalorder %s38, 1
      %p56 = por %p54, %p55
      %p57 = scmp.ne.s32.totalorder %s46, %s47
      %p58 = scmp.eq.s32.totalorder %s38, 0
      %p59 = por %p57, %p58
      %p60 = scmp.ne.s32.totalorder %s46, %s47
      %p61 = scmp.eq.s32.totalorder %s39, 1
      %p62 = por %p60, %p61
      %p64 = scmp.ne.s32.totalorder %s47, %s63
      %p65 = scmp.eq.s32.totalorder %s39, 0
      %p66 = por %p64, %p65
      %s68 = sadd.s32 %s67, 1
      %p71 = scmp.eq.s32.totalorder %s33, 1
      %p72 = scmp.ne.s32.totalorder %s67, %s69
      %p73 = scmp.eq.s32.totalorder %s33, 0
      %p74 = por %p72, %p73
      %p75 = scmp.ne.s32.totalorder %s67, %s69
      %p76 = scmp.eq.s32.totalorder %s38, 1
      %p77 = por %p75, %p76
      %p78 = scmp.ne.s32.totalorder %s69, %s70
      %p79 = scmp.eq.s32.totalorder %s38, 0
      %p80 = por %p78, %p79
      %p81 = scmp.ne.s32.totalorder %s69, %s70
      %p82 = scmp.eq.s32.totalorder %s39, 1
      %p83 = por %p81, %p82
      %p85 = scmp.ne.s32.totalorder %s70, %s84
      %p86 = scmp.eq.s32.totalorder %s39, 0
      %p87 = por %p85, %p86
      %s89 = sadd.s32 %s88, 1
      %p92 = scmp.eq.s32.totalorder %s33, 1
      %p93 = scmp.ne.s32.totalorder %s88, %s90
      %p94 = scmp.eq.s32.totalorder %s33, 0
      %p95 = por %p93, %p94
      %p96 = scmp.ne.s32.totalorder %s88, %s90
      %p97 = scmp.eq.s32.totalorder %s38, 1
      %p98 = por %p96, %p97
      %p99 = scmp.ne.s32.totalorder %s90, %s91
      %p100 = scmp.eq.s32.totalorder %s38, 0
      %p101 = por %p99, %p100
      %p102 = scmp.ne.s32.totalorder %s90, %s91
      %p103 = scmp.eq.s32.totalorder %s39, 1
      %p104 = por %p102, %p103
      %p106 = scmp.ne.s32.totalorder %s91, %s105
      %p107 = scmp.eq.s32.totalorder %s39, 0
      %p108 = por %p106, %p107
      %s110 = sadd.s32 %s109, 1
      %p113 = scmp.eq.s32.totalorder %s33, 1
      %p114 = scmp.ne.s32.totalorder %s109, %s111
      %p115 = scmp.eq.s32.totalorder %s33, 0
      %p116 = por %p114, %p115
      %p117 = scmp.ne.s32.totalorder %s109, %s111
      %p118 = scmp.eq.s32.totalorder %s38, 1
      %p119 = por %p117, %p118
      %p120 = scmp.ne.s32.totalorder %s111, %s112
      %p121 = scmp.eq.s32.totalorder %s38, 0
      %p122 = por %p120, %p121
      %p123 = scmp.ne.s32.totalorder %s111, %s112
      %p124 = scmp.eq.s32.totalorder %s39, 1
      %p125 = por %p123, %p124
      %p127 = scmp.ne.s32.totalorder %s112, %s126
      %p128 = scmp.eq.s32.totalorder %s39, 0
      %p129 = por %p127, %p128
      %s131 = sadd.s32 %s130, 1
      %p134 = scmp.eq.s32.totalorder %s33, 1
      %p135 = scmp.ne.s32.totalorder %s130, %s132
      %p136 = scmp.eq.s32.totalorder %s33, 0
      %p137 = por %p135, %p136
      %p138 = scmp.ne.s32.totalorder %s130, %s132
      %p139 = scmp.eq.s32.totalorder %s38, 1
      %p140 = por %p138, %p139
      %p141 = scmp.ne.s32.totalorder %s132, %s133
      %p142 = scmp.eq.s32.totalorder %s38, 0
      %p143 = por %p141, %p142
      %p144 = scmp.ne.s32.totalorder %s132, %s133
      %p145 = scmp.eq.s32.totalorder %s39, 1
      %p146 = por %p144, %p145
      %p148 = scmp.ne.s32.totalorder %s133, %s147
      %p149 = scmp.eq.s32.totalorder %s39, 0
      %p150 = por %p148, %p149
      %s152 = sadd.s32 %s151, 1
      %p155 = scmp.eq.s32.totalorder %s33, 1
      %p156 = scmp.ne.s32.totalorder %s151, %s153
      %p157 = scmp.eq.s32.totalorder %s33, 0
      %p158 = por %p156, %p157
      %p159 = scmp.ne.s32.totalorder %s151, %s153
      %p160 = scmp.eq.s32.totalorder %s38, 1
      %p161 = por %p159, %p160
      %p162 = scmp.ne.s32.totalorder %s153, %s154
      %p163 = scmp.eq.s32.totalorder %s38, 0
      %p164 = por %p162, %p163
      %p165 = scmp.ne.s32.totalorder %s153, %s154
      %p166 = scmp.eq.s32.totalorder %s39, 1
      %p167 = por %p165, %p166
      %p169 = scmp.ne.s32.totalorder %s154, %s168
      %p170 = scmp.eq.s32.totalorder %s39, 0
      %p171 = por %p169, %p170
      %s173 = sadd.s32 %s172, 1
      %p176 = scmp.eq.s32.totalorder %s33, 1
      %p177 = scmp.ne.s32.totalorder %s172, %s174
      %p178 = scmp.eq.s32.totalorder %s33, 0
      %p179 = por %p177, %p178
      %p180 = scmp.ne.s32.totalorder %s172, %s174
      %p181 = scmp.eq.s32.totalorder %s38, 1
      %p182 = por %p180, %p181
      %p183 = scmp.ne.s32.totalorder %s174, %s175
      %p184 = scmp.eq.s32.totalorder %s38, 0
      %p185 = por %p183, %p184
      %p186 = scmp.ne.s32.totalorder %s174, %s175
      %p187 = scmp.eq.s32.totalorder %s39, 1
      %p188 = por %p186, %p187
      %p190 = scmp.ne.s32.totalorder %s175, %s189
      %p191 = scmp.eq.s32.totalorder %s39, 0
      %p192 = por %p190, %p191
      %s194 = sadd.s32 %s193, 1
      %p197 = scmp.eq.s32.totalorder %s33, 1
      %p198 = scmp.ne.s32.totalorder %s193, %s195
      %p199 = scmp.eq.s32.totalorder %s33, 0
      %p200 = por %p198, %p199
      %p201 = scmp.ne.s32.totalorder %s193, %s195
      %p202 = scmp.eq.s32.totalorder %s38, 1
      %p203 = por %p201, %p202
      %p204 = scmp.ne.s32.totalorder %s195, %s196
      %p205 = scmp.eq.s32.totalorder %s38, 0
      %p206 = por %p204, %p205
      %p207 = scmp.ne.s32.totalorder %s195, %s196
      %p208 = scmp.eq.s32.totalorder %s39, 1
      %p209 = por %p207, %p208
      %p211 = scmp.ne.s32.totalorder %s196, %s210
      %p212 = scmp.eq.s32.totalorder %s39, 0
      %p213 = por %p211, %p212
      %s215 = sadd.s32 %s214, 1
      %p218 = scmp.eq.s32.totalorder %s33, 1
      %p219 = scmp.ne.s32.totalorder %s214, %s216
      %p220 = scmp.eq.s32.totalorder %s33, 0
      %p221 = por %p219, %p220
      %p222 = scmp.ne.s32.totalorder %s214, %s216
      %p223 = scmp.eq.s32.totalorder %s38, 1
      %p224 = por %p222, %p223
      %p225 = scmp.ne.s32.totalorder %s216, %s217
      %p226 = scmp.eq.s32.totalorder %s38, 0
      %p227 = por %p225, %p226
      %p228 = scmp.ne.s32.totalorder %s216, %s217
      %p229 = scmp.eq.s32.totalorder %s39, 1
      %p230 = por %p228, %p229
      %p232 = scmp.ne.s32.totalorder %s217, %s231
      %p233 = scmp.eq.s32.totalorder %s39, 0
      %p234 = por %p232, %p233
      %s236 = sadd.s32 %s235, 1
      %p239 = scmp.eq.s32.totalorder %s33, 1
      %p240 = scmp.ne.s32.totalorder %s235, %s237
      %p241 = scmp.eq.s32.totalorder %s33, 0
      %p242 = por %p240, %p241
      %p243 = scmp.ne.s32.totalorder %s235, %s237
      %p244 = scmp.eq.s32.totalorder %s38, 1
      %p245 = por %p243, %p244
      %p246 = scmp.ne.s32.totalorder %s237, %s238
      %p247 = scmp.eq.s32.totalorder %s38, 0
      %p248 = por %p246, %p247
      %p249 = scmp.ne.s32.totalorder %s237, %s238
      %p250 = scmp.eq.s32.totalorder %s39, 1
      %p251 = por %p249, %p250
      %p253 = scmp.ne.s32.totalorder %s238, %s252
      %p254 = scmp.eq.s32.totalorder %s39, 0
      %p255 = por %p253, %p254
      %s257 = sadd.s32 %s256, 1
      %p260 = scmp.eq.s32.totalorder %s33, 1
      %p261 = scmp.ne.s32.totalorder %s256, %s258
      %p262 = scmp.eq.s32.totalorder %s33, 0
      %p263 = por %p261, %p262
      %p264 = scmp.ne.s32.totalorder %s256, %s258
      %p265 = scmp.eq.s32.totalorder %s38, 1
      %p266 = por %p264, %p265
      %p267 = scmp.ne.s32.totalorder %s258, %s259
      %p268 = scmp.eq.s32.totalorder %s38, 0
      %p269 = por %p267, %p268
      %p270 = scmp.ne.s32.totalorder %s258, %s259
      %p271 = scmp.eq.s32.totalorder %s39, 1
      %p272 = por %p270, %p271
      %p274 = scmp.ne.s32.totalorder %s259, %s273
      %p275 = scmp.eq.s32.totalorder %s39, 0
      %p276 = por %p274, %p275
      %s278 = sadd.s32 %s277, 1
      %p281 = scmp.eq.s32.totalorder %s33, 1
      %p282 = scmp.ne.s32.totalorder %s277, %s279
      %p283 = scmp.eq.s32.totalorder %s33, 0
      %p284 = por %p282, %p283
      %p285 = scmp.ne.s32.totalorder %s277, %s279
      %p286 = scmp.eq.s32.totalorder %s38, 1
      %p287 = por %p285, %p286
      %p288 = scmp.ne.s32.totalorder %s279, %s280
      %p289 = scmp.eq.s32.totalorder %s38, 0
      %p290 = por %p288, %p289
      %p291 = scmp.ne.s32.totalorder %s279, %s280
      %p292 = scmp.eq.s32.totalorder %s39, 1
      %p293 = por %p291, %p292
      %p295 = scmp.ne.s32.totalorder %s280, %s294
      %p296 = scmp.eq.s32.totalorder %s39, 0
      %p297 = por %p295, %p296
      %s299 = sadd.s32 %s298, 1
      %p302 = scmp.eq.s32.totalorder %s33, 1
      %p303 = scmp.ne.s32.totalorder %s298, %s300
      %p304 = scmp.eq.s32.totalorder %s33, 0
      %p305 = por %p303, %p304
      %p306 = scmp.ne.s32.totalorder %s298, %s300
      %p307 = scmp.eq.s32.totalorder %s38, 1
      %p308 = por %p306, %p307
      %p309 = scmp.ne.s32.totalorder %s300, %s301
      %p310 = scmp.eq.s32.totalorder %s38, 0
      %p311 = por %p309, %p310
      %p312 = scmp.ne.s32.totalorder %s300, %s301
      %p313 = scmp.eq.s32.totalorder %s39, 1
      %p314 = por %p312, %p313
      %p316 = scmp.ne.s32.totalorder %s301, %s315
      %p317 = scmp.eq.s32.totalorder %s39, 0
      %p318 = por %p316, %p317
      %s320 = sadd.s32 %s319, 1
      %p323 = scmp.eq.s32.totalorder %s33, 1
      %p324 = scmp.ne.s32.totalorder %s319, %s321
      %p325 = scmp.eq.s32.totalorder %s33, 0
      %p326 = por %p324, %p325
      %p327 = scmp.ne.s32.totalorder %s319, %s321
      %p328 = scmp.eq.s32.totalorder %s38, 1
      %p329 = por %p327, %p328
      %p330 = scmp.ne.s32.totalorder %s321, %s322
      %p331 = scmp.eq.s32.totalorder %s38, 0
      %p332 = por %p330, %p331
      %p333 = scmp.ne.s32.totalorder %s321, %s322
      %p334 = scmp.eq.s32.totalorder %s39, 1
      %p335 = por %p333, %p334
      %p337 = scmp.ne.s32.totalorder %s322, %s336
      %p338 = scmp.eq.s32.totalorder %s39, 0
      %p339 = por %p337, %p338
      %s341 = sadd.s32 %s340, 1
      %p344 = scmp.eq.s32.totalorder %s33, 1
      %p345 = scmp.ne.s32.totalorder %s340, %s342
      %p346 = scmp.eq.s32.totalorder %s33, 0
      %p347 = por %p345, %p346
      %p348 = scmp.ne.s32.totalorder %s340, %s342
      %p349 = scmp.eq.s32.totalorder %s38, 1
      %p350 = por %p348, %p349
      %p351 = scmp.ne.s32.totalorder %s342, %s343
      %p352 = scmp.eq.s32.totalorder %s38, 0
      %p353 = por %p351, %p352
      %p354 = scmp.ne.s32.totalorder %s342, %s343
      %p355 = scmp.eq.s32.totalorder %s39, 1
      %p356 = por %p354, %p355
      %p358 = scmp.ne.s32.totalorder %s343, %s357
      %p359 = scmp.eq.s32.totalorder %s39, 0
      %p360 = por %p358, %p359
      %s362 = sadd.s32 %s361, 1
      %p365 = scmp.eq.s32.totalorder %s33, 1
      %p366 = scmp.ne.s32.totalorder %s361, %s363
      %p367 = scmp.eq.s32.totalorder %s33, 0
      %p368 = por %p366, %p367
      %p369 = scmp.ne.s32.totalorder %s361, %s363
      %p370 = scmp.eq.s32.totalorder %s38, 1
      %p371 = por %p369, %p370
      %p372 = scmp.ne.s32.totalorder %s363, %s364
      %p373 = scmp.eq.s32.totalorder %s38, 0
      %p374 = por %p372, %p373
      %p375 = scmp.ne.s32.totalorder %s363, %s364
      %p376 = scmp.eq.s32.totalorder %s39, 1
      %p377 = por %p375, %p376
      %p379 = scmp.ne.s32.totalorder %s364, %s378
      %p380 = scmp.eq.s32.totalorder %s39, 0
      %p381 = por %p379, %p380
      %s383 = sadd.s32 %s382, 1
      %p386 = scmp.eq.s32.totalorder %s33, 1
      %p387 = scmp.ne.s32.totalorder %s382, %s384
      %p388 = scmp.eq.s32.totalorder %s33, 0
      %p389 = por %p387, %p388
      %p390 = scmp.ne.s32.totalorder %s382, %s384
      %p391 = scmp.eq.s32.totalorder %s38, 1
      %p392 = por %p390, %p391
      %p393 = scmp.ne.s32.totalorder %s384, %s385
      %p394 = scmp.eq.s32.totalorder %s38, 0
      %p395 = por %p393, %p394
      %p396 = scmp.ne.s32.totalorder %s384, %s385
      %p397 = scmp.eq.s32.totalorder %s39, 1
      %p398 = por %p396, %p397
      %p400 = scmp.ne.s32.totalorder %s385, %s399
      %p401 = scmp.eq.s32.totalorder %s39, 0
      %p402 = por %p400, %p401
      %s404 = sadd.s32 %s403, 1
      %p407 = scmp.eq.s32.totalorder %s33, 1
      %p408 = scmp.ne.s32.totalorder %s403, %s405
      %p409 = scmp.eq.s32.totalorder %s33, 0
      %p410 = por %p408, %p409
      %p411 = scmp.ne.s32.totalorder %s403, %s405
      %p412 = scmp.eq.s32.totalorder %s38, 1
      %p413 = por %p411, %p412
      %p414 = scmp.ne.s32.totalorder %s405, %s406
      %p415 = scmp.eq.s32.totalorder %s38, 0
      %p416 = por %p414, %p415
      %p417 = scmp.ne.s32.totalorder %s405, %s406
      %p418 = scmp.eq.s32.totalorder %s39, 1
      %p419 = por %p417, %p418
      %p421 = scmp.ne.s32.totalorder %s406, %s420
      %p422 = scmp.eq.s32.totalorder %s39, 0
      %p423 = por %p421, %p422
      %s425 = sadd.s32 %s424, 1
      %p428 = scmp.eq.s32.totalorder %s33, 1
      %p429 = scmp.ne.s32.totalorder %s424, %s426
      %p430 = scmp.eq.s32.totalorder %s33, 0
      %p431 = por %p429, %p430
      %p432 = scmp.ne.s32.totalorder %s424, %s426
      %p433 = scmp.eq.s32.totalorder %s38, 1
      %p434 = por %p432, %p433
      %p435 = scmp.ne.s32.totalorder %s426, %s427
      %p436 = scmp.eq.s32.totalorder %s38, 0
      %p437 = por %p435, %p436
      %p438 = scmp.ne.s32.totalorder %s426, %s427
      %p439 = scmp.eq.s32.totalorder %s39, 1
      %p440 = por %p438, %p439
      %p442 = scmp.ne.s32.totalorder %s427, %s441
      %p443 = scmp.eq.s32.totalorder %s39, 0
      %p444 = por %p442, %p443
      %s446 = sadd.s32 %s445, 1
      %p449 = scmp.eq.s32.totalorder %s33, 1
      %p450 = scmp.ne.s32.totalorder %s445, %s447
      %p451 = scmp.eq.s32.totalorder %s33, 0
      %p452 = por %p450, %p451
      %p453 = scmp.ne.s32.totalorder %s445, %s447
      %p454 = scmp.eq.s32.totalorder %s38, 1
      %p455 = por %p453, %p454
      %p456 = scmp.ne.s32.totalorder %s447, %s448
      %p457 = scmp.eq.s32.totalorder %s38, 0
      %p458 = por %p456, %p457
      %p459 = scmp.ne.s32.totalorder %s447, %s448
      %p460 = scmp.eq.s32.totalorder %s39, 1
      %p461 = por %p459, %p460
      %p463 = scmp.ne.s32.totalorder %s448, %s462
      %p464 = scmp.eq.s32.totalorder %s39, 0
      %p465 = por %p463, %p464
      %s467 = sadd.s32 %s466, 1
      %p470 = scmp.eq.s32.totalorder %s33, 1
      %p471 = scmp.ne.s32.totalorder %s466, %s468
      %p472 = scmp.eq.s32.totalorder %s33, 0
      %p473 = por %p471, %p472
      %p474 = scmp.ne.s32.totalorder %s466, %s468
      %p475 = scmp.eq.s32.totalorder %s38, 1
      %p476 = por %p474, %p475
      %p477 = scmp.ne.s32.totalorder %s468, %s469
      %p478 = scmp.eq.s32.totalorder %s38, 0
      %p479 = por %p477, %p478
      %p480 = scmp.ne.s32.totalorder %s468, %s469
      %p481 = scmp.eq.s32.totalorder %s39, 1
      %p482 = por %p480, %p481
      %p484 = scmp.ne.s32.totalorder %s469, %s483
      %p485 = scmp.eq.s32.totalorder %s39, 0
      %p486 = por %p484, %p485
      %s487 = ssub.s32 %s33, %s40
      %p488 = scmp.eq.s32.totalorder %s487, 0
      %s490 = sadd.s32 %s489, 1
      %s491 = scalar_select %p488, %s489, %s490
      %p494 = pneg %p488
      %p495 = scmp.eq.s32.totalorder %s33, 1
      %p496 = por %p494, %p495
      %p497 = scmp.ne.s32.totalorder %s489, %s492
      %p498 = scmp.eq.s32.totalorder %s33, 0
      %p499 = por %p497, %p498
      %p500 = scmp.ne.s32.totalorder %s489, %s492
      %p501 = scmp.eq.s32.totalorder %s38, 1
      %p502 = por %p500, %p501
      %p503 = scmp.ne.s32.totalorder %s492, %s493
      %p504 = scmp.eq.s32.totalorder %s38, 0
      %p505 = por %p503, %p504
      %p506 = scmp.ne.s32.totalorder %s492, %s493
      %p507 = scmp.eq.s32.totalorder %s39, 1
      %p508 = por %p506, %p507
      %p510 = scmp.ne.s32.totalorder %s493, %s509
      %p511 = scmp.eq.s32.totalorder %s39, 0
      %p512 = por %p510, %p511
      %p513 = scmp.le.s32.totalorder 1, %s33
      %p514 = scmp.lt.s32.totalorder %s33, 3
      %p515 = pnand %p513, %p514
      %p516 = pneg %p515
      // Predicated region
      $region9: #{tpu_custom_call.1} parent=5 // pred_check
        _
      $region10: #{tpu_custom_call.1} parent=5 // pred_check_branch
        %518 = sbr.rel (%p515) target = $region12
      $region11: #{tpu_custom_call.1} parent=5 // pred_region
        %s519 = ssub.s32 %s33, 1
        // Predicated region
        $region13: #{tpu_custom_call.1} parent=11 // pred_check
          %p520 = pneg %p80
        $region14: #{tpu_custom_call.1} parent=11 // pred_check_branch
          %522 = sbr.rel (%p520) target = $region16
        $region15: #{tpu_custom_call.1} parent=11 // pred_region
          %s524 = ssub.s32 128, 128
          %525 = vsyncadd [#allocation3], %s524
          %s527 = sshll.u32 [#allocation2], 4
          %s528 = int_to_ptr.vmem [resolvable:$true] %s527
          %530 = dma.hbm_to_vmem [thread:$0]  %s1, 128, %s528, [#allocation3]
        $region16: #{tpu_custom_call.1} parent=11 // pred_fallthru
          _
        // Predicated region
        $region17: #{tpu_custom_call.1} parent=11 // pred_check
          %p531 = pneg %p101
        $region18: #{tpu_custom_call.1} parent=11 // pred_check_branch
          %533 = sbr.rel (%p531) target = $region20
        $region19: #{tpu_custom_call.1} parent=11 // pred_region
          %s535 = ssub.s32 128, 128
          %536 = vsyncadd [#allocation6], %s535
          %s538 = sshll.u32 [#allocation5], 4
          %s539 = int_to_ptr.vmem [resolvable:$true] %s538
          %541 = dma.hbm_to_vmem [thread:$0]  %s2, 128, %s539, [#allocation6]
        $region20: #{tpu_custom_call.1} parent=11 // pred_fallthru
          _
        // Predicated region
        $region21: #{tpu_custom_call.1} parent=11 // pred_check
          %p542 = pneg %p122
        $region22: #{tpu_custom_call.1} parent=11 // pred_check_branch
          %544 = sbr.rel (%p542) target = $region24
        $region23: #{tpu_custom_call.1} parent=11 // pred_region
          _
        $region24: #{tpu_custom_call.1} parent=11 // pred_fallthru
          _
        // Predicated region
        $region25: #{tpu_custom_call.1} parent=11 // pred_check
          %p545 = pneg %p143
        $region26: #{tpu_custom_call.1} parent=11 // pred_check_branch
          %547 = sbr.rel (%p545) target = $region28
        $region27: #{tpu_custom_call.1} parent=11 // pred_region
          _
        $region28: #{tpu_custom_call.1} parent=11 // pred_fallthru
          _
        // Predicated region
        $region29: #{tpu_custom_call.1} parent=11 // pred_check
          %p548 = pneg %p164
        $region30: #{tpu_custom_call.1} parent=11 // pred_check_branch
          %550 = sbr.rel (%p548) target = $region32
        $region31: #{tpu_custom_call.1} parent=11 // pred_region
          _
        $region32: #{tpu_custom_call.1} parent=11 // pred_fallthru
          _
        // Predicated region
        $region33: #{tpu_custom_call.1} parent=11 // pred_check
          %p551 = pneg %p185
        $region34: #{tpu_custom_call.1} parent=11 // pred_check_branch
          %553 = sbr.rel (%p551) target = $region36
        $region35: #{tpu_custom_call.1} parent=11 // pred_region
          _
        $region36: #{tpu_custom_call.1} parent=11 // pred_fallthru
          _
        // Predicated region
        $region37: #{tpu_custom_call.1} parent=11 // pred_check
          %p554 = pneg %p206
        $region38: #{tpu_custom_call.1} parent=11 // pred_check_branch
          %556 = sbr.rel (%p554) target = $region40
        $region39: #{tpu_custom_call.1} parent=11 // pred_region
          %s558 = ssub.s32 256, 256
          %559 = vsyncadd [#allocation6], %s558
          %s560 = sshll.u32 [#allocation7], 4
          %s561 = int_to_ptr.vmem [resolvable:$true] %s560
          %566 = dma.hbm_to_vmem [thread:$0]  %s7, 256, %s561, [#allocation6], 64, 64, 4
        $region40: #{tpu_custom_call.1} parent=11 // pred_fallthru
          _
        // Predicated region
        $region41: #{tpu_custom_call.1} parent=11 // pred_check
          %p567 = pneg %p227
        $region42: #{tpu_custom_call.1} parent=11 // pred_check_branch
          %569 = sbr.rel (%p567) target = $region44
        $region43: #{tpu_custom_call.1} parent=11 // pred_region
          %s571 = ssub.s32 16, 16
          %572 = vsyncadd [#allocation9], %s571
          %s574 = sshll.u32 [#allocation8], 4
          %s575 = int_to_ptr.vmem [resolvable:$true] %s574
          %577 = dma.hbm_to_vmem [thread:$0]  %s8, 16, %s575, [#allocation9]
        $region44: #{tpu_custom_call.1} parent=11 // pred_fallthru
          _
        // Predicated region
        $region45: #{tpu_custom_call.1} parent=11 // pred_check
          %p578 = pneg %p248
        $region46: #{tpu_custom_call.1} parent=11 // pred_check_branch
          %580 = sbr.rel (%p578) target = $region48
        $region47: #{tpu_custom_call.1} parent=11 // pred_region
          _
        $region48: #{tpu_custom_call.1} parent=11 // pred_fallthru
          _
        // Predicated region
        $region49: #{tpu_custom_call.1} parent=11 // pred_check
          %p581 = pneg %p269
        $region50: #{tpu_custom_call.1} parent=11 // pred_check_branch
          %583 = sbr.rel (%p581) target = $region52
        $region51: #{tpu_custom_call.1} parent=11 // pred_region
          _
        $region52: #{tpu_custom_call.1} parent=11 // pred_fallthru
          _
        // Predicated region
        $region53: #{tpu_custom_call.1} parent=11 // pred_check
          %p584 = pneg %p290
        $region54: #{tpu_custom_call.1} parent=11 // pred_check_branch
          %586 = sbr.rel (%p584) target = $region56
        $region55: #{tpu_custom_call.1} parent=11 // pred_region
          %s588 = ssub.s32 256, 256
          %589 = vsyncadd [#allocation9], %s588
          %s590 = sshll.u32 [#allocation10], 4
          %s591 = int_to_ptr.vmem [resolvable:$true] %s590
          %596 = dma.hbm_to_vmem [thread:$0]  %s11, 256, %s591, [#allocation9], 64, 64, 4
        $region56: #{tpu_custom_call.1} parent=11 // pred_fallthru
          _
        // Predicated region
        $region57: #{tpu_custom_call.1} parent=11 // pred_check
          %p597 = pneg %p311
        $region58: #{tpu_custom_call.1} parent=11 // pred_check_branch
          %599 = sbr.rel (%p597) target = $region60
        $region59: #{tpu_custom_call.1} parent=11 // pred_region
          _
        $region60: #{tpu_custom_call.1} parent=11 // pred_fallthru
          _
        // Predicated region
        $region61: #{tpu_custom_call.1} parent=11 // pred_check
          %p600 = pneg %p332
        $region62: #{tpu_custom_call.1} parent=11 // pred_check_branch
          %602 = sbr.rel (%p600) target = $region64
        $region63: #{tpu_custom_call.1} parent=11 // pred_region
          _
        $region64: #{tpu_custom_call.1} parent=11 // pred_fallthru
          _
        // Predicated region
        $region65: #{tpu_custom_call.1} parent=11 // pred_check
          %p603 = pneg %p353
        $region66: #{tpu_custom_call.1} parent=11 // pred_check_branch
          %605 = sbr.rel (%p603) target = $region68
        $region67: #{tpu_custom_call.1} parent=11 // pred_region
          _
        $region68: #{tpu_custom_call.1} parent=11 // pred_fallthru
          _
        // Predicated region
        $region69: #{tpu_custom_call.1} parent=11 // pred_check
          %p606 = pneg %p374
        $region70: #{tpu_custom_call.1} parent=11 // pred_check_branch
          %608 = sbr.rel (%p606) target = $region72
        $region71: #{tpu_custom_call.1} parent=11 // pred_region
          _
        $region72: #{tpu_custom_call.1} parent=11 // pred_fallthru
          _
        // Predicated region
        $region73: #{tpu_custom_call.1} parent=11 // pred_check
          %p609 = pneg %p395
        $region74: #{tpu_custom_call.1} parent=11 // pred_check_branch
          %611 = sbr.rel (%p609) target = $region76
        $region75: #{tpu_custom_call.1} parent=11 // pred_region
          _
        $region76: #{tpu_custom_call.1} parent=11 // pred_fallthru
          _
        // Predicated region
        $region77: #{tpu_custom_call.1} parent=11 // pred_check
          %p612 = pneg %p416
        $region78: #{tpu_custom_call.1} parent=11 // pred_check_branch
          %614 = sbr.rel (%p612) target = $region80
        $region79: #{tpu_custom_call.1} parent=11 // pred_region
          _
        $region80: #{tpu_custom_call.1} parent=11 // pred_fallthru
          _
        // Predicated region
        $region81: #{tpu_custom_call.1} parent=11 // pred_check
          %p615 = pneg %p437
        $region82: #{tpu_custom_call.1} parent=11 // pred_check_branch
          %617 = sbr.rel (%p615) target = $region84
        $region83: #{tpu_custom_call.1} parent=11 // pred_region
          _
        $region84: #{tpu_custom_call.1} parent=11 // pred_fallthru
          _
        // Predicated region
        $region85: #{tpu_custom_call.1} parent=11 // pred_check
          %p618 = pneg %p458
        $region86: #{tpu_custom_call.1} parent=11 // pred_check_branch
          %620 = sbr.rel (%p618) target = $region88
        $region87: #{tpu_custom_call.1} parent=11 // pred_region
          _
        $region88: #{tpu_custom_call.1} parent=11 // pred_fallthru
          _
        // Predicated region
        $region89: #{tpu_custom_call.1} parent=11 // pred_check
          %p621 = pneg %p479
        $region90: #{tpu_custom_call.1} parent=11 // pred_check_branch
          %623 = sbr.rel (%p621) target = $region92
        $region91: #{tpu_custom_call.1} parent=11 // pred_region
          _
        $region92: #{tpu_custom_call.1} parent=11 // pred_fallthru
          _
      $region12: #{tpu_custom_call.1} parent=5 // pred_fallthru
        _
      %p624 = scmp.lt.s32.totalorder %s33, 2
      // Predicated region
      $region93: #{tpu_custom_call.1} parent=5 // pred_check
        %p625 = pneg %p624
      $region94: #{tpu_custom_call.1} parent=5 // pred_check_branch
        %627 = sbr.rel (%p625) target = $region96
      $region95: #{tpu_custom_call.1} parent=5 // pred_region
        // Predicated region
        $region97: #{tpu_custom_call.1} parent=95 // pred_check
          %p628 = pneg %p53
        $region98: #{tpu_custom_call.1} parent=95 // pred_check_branch
          %630 = sbr.rel (%p628) target = $region100
        $region99: #{tpu_custom_call.1} parent=95 // pred_region
          %p631 = scmp.lt.s32.totalorder %s33, 1
          %s632 = scalar_select %p631, %s33, 1
          %s633 = smul.addr %s632, 8
          %s634 = scalar_lea.vmem %s0, %s633
        $region100: #{tpu_custom_call.1} parent=95 // pred_fallthru
          _
      $region96: #{tpu_custom_call.1} parent=5 // pred_fallthru
        _
      %p635 = scmp.le.s32.totalorder 1, %s33
      %p636 = scmp.lt.s32.totalorder %s33, 3
      %p637 = pnand %p635, %p636
      %p638 = pneg %p637
      // Predicated region
      $region101: #{tpu_custom_call.1} parent=5 // pred_check
        _
      $region102: #{tpu_custom_call.1} parent=5 // pred_check_branch
        %640 = sbr.rel (%p637) target = $region104
      $region103: #{tpu_custom_call.1} parent=5 // pred_region
        %s641 = ssub.s32 %s33, 1
        // Predicated region
        $region105: #{tpu_custom_call.1} parent=103 // pred_check
          %p642 = pneg %p80
        $region106: #{tpu_custom_call.1} parent=103 // pred_check_branch
          %644 = sbr.rel (%p642) target = $region108
        $region107: #{tpu_custom_call.1} parent=103 // pred_region
          %645 = dma.done [#allocation3], 128
        $region108: #{tpu_custom_call.1} parent=103 // pred_fallthru
          _
        // Predicated region
        $region109: #{tpu_custom_call.1} parent=103 // pred_check
          %p646 = pneg %p101
        $region110: #{tpu_custom_call.1} parent=103 // pred_check_branch
          %648 = sbr.rel (%p646) target = $region112
        $region111: #{tpu_custom_call.1} parent=103 // pred_region
          %649 = dma.done [#allocation6], 128
        $region112: #{tpu_custom_call.1} parent=103 // pred_fallthru
          _
        // Predicated region
        $region113: #{tpu_custom_call.1} parent=103 // pred_check
          %p650 = pneg %p206
        $region114: #{tpu_custom_call.1} parent=103 // pred_check_branch
          %652 = sbr.rel (%p650) target = $region116
        $region115: #{tpu_custom_call.1} parent=103 // pred_region
          %653 = dma.done [#allocation6], 256
        $region116: #{tpu_custom_call.1} parent=103 // pred_fallthru
          _
        // Predicated region
        $region117: #{tpu_custom_call.1} parent=103 // pred_check
          %p654 = pneg %p227
        $region118: #{tpu_custom_call.1} parent=103 // pred_check_branch
          %656 = sbr.rel (%p654) target = $region120
        $region119: #{tpu_custom_call.1} parent=103 // pred_region
          %657 = dma.done [#allocation9], 16
        $region120: #{tpu_custom_call.1} parent=103 // pred_fallthru
          _
        // Predicated region
        $region121: #{tpu_custom_call.1} parent=103 // pred_check
          %p658 = pneg %p290
        $region122: #{tpu_custom_call.1} parent=103 // pred_check_branch
          %660 = sbr.rel (%p658) target = $region124
        $region123: #{tpu_custom_call.1} parent=103 // pred_region
          %661 = dma.done [#allocation9], 256
        $region124: #{tpu_custom_call.1} parent=103 // pred_fallthru
          _
        %p662 = scmp.lt.s32.totalorder %s38, 1
        %s663 = scalar_select %p662, %s38, 1
        %s664 = smul.addr %s663, 8
        %s665 = scalar_lea.vmem %s0, %s664
        %p666 = pneg %p59
        %p667 = pneg %p56
        %p668 = pneg %p80
        %p669 = pneg %p77
        %p670 = pneg %p101
        %p671 = pneg %p98
        %p672 = pneg %p122
        %p673 = pneg %p119
        %p674 = pneg %p143
        %p675 = pneg %p140
        %p676 = pneg %p164
        %p677 = pneg %p161
        %p678 = pneg %p185
        %p679 = pneg %p182
        %p680 = pneg %p206
        %p681 = pneg %p203
        %p682 = pneg %p227
        %p683 = pneg %p224
        %p684 = pneg %p248
        %p685 = pneg %p245
        %p686 = pneg %p269
        %p687 = pneg %p266
        %p688 = pneg %p290
        %p689 = pneg %p287
        %p690 = pneg %p311
        %p691 = pneg %p308
        %p692 = pneg %p332
        %p693 = pneg %p329
        %p694 = pneg %p353
        %p695 = pneg %p350
        %p696 = pneg %p374
        %p697 = pneg %p371
        %p698 = pneg %p395
        %p699 = pneg %p392
        %p700 = pneg %p416
        %p701 = pneg %p413
        %p702 = pneg %p437
        %p703 = pneg %p434
        %p704 = pneg %p458
        %p705 = pneg %p455
        %p706 = pneg %p479
        %p707 = pneg %p476
        %p708 = pneg %p505
        %p709 = pneg %p502
        %s710 = sand.u32 %s492, 1
        %s711 = scalar_lea.sflag [#allocation4], %s710
        %s712 = sand.u32 %s492, 1
        %s713 = smul.addr %s712, 8
        %s714 = scalar_lea.vmem [#allocation11], %s713
        %p715 = scmp.lt.s32.totalorder %s38, 1
        %s716 = scalar_select %p715, %s38, 1
        %s717 = smul.addr %s716, 8
        %s718 = scalar_lea.vmem %s0, %s717
        %v720 = vld [vmem:[%s718] sm:$0xff]
        %v721 = vld [vmem:[#allocation2] sm:$0xff]
        %v722 = vld [vmem:[#allocation5] sm:$0xff]
        %v723 = vpack.c.bf16 %v720, %v720
        %v724 = vld [vmem:[%s3] sm:$0xf]
        %v725 = vld [vmem:[%s3 + $0x4] sm:$0xf]
        %v726 = vld [vmem:[%s3 + $0x8] sm:$0xf]
        %v727 = vld [vmem:[%s3 + $0xc] sm:$0xf]
        %v728 = vld [vmem:[%s4] sm:$0x1]
        %v730 = vlaneseq
        %v731 = vshrl.u32 %v730, 7
        %v732 = vsub.s32 0, %v731
        %v733 = vrot.slane %v728, %v732
        %v739 = vunpack.c.l.b16 %v724
        %v740 = vunpack.c.l.b16 %v725
        %v741 = vunpack.c.l.b16 %v726
        %v742 = vunpack.c.l.b16 %v727
        %v743 = vpack.c.b16 %v740, %v739
        %v744 = vpack.c.b16 %v742, %v741
        %vm747 = vcmask 261120
        %v749 = vsel %vm747, %v723, 0
        %751 = vmatprep.subr.bf16.mxu0 0
        %752 = vmatpush1.bf16.msra.mxu0 %v743
        %753 = vmatprep.subr.bf16.mxu0 0
        %754 = vmatpush1.bf16.msra.mxu0 %v744
        %755 = vmatprep.subr.bf16.mxu0 0
        %756 = vmatpush1.bf16.msra.mxu0 0
        %757 = vmatprep.subr.bf16.mxu0 0
        %758 = vmatpush1.bf16.msra.mxu0 0
        %759 = vmatprep.subr.bf16.mxu0 0
        %760 = vmatpush1.bf16.msra.mxu0 0
        %761 = vmatprep.subr.bf16.mxu0 0
        %762 = vmatpush1.bf16.msra.mxu0 0
        %763 = vmatprep.subr.bf16.mxu0 0
        %764 = vmatpush1.bf16.msra.mxu0 0
        %765 = vmatprep.subr.bf16.mxu0 0
        %766 = vmatpush1.bf16.msra.mxu0 0
        %767 = vmatprep.subr.bf16.mxu0 0
        %768 = vmatpush1.bf16.msra.mxu0 0
        %769 = vmatprep.subr.bf16.mxu0 0
        %770 = vmatpush1.bf16.msra.mxu0 0
        %771 = vmatprep.subr.bf16.mxu0 0
        %772 = vmatpush1.bf16.msra.mxu0 0
        %773 = vmatprep.subr.bf16.mxu0 0
        %774 = vmatpush1.bf16.msra.mxu0 0
        %775 = vmatprep.subr.bf16.mxu0 0
        %776 = vmatpush1.bf16.msra.mxu0 0
        %777 = vmatprep.subr.bf16.mxu0 0
        %778 = vmatpush1.bf16.msra.mxu0 0
        %779 = vmatprep.subr.bf16.mxu0 0
        %780 = vmatpush1.bf16.msra.mxu0 0
        %781 = vmatprep.subr.bf16.mxu0 0
        %782 = vmatpush1.bf16.msra.mxu0 0
        %783 = vmatprep.mubr.bf16.mxu0 0
        %784 = vmatmul.mubr.bf16.gmra.mrb[0].mxu0 %v749
        %v785 = vpop.f32.mrb[0].mxu0
        %v786 = vadd.f32 %v733, %v785
        %v787 = vpop.f32.mrb[0].mxu0
        %v788 = vpop.f32.mrb[0].mxu0
        %v789 = vpop.f32.mrb[0].mxu0
        %790 = vdwg.mxu0
        %v791 = vmul.f32 %v786, 0.35355338
        %v792 = vpack.c.bf16 %v791, %v791
        %v793 = vpack.c.bf16 %v786, %v786
        %v794 = vld [vmem:[%s5] sm:$0xf]
        %v795 = vld [vmem:[%s5 + $0x4] sm:$0xf]
        %v796 = vld [vmem:[%s5 + $0x8] sm:$0xf]
        %v797 = vld [vmem:[%s5 + $0xc] sm:$0xf]
        %799 = vrot.lane.b32.xlu0 %v793, 96
        %v800 = vpop.permute.xlu0 %799
        %vm801 = vcmask 64512
        %v803 = vsel %vm801, %v792, 0
        %v806 = vsel %vm801, %v800, 0
        %808 = vmatprep.subr.bf16.mxu0 0
        %809 = vmatpush1.bf16.xpose.msra.mxu0 %v806
        %810 = vmatprep.subr.bf16.mxu0 0
        %811 = vmatpush1.bf16.xpose.msra.mxu0 0
        %812 = vmatprep.subr.bf16.mxu0 0
        %813 = vmatpush1.bf16.xpose.msra.mxu0 0
        %814 = vmatprep.subr.bf16.mxu0 0
        %815 = vmatpush1.bf16.xpose.msra.mxu0 0
        %816 = vmatprep.subr.bf16.mxu0 0
        %817 = vmatpush1.bf16.xpose.msra.mxu0 0
        %818 = vmatprep.subr.bf16.mxu0 0
        %819 = vmatpush1.bf16.xpose.msra.mxu0 0
        %820 = vmatprep.subr.bf16.mxu0 0
        %821 = vmatpush1.bf16.xpose.msra.mxu0 0
        %822 = vmatprep.subr.bf16.mxu0 0
        %823 = vmatpush1.bf16.xpose.msra.mxu0 0
        %824 = vmatprep.subr.bf16.mxu0 0
        %825 = vmatpush1.bf16.xpose.msra.mxu0 0
        %826 = vmatprep.subr.bf16.mxu0 0
        %827 = vmatpush1.bf16.xpose.msra.mxu0 0
        %828 = vmatprep.subr.bf16.mxu0 0
        %829 = vmatpush1.bf16.xpose.msra.mxu0 0
        %830 = vmatprep.subr.bf16.mxu0 0
        %831 = vmatpush1.bf16.xpose.msra.mxu0 0
        %832 = vmatprep.subr.bf16.mxu0 0
        %833 = vmatpush1.bf16.xpose.msra.mxu0 0
        %834 = vmatprep.subr.bf16.mxu0 0
        %835 = vmatpush1.bf16.xpose.msra.mxu0 0
        %836 = vmatprep.subr.bf16.mxu0 0
        %837 = vmatpush1.bf16.xpose.msra.mxu0 0
        %838 = vmatprep.subr.bf16.mxu0 0
        %839 = vmatpush1.bf16.xpose.msra.mxu0 0
        %840 = vmatprep.mubr.bf16.mxu0 0
        %841 = vmatmul.mubr.bf16.gmra.mrb[0].mxu0 %v803
        %v842 = vpop.f32.mrb[0].mxu0
        %v843 = vadd.f32 0.0, %v842
        %v844 = vpop.f32.mrb[0].mxu0
        %v845 = vpop.f32.mrb[0].mxu0
        %v846 = vpop.f32.mrb[0].mxu0
        %847 = vdwg.mxu0
        %vm848 = vcmp.eq.f32.partialorder %v721, 0.0
        %v849 = vsel %vm848, -1e+30, %v843
        %v850 = vsel %vm801, %v849, -inf
        %851 = vmax.xlane.f32.xlu0 %v850
        %v852 = vpop.xlane.xlu0 %851
        %v853 = vsub.f32 %v849, %v852
        %v854 = vmul.f32 %v853, 1.442695
        %v855 = vpow.pop %v854
        %v856 = vsel %vm801, %v855, 0.0
        %857 = vadd.xlane.f32.xlu0 %v856
        %v858 = vpop.xlane.xlu0 %857
        %v859 = vrcp.pop %v858
        %v860 = vmul.f32 %v855, %v859
        %v861 = vpack.c.bf16 %v860, %v860
        %862 = vrot.lane.b32.xlu0 %v793, 64
        %v863 = vpop.permute.xlu0 %862
        %v865 = vsel %vm801, %v861, 0
        %vm867 = vcmask 1043456
        %v869 = vsel %vm867, %v863, 0
        %871 = vmatprep.subr.bf16.mxu0 0
        %872 = vmatpush1.bf16.msra.mxu0 %v869
        %873 = vmatprep.subr.bf16.mxu0 0
        %874 = vmatpush1.bf16.msra.mxu0 0
        %875 = vmatprep.subr.bf16.mxu0 0
        %876 = vmatpush1.bf16.msra.mxu0 0
        %877 = vmatprep.subr.bf16.mxu0 0
        %878 = vmatpush1.bf16.msra.mxu0 0
        %879 = vmatprep.subr.bf16.mxu0 0
        %880 = vmatpush1.bf16.msra.mxu0 0
        %881 = vmatprep.subr.bf16.mxu0 0
        %882 = vmatpush1.bf16.msra.mxu0 0
        %883 = vmatprep.subr.bf16.mxu0 0
        %884 = vmatpush1.bf16.msra.mxu0 0
        %885 = vmatprep.subr.bf16.mxu0 0
        %886 = vmatpush1.bf16.msra.mxu0 0
        %887 = vmatprep.subr.bf16.mxu0 0
        %888 = vmatpush1.bf16.msra.mxu0 0
        %889 = vmatprep.subr.bf16.mxu0 0
        %890 = vmatpush1.bf16.msra.mxu0 0
        %891 = vmatprep.subr.bf16.mxu0 0
        %892 = vmatpush1.bf16.msra.mxu0 0
        %893 = vmatprep.subr.bf16.mxu0 0
        %894 = vmatpush1.bf16.msra.mxu0 0
        %895 = vmatprep.subr.bf16.mxu0 0
        %896 = vmatpush1.bf16.msra.mxu0 0
        %897 = vmatprep.subr.bf16.mxu0 0
        %898 = vmatpush1.bf16.msra.mxu0 0
        %899 = vmatprep.subr.bf16.mxu0 0
        %900 = vmatpush1.bf16.msra.mxu0 0
        %901 = vmatprep.subr.bf16.mxu0 0
        %902 = vmatpush1.bf16.msra.mxu0 0
        %903 = vmatprep.mubr.bf16.mxu0 0
        %904 = vmatmul.mubr.bf16.gmra.mrb[0].mxu0 %v865
        %v905 = vpop.f32.mrb[0].mxu0
        %v906 = vadd.f32 0.0, %v905
        %v907 = vpop.f32.mrb[0].mxu0
        %v908 = vpop.f32.mrb[0].mxu0
        %v909 = vpop.f32.mrb[0].mxu0
        %910 = vdwg.mxu0
        %v911 = vpack.c.bf16 %v906, %v906
        %913 = vrot.lane.b32.xlu0 %v792, 120
        %v914 = vpop.permute.xlu0 %913
        %915 = vrot.lane.b32.xlu0 %v793, 88
        %v916 = vpop.permute.xlu0 %915
        %v918 = vsel %vm801, %v914, 0
        %v921 = vsel %vm801, %v916, 0
        %923 = vmatprep.subr.bf16.mxu0 0
        %924 = vmatpush1.bf16.xpose.msra.mxu0 %v921
        %925 = vmatprep.subr.bf16.mxu0 0
        %926 = vmatpush1.bf16.xpose.msra.mxu0 0
        %927 = vmatprep.subr.bf16.mxu0 0
        %928 = vmatpush1.bf16.xpose.msra.mxu0 0
        %929 = vmatprep.subr.bf16.mxu0 0
        %930 = vmatpush1.bf16.xpose.msra.mxu0 0
        %931 = vmatprep.subr.bf16.mxu0 0
        %932 = vmatpush1.bf16.xpose.msra.mxu0 0
        %933 = vmatprep.subr.bf16.mxu0 0
        %934 = vmatpush1.bf16.xpose.msra.mxu0 0
        %935 = vmatprep.subr.bf16.mxu0 0
        %936 = vmatpush1.bf16.xpose.msra.mxu0 0
        %937 = vmatprep.subr.bf16.mxu0 0
        %938 = vmatpush1.bf16.xpose.msra.mxu0 0
        %939 = vmatprep.subr.bf16.mxu0 0
        %940 = vmatpush1.bf16.xpose.msra.mxu0 0
        %941 = vmatprep.subr.bf16.mxu0 0
        %942 = vmatpush1.bf16.xpose.msra.mxu0 0
        %943 = vmatprep.subr.bf16.mxu0 0
        %944 = vmatpush1.bf16.xpose.msra.mxu0 0
        %945 = vmatprep.subr.bf16.mxu0 0
        %946 = vmatpush1.bf16.xpose.msra.mxu0 0
        %947 = vmatprep.subr.bf16.mxu0 0
        %948 = vmatpush1.bf16.xpose.msra.mxu0 0
        %949 = vmatprep.subr.bf16.mxu0 0
        %950 = vmatpush1.bf16.xpose.msra.mxu0 0
        %951 = vmatprep.subr.bf16.mxu0 0
        %952 = vmatpush1.bf16.xpose.msra.mxu0 0
        %953 = vmatprep.subr.bf16.mxu0 0
        %954 = vmatpush1.bf16.xpose.msra.mxu0 0
        %955 = vmatprep.mubr.bf16.mxu0 0
        %956 = vmatmul.mubr.bf16.gmra.mrb[0].mxu0 %v918
        %v957 = vpop.f32.mrb[0].mxu0
        %v958 = vadd.f32 0.0, %v957
        %v959 = vpop.f32.mrb[0].mxu0
        %v960 = vpop.f32.mrb[0].mxu0
        %v961 = vpop.f32.mrb[0].mxu0
        %962 = vdwg.mxu0
        %v963 = vsel %vm848, -1e+30, %v958
        %v964 = vsel %vm801, %v963, -inf
        %965 = vmax.xlane.f32.xlu0 %v964
        %v966 = vpop.xlane.xlu0 %965
        %v967 = vsub.f32 %v963, %v966
        %v968 = vmul.f32 %v967, 1.442695
        %v969 = vpow.pop %v968
        %v970 = vsel %vm801, %v969, 0.0
        %971 = vadd.xlane.f32.xlu0 %v970
        %v972 = vpop.xlane.xlu0 %971
        %v973 = vrcp.pop %v972
        %v974 = vmul.f32 %v969, %v973
        %v975 = vpack.c.bf16 %v974, %v974
        %976 = vrot.lane.b32.xlu0 %v793, 56
        %v977 = vpop.permute.xlu0 %976
        %v979 = vsel %vm801, %v975, 0
        %v982 = vsel %vm867, %v977, 0
        %984 = vmatprep.subr.bf16.mxu0 0
        %985 = vmatpush1.bf16.msra.mxu0 %v982
        %986 = vmatprep.subr.bf16.mxu0 0
        %987 = vmatpush1.bf16.msra.mxu0 0
        %988 = vmatprep.subr.bf16.mxu0 0
        %989 = vmatpush1.bf16.msra.mxu0 0
        %990 = vmatprep.subr.bf16.mxu0 0
        %991 = vmatpush1.bf16.msra.mxu0 0
        %992 = vmatprep.subr.bf16.mxu0 0
        %993 = vmatpush1.bf16.msra.mxu0 0
        %994 = vmatprep.subr.bf16.mxu0 0
        %995 = vmatpush1.bf16.msra.mxu0 0
        %996 = vmatprep.subr.bf16.mxu0 0
        %997 = vmatpush1.bf16.msra.mxu0 0
        %998 = vmatprep.subr.bf16.mxu0 0
        %999 = vmatpush1.bf16.msra.mxu0 0
        %1000 = vmatprep.subr.bf16.mxu0 0
        %1001 = vmatpush1.bf16.msra.mxu0 0
        %1002 = vmatprep.subr.bf16.mxu0 0
        %1003 = vmatpush1.bf16.msra.mxu0 0
        %1004 = vmatprep.subr.bf16.mxu0 0
        %1005 = vmatpush1.bf16.msra.mxu0 0
        %1006 = vmatprep.subr.bf16.mxu0 0
        %1007 = vmatpush1.bf16.msra.mxu0 0
        %1008 = vmatprep.subr.bf16.mxu0 0
        %1009 = vmatpush1.bf16.msra.mxu0 0
        %1010 = vmatprep.subr.bf16.mxu0 0
        %1011 = vmatpush1.bf16.msra.mxu0 0
        %1012 = vmatprep.subr.bf16.mxu0 0
        %1013 = vmatpush1.bf16.msra.mxu0 0
        %1014 = vmatprep.subr.bf16.mxu0 0
        %1015 = vmatpush1.bf16.msra.mxu0 0
        %1016 = vmatprep.mubr.bf16.mxu0 0
        %1017 = vmatmul.mubr.bf16.gmra.mrb[0].mxu0 %v979
        %v1018 = vpop.f32.mrb[0].mxu0
        %v1019 = vadd.f32 0.0, %v1018
        %v1020 = vpop.f32.mrb[0].mxu0
        %v1021 = vpop.f32.mrb[0].mxu0
        %v1022 = vpop.f32.mrb[0].mxu0
        %1023 = vdwg.mxu0
        %v1024 = vpack.c.bf16 %v1019, %v1019
        %v1026 = vsel %vm801, %v1024, 0
        %v1029 = vsel %vm867, %v795, 0
        %1031 = vmatprep.subr.bf16.mxu0 0
        %1032 = vmatpush1.bf16.msra.mxu0 %v1029
        %1033 = vmatprep.subr.bf16.mxu0 0
        %1034 = vmatpush1.bf16.msra.mxu0 0
        %1035 = vmatprep.subr.bf16.mxu0 0
        %1036 = vmatpush1.bf16.msra.mxu0 0
        %1037 = vmatprep.subr.bf16.mxu0 0
        %1038 = vmatpush1.bf16.msra.mxu0 0
        %1039 = vmatprep.subr.bf16.mxu0 0
        %1040 = vmatpush1.bf16.msra.mxu0 0
        %1041 = vmatprep.subr.bf16.mxu0 0
        %1042 = vmatpush1.bf16.msra.mxu0 0
        %1043 = vmatprep.subr.bf16.mxu0 0
        %1044 = vmatpush1.bf16.msra.mxu0 0
        %1045 = vmatprep.subr.bf16.mxu0 0
        %1046 = vmatpush1.bf16.msra.mxu0 0
        %1047 = vmatprep.subr.bf16.mxu0 0
        %1048 = vmatpush1.bf16.msra.mxu0 0
        %1049 = vmatprep.subr.bf16.mxu0 0
        %1050 = vmatpush1.bf16.msra.mxu0 0
        %1051 = vmatprep.subr.bf16.mxu0 0
        %1052 = vmatpush1.bf16.msra.mxu0 0
        %1053 = vmatprep.subr.bf16.mxu0 0
        %1054 = vmatpush1.bf16.msra.mxu0 0
        %1055 = vmatprep.subr.bf16.mxu0 0
        %1056 = vmatpush1.bf16.msra.mxu0 0
        %1057 = vmatprep.subr.bf16.mxu0 0
        %1058 = vmatpush1.bf16.msra.mxu0 0
        %1059 = vmatprep.subr.bf16.mxu0 0
        %1060 = vmatpush1.bf16.msra.mxu0 0
        %1061 = vmatprep.subr.bf16.mxu0 0
        %1062 = vmatpush1.bf16.msra.mxu0 0
        %1063 = vmatprep.mubr.bf16.mxu0 0
        %1064 = vmatmul.mubr.bf16.gmra.mrb[0].mxu0 %v1026
        %v1065 = vpop.f32.mrb[0].mxu0
        %v1066 = vadd.f32 0.0, %v1065
        %v1067 = vpop.f32.mrb[0].mxu0
        %v1068 = vpop.f32.mrb[0].mxu0
        %v1069 = vpop.f32.mrb[0].mxu0
        %1070 = vdwg.mxu0
        %v1072 = vsel %vm801, %v911, 0
        %v1075 = vsel %vm867, %v794, 0
        %1077 = vmatprep.subr.bf16.mxu0 0
        %1078 = vmatpush1.bf16.msra.mxu0 %v1075
        %1079 = vmatprep.subr.bf16.mxu0 0
        %1080 = vmatpush1.bf16.msra.mxu0 0
        %1081 = vmatprep.subr.bf16.mxu0 0
        %1082 = vmatpush1.bf16.msra.mxu0 0
        %1083 = vmatprep.subr.bf16.mxu0 0
        %1084 = vmatpush1.bf16.msra.mxu0 0
        %1085 = vmatprep.subr.bf16.mxu0 0
        %1086 = vmatpush1.bf16.msra.mxu0 0
        %1087 = vmatprep.subr.bf16.mxu0 0
        %1088 = vmatpush1.bf16.msra.mxu0 0
        %1089 = vmatprep.subr.bf16.mxu0 0
        %1090 = vmatpush1.bf16.msra.mxu0 0
        %1091 = vmatprep.subr.bf16.mxu0 0
        %1092 = vmatpush1.bf16.msra.mxu0 0
        %1093 = vmatprep.subr.bf16.mxu0 0
        %1094 = vmatpush1.bf16.msra.mxu0 0
        %1095 = vmatprep.subr.bf16.mxu0 0
        %1096 = vmatpush1.bf16.msra.mxu0 0
        %1097 = vmatprep.subr.bf16.mxu0 0
        %1098 = vmatpush1.bf16.msra.mxu0 0
        %1099 = vmatprep.subr.bf16.mxu0 0
        %1100 = vmatpush1.bf16.msra.mxu0 0
        %1101 = vmatprep.subr.bf16.mxu0 0
        %1102 = vmatpush1.bf16.msra.mxu0 0
        %1103 = vmatprep.subr.bf16.mxu0 0
        %1104 = vmatpush1.bf16.msra.mxu0 0
        %1105 = vmatprep.subr.bf16.mxu0 0
        %1106 = vmatpush1.bf16.msra.mxu0 0
        %1107 = vmatprep.subr.bf16.mxu0 0
        %1108 = vmatpush1.bf16.msra.mxu0 0
        %1109 = vmatprep.mubr.bf16.mxu0 0
        %1110 = vmatmul.mubr.bf16.gmra.mrb[0].mxu0 %v1072
        %v1111 = vpop.f32.mrb[0].mxu0
        %v1112 = vadd.f32 %v1066, %v1111
        %v1113 = vpop.f32.mrb[0].mxu0
        %v1114 = vpop.f32.mrb[0].mxu0
        %v1115 = vpop.f32.mrb[0].mxu0
        %1116 = vdwg.mxu0
        %1117 = vrot.lane.b32.xlu0 %v792, 112
        %v1118 = vpop.permute.xlu0 %1117
        %1119 = vrot.lane.b32.xlu0 %v793, 80
        %v1120 = vpop.permute.xlu0 %1119
        %v1122 = vsel %vm801, %v1118, 0
        %v1125 = vsel %vm801, %v1120, 0
        %1127 = vmatprep.subr.bf16.mxu0 0
        %1128 = vmatpush1.bf16.xpose.msra.mxu0 %v1125
        %1129 = vmatprep.subr.bf16.mxu0 0
        %1130 = vmatpush1.bf16.xpose.msra.mxu0 0
        %1131 = vmatprep.subr.bf16.mxu0 0
        %1132 = vmatpush1.bf16.xpose.msra.mxu0 0
        %1133 = vmatprep.subr.bf16.mxu0 0
        %1134 = vmatpush1.bf16.xpose.msra.mxu0 0
        %1135 = vmatprep.subr.bf16.mxu0 0
        %1136 = vmatpush1.bf16.xpose.msra.mxu0 0
        %1137 = vmatprep.subr.bf16.mxu0 0
        %1138 = vmatpush1.bf16.xpose.msra.mxu0 0
        %1139 = vmatprep.subr.bf16.mxu0 0
        %1140 = vmatpush1.bf16.xpose.msra.mxu0 0
        %1141 = vmatprep.subr.bf16.mxu0 0
        %1142 = vmatpush1.bf16.xpose.msra.mxu0 0
        %1143 = vmatprep.subr.bf16.mxu0 0
        %1144 = vmatpush1.bf16.xpose.msra.mxu0 0
        %1145 = vmatprep.subr.bf16.mxu0 0
        %1146 = vmatpush1.bf16.xpose.msra.mxu0 0
        %1147 = vmatprep.subr.bf16.mxu0 0
        %1148 = vmatpush1.bf16.xpose.msra.mxu0 0
        %1149 = vmatprep.subr.bf16.mxu0 0
        %1150 = vmatpush1.bf16.xpose.msra.mxu0 0
        %1151 = vmatprep.subr.bf16.mxu0 0
        %1152 = vmatpush1.bf16.xpose.msra.mxu0 0
        %1153 = vmatprep.subr.bf16.mxu0 0
        %1154 = vmatpush1.bf16.xpose.msra.mxu0 0
        %1155 = vmatprep.subr.bf16.mxu0 0
        %1156 = vmatpush1.bf16.xpose.msra.mxu0 0
        %1157 = vmatprep.subr.bf16.mxu0 0
        %1158 = vmatpush1.bf16.xpose.msra.mxu0 0
        %1159 = vmatprep.mubr.bf16.mxu0 0
        %1160 = vmatmul.mubr.bf16.gmra.mrb[0].mxu0 %v1122
        %v1161 = vpop.f32.mrb[0].mxu0
        %v1162 = vadd.f32 0.0, %v1161
        %v1163 = vpop.f32.mrb[0].mxu0
        %v1164 = vpop.f32.mrb[0].mxu0
        %v1165 = vpop.f32.mrb[0].mxu0
        %1166 = vdwg.mxu0
        %v1167 = vsel %vm848, -1e+30, %v1162
        %v1168 = vsel %vm801, %v1167, -inf
        %1169 = vmax.xlane.f32.xlu0 %v1168
        %v1170 = vpop.xlane.xlu0 %1169
        %v1171 = vsub.f32 %v1167, %v1170
        %v1172 = vmul.f32 %v1171, 1.442695
        %v1173 = vpow.pop %v1172
        %v1174 = vsel %vm801, %v1173, 0.0
        %1175 = vadd.xlane.f32.xlu0 %v1174
        %v1176 = vpop.xlane.xlu0 %1175
        %v1177 = vrcp.pop %v1176
        %v1178 = vmul.f32 %v1173, %v1177
        %v1179 = vpack.c.bf16 %v1178, %v1178
        %1180 = vrot.lane.b32.xlu0 %v793, 48
        %v1181 = vpop.permute.xlu0 %1180
        %v1183 = vsel %vm801, %v1179, 0
        %v1186 = vsel %vm867, %v1181, 0
        %1188 = vmatprep.subr.bf16.mxu0 0
        %1189 = vmatpush1.bf16.msra.mxu0 %v1186
        %1190 = vmatprep.subr.bf16.mxu0 0
        %1191 = vmatpush1.bf16.msra.mxu0 0
        %1192 = vmatprep.subr.bf16.mxu0 0
        %1193 = vmatpush1.bf16.msra.mxu0 0
        %1194 = vmatprep.subr.bf16.mxu0 0
        %1195 = vmatpush1.bf16.msra.mxu0 0
        %1196 = vmatprep.subr.bf16.mxu0 0
        %1197 = vmatpush1.bf16.msra.mxu0 0
        %1198 = vmatprep.subr.bf16.mxu0 0
        %1199 = vmatpush1.bf16.msra.mxu0 0
        %1200 = vmatprep.subr.bf16.mxu0 0
        %1201 = vmatpush1.bf16.msra.mxu0 0
        %1202 = vmatprep.subr.bf16.mxu0 0
        %1203 = vmatpush1.bf16.msra.mxu0 0
        %1204 = vmatprep.subr.bf16.mxu0 0
        %1205 = vmatpush1.bf16.msra.mxu0 0
        %1206 = vmatprep.subr.bf16.mxu0 0
        %1207 = vmatpush1.bf16.msra.mxu0 0
        %1208 = vmatprep.subr.bf16.mxu0 0
        %1209 = vmatpush1.bf16.msra.mxu0 0
        %1210 = vmatprep.subr.bf16.mxu0 0
        %1211 = vmatpush1.bf16.msra.mxu0 0
        %1212 = vmatprep.subr.bf16.mxu0 0
        %1213 = vmatpush1.bf16.msra.mxu0 0
        %1214 = vmatprep.subr.bf16.mxu0 0
        %1215 = vmatpush1.bf16.msra.mxu0 0
        %1216 = vmatprep.subr.bf16.mxu0 0
        %1217 = vmatpush1.bf16.msra.mxu0 0
        %1218 = vmatprep.subr.bf16.mxu0 0
        %1219 = vmatpush1.bf16.msra.mxu0 0
        %1220 = vmatprep.mubr.bf16.mxu0 0
        %1221 = vmatmul.mubr.bf16.gmra.mrb[0].mxu0 %v1183
        %v1222 = vpop.f32.mrb[0].mxu0
        %v1223 = vadd.f32 0.0, %v1222
        %v1224 = vpop.f32.mrb[0].mxu0
        %v1225 = vpop.f32.mrb[0].mxu0
        %v1226 = vpop.f32.mrb[0].mxu0
        %1227 = vdwg.mxu0
        %v1228 = vpack.c.bf16 %v1223, %v1223
        %v1230 = vsel %vm801, %v1228, 0
        %v1233 = vsel %vm867, %v796, 0
        %1235 = vmatprep.subr.bf16.mxu0 0
        %1236 = vmatpush1.bf16.msra.mxu0 %v1233
        %1237 = vmatprep.subr.bf16.mxu0 0
        %1238 = vmatpush1.bf16.msra.mxu0 0
        %1239 = vmatprep.subr.bf16.mxu0 0
        %1240 = vmatpush1.bf16.msra.mxu0 0
        %1241 = vmatprep.subr.bf16.mxu0 0
        %1242 = vmatpush1.bf16.msra.mxu0 0
        %1243 = vmatprep.subr.bf16.mxu0 0
        %1244 = vmatpush1.bf16.msra.mxu0 0
        %1245 = vmatprep.subr.bf16.mxu0 0
        %1246 = vmatpush1.bf16.msra.mxu0 0
        %1247 = vmatprep.subr.bf16.mxu0 0
        %1248 = vmatpush1.bf16.msra.mxu0 0
        %1249 = vmatprep.subr.bf16.mxu0 0
        %1250 = vmatpush1.bf16.msra.mxu0 0
        %1251 = vmatprep.subr.bf16.mxu0 0
        %1252 = vmatpush1.bf16.msra.mxu0 0
        %1253 = vmatprep.subr.bf16.mxu0 0
        %1254 = vmatpush1.bf16.msra.mxu0 0
        %1255 = vmatprep.subr.bf16.mxu0 0
        %1256 = vmatpush1.bf16.msra.mxu0 0
        %1257 = vmatprep.subr.bf16.mxu0 0
        %1258 = vmatpush1.bf16.msra.mxu0 0
        %1259 = vmatprep.subr.bf16.mxu0 0
        %1260 = vmatpush1.bf16.msra.mxu0 0
        %1261 = vmatprep.subr.bf16.mxu0 0
        %1262 = vmatpush1.bf16.msra.mxu0 0
        %1263 = vmatprep.subr.bf16.mxu0 0
        %1264 = vmatpush1.bf16.msra.mxu0 0
        %1265 = vmatprep.subr.bf16.mxu0 0
        %1266 = vmatpush1.bf16.msra.mxu0 0
        %1267 = vmatprep.mubr.bf16.mxu0 0
        %1268 = vmatmul.mubr.bf16.gmra.mrb[0].mxu0 %v1230
        %v1269 = vpop.f32.mrb[0].mxu0
        %v1270 = vadd.f32 0.0, %v1269
        %v1271 = vpop.f32.mrb[0].mxu0
        %v1272 = vpop.f32.mrb[0].mxu0
        %v1273 = vpop.f32.mrb[0].mxu0
        %1274 = vdwg.mxu0
        %v1275 = vadd.f32 %v1112, %v1270
        %1276 = vrot.lane.b32.xlu0 %v792, 104
        %v1277 = vpop.permute.xlu0 %1276
        %1278 = vrot.lane.b32.xlu0 %v793, 72
        %v1279 = vpop.permute.xlu0 %1278
        %v1281 = vsel %vm801, %v1277, 0
        %v1284 = vsel %vm801, %v1279, 0
        %1286 = vmatprep.subr.bf16.mxu0 0
        %1287 = vmatpush1.bf16.xpose.msra.mxu0 %v1284
        %1288 = vmatprep.subr.bf16.mxu0 0
        %1289 = vmatpush1.bf16.xpose.msra.mxu0 0
        %1290 = vmatprep.subr.bf16.mxu0 0
        %1291 = vmatpush1.bf16.xpose.msra.mxu0 0
        %1292 = vmatprep.subr.bf16.mxu0 0
        %1293 = vmatpush1.bf16.xpose.msra.mxu0 0
        %1294 = vmatprep.subr.bf16.mxu0 0
        %1295 = vmatpush1.bf16.xpose.msra.mxu0 0
        %1296 = vmatprep.subr.bf16.mxu0 0
        %1297 = vmatpush1.bf16.xpose.msra.mxu0 0
        %1298 = vmatprep.subr.bf16.mxu0 0
        %1299 = vmatpush1.bf16.xpose.msra.mxu0 0
        %1300 = vmatprep.subr.bf16.mxu0 0
        %1301 = vmatpush1.bf16.xpose.msra.mxu0 0
        %1302 = vmatprep.subr.bf16.mxu0 0
        %1303 = vmatpush1.bf16.xpose.msra.mxu0 0
        %1304 = vmatprep.subr.bf16.mxu0 0
        %1305 = vmatpush1.bf16.xpose.msra.mxu0 0
        %1306 = vmatprep.subr.bf16.mxu0 0
        %1307 = vmatpush1.bf16.xpose.msra.mxu0 0
        %1308 = vmatprep.subr.bf16.mxu0 0
        %1309 = vmatpush1.bf16.xpose.msra.mxu0 0
        %1310 = vmatprep.subr.bf16.mxu0 0
        %1311 = vmatpush1.bf16.xpose.msra.mxu0 0
        %1312 = vmatprep.subr.bf16.mxu0 0
        %1313 = vmatpush1.bf16.xpose.msra.mxu0 0
        %1314 = vmatprep.subr.bf16.mxu0 0
        %1315 = vmatpush1.bf16.xpose.msra.mxu0 0
        %1316 = vmatprep.subr.bf16.mxu0 0
        %1317 = vmatpush1.bf16.xpose.msra.mxu0 0
        %1318 = vmatprep.mubr.bf16.mxu0 0
        %1319 = vmatmul.mubr.bf16.gmra.mrb[0].mxu0 %v1281
        %v1320 = vpop.f32.mrb[0].mxu0
        %v1321 = vadd.f32 0.0, %v1320
        %v1322 = vpop.f32.mrb[0].mxu0
        %v1323 = vpop.f32.mrb[0].mxu0
        %v1324 = vpop.f32.mrb[0].mxu0
        %1325 = vdwg.mxu0
        %v1326 = vsel %vm848, -1e+30, %v1321
        %v1327 = vsel %vm801, %v1326, -inf
        %1328 = vmax.xlane.f32.xlu0 %v1327
        %v1329 = vpop.xlane.xlu0 %1328
        %v1330 = vsub.f32 %v1326, %v1329
        %v1331 = vmul.f32 %v1330, 1.442695
        %v1332 = vpow.pop %v1331
        %v1333 = vsel %vm801, %v1332, 0.0
        %1334 = vadd.xlane.f32.xlu0 %v1333
        %v1335 = vpop.xlane.xlu0 %1334
        %v1336 = vrcp.pop %v1335
        %v1337 = vmul.f32 %v1332, %v1336
        %v1338 = vpack.c.bf16 %v1337, %v1337
        %1339 = vrot.lane.b32.xlu0 %v793, 40
        %v1340 = vpop.permute.xlu0 %1339
        %v1342 = vsel %vm801, %v1338, 0
        %v1345 = vsel %vm867, %v1340, 0
        %1347 = vmatprep.subr.bf16.mxu0 0
        %1348 = vmatpush1.bf16.msra.mxu0 %v1345
        %1349 = vmatprep.subr.bf16.mxu0 0
        %1350 = vmatpush1.bf16.msra.mxu0 0
        %1351 = vmatprep.subr.bf16.mxu0 0
        %1352 = vmatpush1.bf16.msra.mxu0 0
        %1353 = vmatprep.subr.bf16.mxu0 0
        %1354 = vmatpush1.bf16.msra.mxu0 0
        %1355 = vmatprep.subr.bf16.mxu0 0
        %1356 = vmatpush1.bf16.msra.mxu0 0
        %1357 = vmatprep.subr.bf16.mxu0 0
        %1358 = vmatpush1.bf16.msra.mxu0 0
        %1359 = vmatprep.subr.bf16.mxu0 0
        %1360 = vmatpush1.bf16.msra.mxu0 0
        %1361 = vmatprep.subr.bf16.mxu0 0
        %1362 = vmatpush1.bf16.msra.mxu0 0
        %1363 = vmatprep.subr.bf16.mxu0 0
        %1364 = vmatpush1.bf16.msra.mxu0 0
        %1365 = vmatprep.subr.bf16.mxu0 0
        %1366 = vmatpush1.bf16.msra.mxu0 0
        %1367 = vmatprep.subr.bf16.mxu0 0
        %1368 = vmatpush1.bf16.msra.mxu0 0
        %1369 = vmatprep.subr.bf16.mxu0 0
        %1370 = vmatpush1.bf16.msra.mxu0 0
        %1371 = vmatprep.subr.bf16.mxu0 0
        %1372 = vmatpush1.bf16.msra.mxu0 0
        %1373 = vmatprep.subr.bf16.mxu0 0
        %1374 = vmatpush1.bf16.msra.mxu0 0
        %1375 = vmatprep.subr.bf16.mxu0 0
        %1376 = vmatpush1.bf16.msra.mxu0 0
        %1377 = vmatprep.subr.bf16.mxu0 0
        %1378 = vmatpush1.bf16.msra.mxu0 0
        %1379 = vmatprep.mubr.bf16.mxu0 0
        %1380 = vmatmul.mubr.bf16.gmra.mrb[0].mxu0 %v1342
        %v1381 = vpop.f32.mrb[0].mxu0
        %v1382 = vadd.f32 0.0, %v1381
        %v1383 = vpop.f32.mrb[0].mxu0
        %v1384 = vpop.f32.mrb[0].mxu0
        %v1385 = vpop.f32.mrb[0].mxu0
        %1386 = vdwg.mxu0
        %v1387 = vpack.c.bf16 %v1382, %v1382
        %v1389 = vsel %vm801, %v1387, 0
        %v1392 = vsel %vm867, %v797, 0
        %1394 = vmatprep.subr.bf16.mxu0 0
        %1395 = vmatpush1.bf16.msra.mxu0 %v1392
        %1396 = vmatprep.subr.bf16.mxu0 0
        %1397 = vmatpush1.bf16.msra.mxu0 0
        %1398 = vmatprep.subr.bf16.mxu0 0
        %1399 = vmatpush1.bf16.msra.mxu0 0
        %1400 = vmatprep.subr.bf16.mxu0 0
        %1401 = vmatpush1.bf16.msra.mxu0 0
        %1402 = vmatprep.subr.bf16.mxu0 0
        %1403 = vmatpush1.bf16.msra.mxu0 0
        %1404 = vmatprep.subr.bf16.mxu0 0
        %1405 = vmatpush1.bf16.msra.mxu0 0
        %1406 = vmatprep.subr.bf16.mxu0 0
        %1407 = vmatpush1.bf16.msra.mxu0 0
        %1408 = vmatprep.subr.bf16.mxu0 0
        %1409 = vmatpush1.bf16.msra.mxu0 0
        %1410 = vmatprep.subr.bf16.mxu0 0
        %1411 = vmatpush1.bf16.msra.mxu0 0
        %1412 = vmatprep.subr.bf16.mxu0 0
        %1413 = vmatpush1.bf16.msra.mxu0 0
        %1414 = vmatprep.subr.bf16.mxu0 0
        %1415 = vmatpush1.bf16.msra.mxu0 0
        %1416 = vmatprep.subr.bf16.mxu0 0
        %1417 = vmatpush1.bf16.msra.mxu0 0
        %1418 = vmatprep.subr.bf16.mxu0 0
        %1419 = vmatpush1.bf16.msra.mxu0 0
        %1420 = vmatprep.subr.bf16.mxu0 0
        %1421 = vmatpush1.bf16.msra.mxu0 0
        %1422 = vmatprep.subr.bf16.mxu0 0
        %1423 = vmatpush1.bf16.msra.mxu0 0
        %1424 = vmatprep.subr.bf16.mxu0 0
        %1425 = vmatpush1.bf16.msra.mxu0 0
        %1426 = vmatprep.mubr.bf16.mxu0 0
        %1427 = vmatmul.mubr.bf16.gmra.mrb[0].mxu0 %v1389
        %v1428 = vpop.f32.mrb[0].mxu0
        %v1429 = vadd.f32 0.0, %v1428
        %v1430 = vpop.f32.mrb[0].mxu0
        %v1431 = vpop.f32.mrb[0].mxu0
        %v1432 = vpop.f32.mrb[0].mxu0
        %1433 = vdwg.mxu0
        %v1434 = vadd.f32 %v1275, %v1429
        %v1435 = vld [vmem:[%s6] sm:$0x1]
        %v1437 = vlaneseq
        %v1438 = vshrl.u32 %v1437, 7
        %v1439 = vsub.s32 0, %v1438
        %v1440 = vrot.slane %v1435, %v1439
        %v1442 = vadd.f32 %v1434, %v1440
        %v1443 = vadd.f32 %v720, %v1442
        %v1444 = vld [vmem:[%s15] sm:$0x1]
        %v1445 = vld [vmem:[%s16] sm:$0x1]
        %v1446 = vsel %vm747, %v1443, 0.0
        %1447 = vadd.xlane.f32.xlu0 %v1446
        %v1448 = vpop.xlane.xlu0 %1447
        %v1449 = vrcp.pop 32.0
        %v1450 = vmul.f32 %v1448, %v1449
        %v1451 = vsub.f32 %v1443, %v1450
        %v1452 = vmul.f32 %v1451, %v1451
        %v1453 = vsel %vm747, %v1452, 0.0
        %1454 = vadd.xlane.f32.xlu0 %v1453
        %v1455 = vpop.xlane.xlu0 %1454
        %v1456 = vmul.f32 %v1455, 0.032258064
        %v1457 = vrsqrt.pop %v1456
        %v1458 = vmul.f32 %v1456, %v1457
        %vm1459 = vcmp.eq.f32.partialorder %v1456, inf
        %v1460 = vsel %vm1459, %v1456, %v1458
        %vm1461 = vcmp.eq.f32.partialorder %v1456, 0.0
        %v1462 = vand.u32 %v1456, 2147483648
        %v1463 = vsel %vm1461, %v1462, %v1460
        %v1464 = vadd.f32 %v1463, 1e-06
        %v1465 = vrcp.pop %v1464
        %v1467 = vlaneseq
        %v1468 = vshrl.u32 %v1467, 7
        %v1469 = vsub.s32 0, %v1468
        %v1470 = vrot.slane %v1444, %v1469
        %v1472 = vmul.f32 %v1470, %v1451
        %v1473 = vmul.f32 %v1472, %v1465
        %v1475 = vlaneseq
        %v1476 = vshrl.u32 %v1475, 7
        %v1477 = vsub.s32 0, %v1476
        %v1478 = vrot.slane %v1445, %v1477
        %v1480 = vadd.f32 %v1473, %v1478
        %v1481 = vpack.c.bf16 %v1480, %v1480
        %v1482 = vld [vmem:[#allocation7] sm:$0xf]
        %v1483 = vld [vmem:[#allocation7 + $0x4] sm:$0xf]
        %v1484 = vld [vmem:[#allocation7 + $0x8] sm:$0xf]
        %v1485 = vld [vmem:[#allocation7 + $0xc] sm:$0xf]
        %v1486 = vld [vmem:[#allocation8] sm:$0x1]
        %v1488 = vlaneseq
        %v1489 = vshrl.u32 %v1488, 7
        %v1490 = vsub.s32 0, %v1489
        %v1491 = vrot.slane %v1486, %v1490
        %v1497 = vunpack.c.l.b16 %v1482
        %v1498 = vunpack.c.l.b16 %v1483
        %v1499 = vunpack.c.l.b16 %v1484
        %v1500 = vunpack.c.l.b16 %v1485
        %v1501 = vpack.c.b16 %v1498, %v1497
        %v1502 = vpack.c.b16 %v1500, %v1499
        %v1506 = vsel %vm747, %v1481, 0
        %1508 = vmatprep.subr.bf16.mxu0 0
        %1509 = vmatpush1.bf16.msra.mxu0 %v1501
        %1510 = vmatprep.subr.bf16.mxu0 0
        %1511 = vmatpush1.bf16.msra.mxu0 %v1502
        %1512 = vmatprep.subr.bf16.mxu0 0
        %1513 = vmatpush1.bf16.msra.mxu0 0
        %1514 = vmatprep.subr.bf16.mxu0 0
        %1515 = vmatpush1.bf16.msra.mxu0 0
        %1516 = vmatprep.subr.bf16.mxu0 0
        %1517 = vmatpush1.bf16.msra.mxu0 0
        %1518 = vmatprep.subr.bf16.mxu0 0
        %1519 = vmatpush1.bf16.msra.mxu0 0
        %1520 = vmatprep.subr.bf16.mxu0 0
        %1521 = vmatpush1.bf16.msra.mxu0 0
        %1522 = vmatprep.subr.bf16.mxu0 0
        %1523 = vmatpush1.bf16.msra.mxu0 0
        %1524 = vmatprep.subr.bf16.mxu0 0
        %1525 = vmatpush1.bf16.msra.mxu0 0
        %1526 = vmatprep.subr.bf16.mxu0 0
        %1527 = vmatpush1.bf16.msra.mxu0 0
        %1528 = vmatprep.subr.bf16.mxu0 0
        %1529 = vmatpush1.bf16.msra.mxu0 0
        %1530 = vmatprep.subr.bf16.mxu0 0
        %1531 = vmatpush1.bf16.msra.mxu0 0
        %1532 = vmatprep.subr.bf16.mxu0 0
        %1533 = vmatpush1.bf16.msra.mxu0 0
        %1534 = vmatprep.subr.bf16.mxu0 0
        %1535 = vmatpush1.bf16.msra.mxu0 0
        %1536 = vmatprep.subr.bf16.mxu0 0
        %1537 = vmatpush1.bf16.msra.mxu0 0
        %1538 = vmatprep.subr.bf16.mxu0 0
        %1539 = vmatpush1.bf16.msra.mxu0 0
        %1540 = vmatprep.mubr.bf16.mxu0 0
        %1541 = vmatmul.mubr.bf16.gmra.mrb[0].mxu0 %v1506
        %v1542 = vpop.f32.mrb[0].mxu0
        %v1543 = vadd.f32 %v1491, %v1542
        %v1544 = vpop.f32.mrb[0].mxu0
        %v1545 = vpop.f32.mrb[0].mxu0
        %v1546 = vpop.f32.mrb[0].mxu0
        %1547 = vdwg.mxu0
        %v1548 = vmul.f32 %v1543, 0.35355338
        %v1549 = vpack.c.bf16 %v1548, %v1548
        %v1550 = vpack.c.bf16 %v1543, %v1543
        %v1551 = vld [vmem:[%s9] sm:$0xf]
        %v1552 = vld [vmem:[%s9 + $0x4] sm:$0xf]
        %v1553 = vld [vmem:[%s9 + $0x8] sm:$0xf]
        %v1554 = vld [vmem:[%s9 + $0xc] sm:$0xf]
        %1556 = vrot.lane.b32.xlu0 %v1550, 96
        %v1557 = vpop.permute.xlu0 %1556
        %v1559 = vsel %vm801, %v1549, 0
        %v1562 = vsel %vm801, %v1557, 0
        %1564 = vmatprep.subr.bf16.mxu0 0
        %1565 = vmatpush1.bf16.xpose.msra.mxu0 %v1562
        %1566 = vmatprep.subr.bf16.mxu0 0
        %1567 = vmatpush1.bf16.xpose.msra.mxu0 0
        %1568 = vmatprep.subr.bf16.mxu0 0
        %1569 = vmatpush1.bf16.xpose.msra.mxu0 0
        %1570 = vmatprep.subr.bf16.mxu0 0
        %1571 = vmatpush1.bf16.xpose.msra.mxu0 0
        %1572 = vmatprep.subr.bf16.mxu0 0
        %1573 = vmatpush1.bf16.xpose.msra.mxu0 0
        %1574 = vmatprep.subr.bf16.mxu0 0
        %1575 = vmatpush1.bf16.xpose.msra.mxu0 0
        %1576 = vmatprep.subr.bf16.mxu0 0
        %1577 = vmatpush1.bf16.xpose.msra.mxu0 0
        %1578 = vmatprep.subr.bf16.mxu0 0
        %1579 = vmatpush1.bf16.xpose.msra.mxu0 0
        %1580 = vmatprep.subr.bf16.mxu0 0
        %1581 = vmatpush1.bf16.xpose.msra.mxu0 0
        %1582 = vmatprep.subr.bf16.mxu0 0
        %1583 = vmatpush1.bf16.xpose.msra.mxu0 0
        %1584 = vmatprep.subr.bf16.mxu0 0
        %1585 = vmatpush1.bf16.xpose.msra.mxu0 0
        %1586 = vmatprep.subr.bf16.mxu0 0
        %1587 = vmatpush1.bf16.xpose.msra.mxu0 0
        %1588 = vmatprep.subr.bf16.mxu0 0
        %1589 = vmatpush1.bf16.xpose.msra.mxu0 0
        %1590 = vmatprep.subr.bf16.mxu0 0
        %1591 = vmatpush1.bf16.xpose.msra.mxu0 0
        %1592 = vmatprep.subr.bf16.mxu0 0
        %1593 = vmatpush1.bf16.xpose.msra.mxu0 0
        %1594 = vmatprep.subr.bf16.mxu0 0
        %1595 = vmatpush1.bf16.xpose.msra.mxu0 0
        %1596 = vmatprep.mubr.bf16.mxu0 0
        %1597 = vmatmul.mubr.bf16.gmra.mrb[0].mxu0 %v1559
        %v1598 = vpop.f32.mrb[0].mxu0
        %v1599 = vadd.f32 0.0, %v1598
        %v1600 = vpop.f32.mrb[0].mxu0
        %v1601 = vpop.f32.mrb[0].mxu0
        %v1602 = vpop.f32.mrb[0].mxu0
        %1603 = vdwg.mxu0
        %vm1604 = vcmp.eq.f32.partialorder %v722, 0.0
        %v1605 = vsel %vm1604, -1e+30, %v1599
        %v1606 = vsel %vm801, %v1605, -inf
        %1607 = vmax.xlane.f32.xlu0 %v1606
        %v1608 = vpop.xlane.xlu0 %1607
        %v1609 = vsub.f32 %v1605, %v1608
        %v1610 = vmul.f32 %v1609, 1.442695
        %v1611 = vpow.pop %v1610
        %v1612 = vsel %vm801, %v1611, 0.0
        %1613 = vadd.xlane.f32.xlu0 %v1612
        %v1614 = vpop.xlane.xlu0 %1613
        %v1615 = vrcp.pop %v1614
        %v1616 = vmul.f32 %v1611, %v1615
        %v1617 = vpack.c.bf16 %v1616, %v1616
        %1618 = vrot.lane.b32.xlu0 %v1550, 64
        %v1619 = vpop.permute.xlu0 %1618
        %v1621 = vsel %vm801, %v1617, 0
        %v1624 = vsel %vm867, %v1619, 0
        %1626 = vmatprep.subr.bf16.mxu0 0
        %1627 = vmatpush1.bf16.msra.mxu0 %v1624
        %1628 = vmatprep.subr.bf16.mxu0 0
        %1629 = vmatpush1.bf16.msra.mxu0 0
        %1630 = vmatprep.subr.bf16.mxu0 0
        %1631 = vmatpush1.bf16.msra.mxu0 0
        %1632 = vmatprep.subr.bf16.mxu0 0
        %1633 = vmatpush1.bf16.msra.mxu0 0
        %1634 = vmatprep.subr.bf16.mxu0 0
        %1635 = vmatpush1.bf16.msra.mxu0 0
        %1636 = vmatprep.subr.bf16.mxu0 0
        %1637 = vmatpush1.bf16.msra.mxu0 0
        %1638 = vmatprep.subr.bf16.mxu0 0
        %1639 = vmatpush1.bf16.msra.mxu0 0
        %1640 = vmatprep.subr.bf16.mxu0 0
        %1641 = vmatpush1.bf16.msra.mxu0 0
        %1642 = vmatprep.subr.bf16.mxu0 0
        %1643 = vmatpush1.bf16.msra.mxu0 0
        %1644 = vmatprep.subr.bf16.mxu0 0
        %1645 = vmatpush1.bf16.msra.mxu0 0
        %1646 = vmatprep.subr.bf16.mxu0 0
        %1647 = vmatpush1.bf16.msra.mxu0 0
        %1648 = vmatprep.subr.bf16.mxu0 0
        %1649 = vmatpush1.bf16.msra.mxu0 0
        %1650 = vmatprep.subr.bf16.mxu0 0
        %1651 = vmatpush1.bf16.msra.mxu0 0
        %1652 = vmatprep.subr.bf16.mxu0 0
        %1653 = vmatpush1.bf16.msra.mxu0 0
        %1654 = vmatprep.subr.bf16.mxu0 0
        %1655 = vmatpush1.bf16.msra.mxu0 0
        %1656 = vmatprep.subr.bf16.mxu0 0
        %1657 = vmatpush1.bf16.msra.mxu0 0
        %1658 = vmatprep.mubr.bf16.mxu0 0
        %1659 = vmatmul.mubr.bf16.gmra.mrb[0].mxu0 %v1621
        %v1660 = vpop.f32.mrb[0].mxu0
        %v1661 = vadd.f32 0.0, %v1660
        %v1662 = vpop.f32.mrb[0].mxu0
        %v1663 = vpop.f32.mrb[0].mxu0
        %v1664 = vpop.f32.mrb[0].mxu0
        %1665 = vdwg.mxu0
        %v1666 = vpack.c.bf16 %v1661, %v1661
        %1668 = vrot.lane.b32.xlu0 %v1549, 120
        %v1669 = vpop.permute.xlu0 %1668
        %1670 = vrot.lane.b32.xlu0 %v1550, 88
        %v1671 = vpop.permute.xlu0 %1670
        %v1673 = vsel %vm801, %v1669, 0
        %v1676 = vsel %vm801, %v1671, 0
        %1678 = vmatprep.subr.bf16.mxu0 0
        %1679 = vmatpush1.bf16.xpose.msra.mxu0 %v1676
        %1680 = vmatprep.subr.bf16.mxu0 0
        %1681 = vmatpush1.bf16.xpose.msra.mxu0 0
        %1682 = vmatprep.subr.bf16.mxu0 0
        %1683 = vmatpush1.bf16.xpose.msra.mxu0 0
        %1684 = vmatprep.subr.bf16.mxu0 0
        %1685 = vmatpush1.bf16.xpose.msra.mxu0 0
        %1686 = vmatprep.subr.bf16.mxu0 0
        %1687 = vmatpush1.bf16.xpose.msra.mxu0 0
        %1688 = vmatprep.subr.bf16.mxu0 0
        %1689 = vmatpush1.bf16.xpose.msra.mxu0 0
        %1690 = vmatprep.subr.bf16.mxu0 0
        %1691 = vmatpush1.bf16.xpose.msra.mxu0 0
        %1692 = vmatprep.subr.bf16.mxu0 0
        %1693 = vmatpush1.bf16.xpose.msra.mxu0 0
        %1694 = vmatprep.subr.bf16.mxu0 0
        %1695 = vmatpush1.bf16.xpose.msra.mxu0 0
        %1696 = vmatprep.subr.bf16.mxu0 0
        %1697 = vmatpush1.bf16.xpose.msra.mxu0 0
        %1698 = vmatprep.subr.bf16.mxu0 0
        %1699 = vmatpush1.bf16.xpose.msra.mxu0 0
        %1700 = vmatprep.subr.bf16.mxu0 0
        %1701 = vmatpush1.bf16.xpose.msra.mxu0 0
        %1702 = vmatprep.subr.bf16.mxu0 0
        %1703 = vmatpush1.bf16.xpose.msra.mxu0 0
        %1704 = vmatprep.subr.bf16.mxu0 0
        %1705 = vmatpush1.bf16.xpose.msra.mxu0 0
        %1706 = vmatprep.subr.bf16.mxu0 0
        %1707 = vmatpush1.bf16.xpose.msra.mxu0 0
        %1708 = vmatprep.subr.bf16.mxu0 0
        %1709 = vmatpush1.bf16.xpose.msra.mxu0 0
        %1710 = vmatprep.mubr.bf16.mxu0 0
        %1711 = vmatmul.mubr.bf16.gmra.mrb[0].mxu0 %v1673
        %v1712 = vpop.f32.mrb[0].mxu0
        %v1713 = vadd.f32 0.0, %v1712
        %v1714 = vpop.f32.mrb[0].mxu0
        %v1715 = vpop.f32.mrb[0].mxu0
        %v1716 = vpop.f32.mrb[0].mxu0
        %1717 = vdwg.mxu0
        %v1718 = vsel %vm1604, -1e+30, %v1713
        %v1719 = vsel %vm801, %v1718, -inf
        %1720 = vmax.xlane.f32.xlu0 %v1719
        %v1721 = vpop.xlane.xlu0 %1720
        %v1722 = vsub.f32 %v1718, %v1721
        %v1723 = vmul.f32 %v1722, 1.442695
        %v1724 = vpow.pop %v1723
        %v1725 = vsel %vm801, %v1724, 0.0
        %1726 = vadd.xlane.f32.xlu0 %v1725
        %v1727 = vpop.xlane.xlu0 %1726
        %v1728 = vrcp.pop %v1727
        %v1729 = vmul.f32 %v1724, %v1728
        %v1730 = vpack.c.bf16 %v1729, %v1729
        %1731 = vrot.lane.b32.xlu0 %v1550, 56
        %v1732 = vpop.permute.xlu0 %1731
        %v1734 = vsel %vm801, %v1730, 0
        %v1737 = vsel %vm867, %v1732, 0
        %1739 = vmatprep.subr.bf16.mxu0 0
        %1740 = vmatpush1.bf16.msra.mxu0 %v1737
        %1741 = vmatprep.subr.bf16.mxu0 0
        %1742 = vmatpush1.bf16.msra.mxu0 0
        %1743 = vmatprep.subr.bf16.mxu0 0
        %1744 = vmatpush1.bf16.msra.mxu0 0
        %1745 = vmatprep.subr.bf16.mxu0 0
        %1746 = vmatpush1.bf16.msra.mxu0 0
        %1747 = vmatprep.subr.bf16.mxu0 0
        %1748 = vmatpush1.bf16.msra.mxu0 0
        %1749 = vmatprep.subr.bf16.mxu0 0
        %1750 = vmatpush1.bf16.msra.mxu0 0
        %1751 = vmatprep.subr.bf16.mxu0 0
        %1752 = vmatpush1.bf16.msra.mxu0 0
        %1753 = vmatprep.subr.bf16.mxu0 0
        %1754 = vmatpush1.bf16.msra.mxu0 0
        %1755 = vmatprep.subr.bf16.mxu0 0
        %1756 = vmatpush1.bf16.msra.mxu0 0
        %1757 = vmatprep.subr.bf16.mxu0 0
        %1758 = vmatpush1.bf16.msra.mxu0 0
        %1759 = vmatprep.subr.bf16.mxu0 0
        %1760 = vmatpush1.bf16.msra.mxu0 0
        %1761 = vmatprep.subr.bf16.mxu0 0
        %1762 = vmatpush1.bf16.msra.mxu0 0
        %1763 = vmatprep.subr.bf16.mxu0 0
        %1764 = vmatpush1.bf16.msra.mxu0 0
        %1765 = vmatprep.subr.bf16.mxu0 0
        %1766 = vmatpush1.bf16.msra.mxu0 0
        %1767 = vmatprep.subr.bf16.mxu0 0
        %1768 = vmatpush1.bf16.msra.mxu0 0
        %1769 = vmatprep.subr.bf16.mxu0 0
        %1770 = vmatpush1.bf16.msra.mxu0 0
        %1771 = vmatprep.mubr.bf16.mxu0 0
        %1772 = vmatmul.mubr.bf16.gmra.mrb[0].mxu0 %v1734
        %v1773 = vpop.f32.mrb[0].mxu0
        %v1774 = vadd.f32 0.0, %v1773
        %v1775 = vpop.f32.mrb[0].mxu0
        %v1776 = vpop.f32.mrb[0].mxu0
        %v1777 = vpop.f32.mrb[0].mxu0
        %1778 = vdwg.mxu0
        %v1779 = vpack.c.bf16 %v1774, %v1774
        %v1781 = vsel %vm801, %v1779, 0
        %v1784 = vsel %vm867, %v1552, 0
        %1786 = vmatprep.subr.bf16.mxu0 0
        %1787 = vmatpush1.bf16.msra.mxu0 %v1784
        %1788 = vmatprep.subr.bf16.mxu0 0
        %1789 = vmatpush1.bf16.msra.mxu0 0
        %1790 = vmatprep.subr.bf16.mxu0 0
        %1791 = vmatpush1.bf16.msra.mxu0 0
        %1792 = vmatprep.subr.bf16.mxu0 0
        %1793 = vmatpush1.bf16.msra.mxu0 0
        %1794 = vmatprep.subr.bf16.mxu0 0
        %1795 = vmatpush1.bf16.msra.mxu0 0
        %1796 = vmatprep.subr.bf16.mxu0 0
        %1797 = vmatpush1.bf16.msra.mxu0 0
        %1798 = vmatprep.subr.bf16.mxu0 0
        %1799 = vmatpush1.bf16.msra.mxu0 0
        %1800 = vmatprep.subr.bf16.mxu0 0
        %1801 = vmatpush1.bf16.msra.mxu0 0
        %1802 = vmatprep.subr.bf16.mxu0 0
        %1803 = vmatpush1.bf16.msra.mxu0 0
        %1804 = vmatprep.subr.bf16.mxu0 0
        %1805 = vmatpush1.bf16.msra.mxu0 0
        %1806 = vmatprep.subr.bf16.mxu0 0
        %1807 = vmatpush1.bf16.msra.mxu0 0
        %1808 = vmatprep.subr.bf16.mxu0 0
        %1809 = vmatpush1.bf16.msra.mxu0 0
        %1810 = vmatprep.subr.bf16.mxu0 0
        %1811 = vmatpush1.bf16.msra.mxu0 0
        %1812 = vmatprep.subr.bf16.mxu0 0
        %1813 = vmatpush1.bf16.msra.mxu0 0
        %1814 = vmatprep.subr.bf16.mxu0 0
        %1815 = vmatpush1.bf16.msra.mxu0 0
        %1816 = vmatprep.subr.bf16.mxu0 0
        %1817 = vmatpush1.bf16.msra.mxu0 0
        %1818 = vmatprep.mubr.bf16.mxu0 0
        %1819 = vmatmul.mubr.bf16.gmra.mrb[0].mxu0 %v1781
        %v1820 = vpop.f32.mrb[0].mxu0
        %v1821 = vadd.f32 0.0, %v1820
        %v1822 = vpop.f32.mrb[0].mxu0
        %v1823 = vpop.f32.mrb[0].mxu0
        %v1824 = vpop.f32.mrb[0].mxu0
        %1825 = vdwg.mxu0
        %v1827 = vsel %vm801, %v1666, 0
        %v1830 = vsel %vm867, %v1551, 0
        %1832 = vmatprep.subr.bf16.mxu0 0
        %1833 = vmatpush1.bf16.msra.mxu0 %v1830
        %1834 = vmatprep.subr.bf16.mxu0 0
        %1835 = vmatpush1.bf16.msra.mxu0 0
        %1836 = vmatprep.subr.bf16.mxu0 0
        %1837 = vmatpush1.bf16.msra.mxu0 0
        %1838 = vmatprep.subr.bf16.mxu0 0
        %1839 = vmatpush1.bf16.msra.mxu0 0
        %1840 = vmatprep.subr.bf16.mxu0 0
        %1841 = vmatpush1.bf16.msra.mxu0 0
        %1842 = vmatprep.subr.bf16.mxu0 0
        %1843 = vmatpush1.bf16.msra.mxu0 0
        %1844 = vmatprep.subr.bf16.mxu0 0
        %1845 = vmatpush1.bf16.msra.mxu0 0
        %1846 = vmatprep.subr.bf16.mxu0 0
        %1847 = vmatpush1.bf16.msra.mxu0 0
        %1848 = vmatprep.subr.bf16.mxu0 0
        %1849 = vmatpush1.bf16.msra.mxu0 0
        %1850 = vmatprep.subr.bf16.mxu0 0
        %1851 = vmatpush1.bf16.msra.mxu0 0
        %1852 = vmatprep.subr.bf16.mxu0 0
        %1853 = vmatpush1.bf16.msra.mxu0 0
        %1854 = vmatprep.subr.bf16.mxu0 0
        %1855 = vmatpush1.bf16.msra.mxu0 0
        %1856 = vmatprep.subr.bf16.mxu0 0
        %1857 = vmatpush1.bf16.msra.mxu0 0
        %1858 = vmatprep.subr.bf16.mxu0 0
        %1859 = vmatpush1.bf16.msra.mxu0 0
        %1860 = vmatprep.subr.bf16.mxu0 0
        %1861 = vmatpush1.bf16.msra.mxu0 0
        %1862 = vmatprep.subr.bf16.mxu0 0
        %1863 = vmatpush1.bf16.msra.mxu0 0
        %1864 = vmatprep.mubr.bf16.mxu0 0
        %1865 = vmatmul.mubr.bf16.gmra.mrb[0].mxu0 %v1827
        %v1866 = vpop.f32.mrb[0].mxu0
        %v1867 = vadd.f32 %v1821, %v1866
        %v1868 = vpop.f32.mrb[0].mxu0
        %v1869 = vpop.f32.mrb[0].mxu0
        %v1870 = vpop.f32.mrb[0].mxu0
        %1871 = vdwg.mxu0
        %1872 = vrot.lane.b32.xlu0 %v1549, 112
        %v1873 = vpop.permute.xlu0 %1872
        %1874 = vrot.lane.b32.xlu0 %v1550, 80
        %v1875 = vpop.permute.xlu0 %1874
        %v1877 = vsel %vm801, %v1873, 0
        %v1880 = vsel %vm801, %v1875, 0
        %1882 = vmatprep.subr.bf16.mxu0 0
        %1883 = vmatpush1.bf16.xpose.msra.mxu0 %v1880
        %1884 = vmatprep.subr.bf16.mxu0 0
        %1885 = vmatpush1.bf16.xpose.msra.mxu0 0
        %1886 = vmatprep.subr.bf16.mxu0 0
        %1887 = vmatpush1.bf16.xpose.msra.mxu0 0
        %1888 = vmatprep.subr.bf16.mxu0 0
        %1889 = vmatpush1.bf16.xpose.msra.mxu0 0
        %1890 = vmatprep.subr.bf16.mxu0 0
        %1891 = vmatpush1.bf16.xpose.msra.mxu0 0
        %1892 = vmatprep.subr.bf16.mxu0 0
        %1893 = vmatpush1.bf16.xpose.msra.mxu0 0
        %1894 = vmatprep.subr.bf16.mxu0 0
        %1895 = vmatpush1.bf16.xpose.msra.mxu0 0
        %1896 = vmatprep.subr.bf16.mxu0 0
        %1897 = vmatpush1.bf16.xpose.msra.mxu0 0
        %1898 = vmatprep.subr.bf16.mxu0 0
        %1899 = vmatpush1.bf16.xpose.msra.mxu0 0
        %1900 = vmatprep.subr.bf16.mxu0 0
        %1901 = vmatpush1.bf16.xpose.msra.mxu0 0
        %1902 = vmatprep.subr.bf16.mxu0 0
        %1903 = vmatpush1.bf16.xpose.msra.mxu0 0
        %1904 = vmatprep.subr.bf16.mxu0 0
        %1905 = vmatpush1.bf16.xpose.msra.mxu0 0
        %1906 = vmatprep.subr.bf16.mxu0 0
        %1907 = vmatpush1.bf16.xpose.msra.mxu0 0
        %1908 = vmatprep.subr.bf16.mxu0 0
        %1909 = vmatpush1.bf16.xpose.msra.mxu0 0
        %1910 = vmatprep.subr.bf16.mxu0 0
        %1911 = vmatpush1.bf16.xpose.msra.mxu0 0
        %1912 = vmatprep.subr.bf16.mxu0 0
        %1913 = vmatpush1.bf16.xpose.msra.mxu0 0
        %1914 = vmatprep.mubr.bf16.mxu0 0
        %1915 = vmatmul.mubr.bf16.gmra.mrb[0].mxu0 %v1877
        %v1916 = vpop.f32.mrb[0].mxu0
        %v1917 = vadd.f32 0.0, %v1916
        %v1918 = vpop.f32.mrb[0].mxu0
        %v1919 = vpop.f32.mrb[0].mxu0
        %v1920 = vpop.f32.mrb[0].mxu0
        %1921 = vdwg.mxu0
        %v1922 = vsel %vm1604, -1e+30, %v1917
        %v1923 = vsel %vm801, %v1922, -inf
        %1924 = vmax.xlane.f32.xlu0 %v1923
        %v1925 = vpop.xlane.xlu0 %1924
        %v1926 = vsub.f32 %v1922, %v1925
        %v1927 = vmul.f32 %v1926, 1.442695
        %v1928 = vpow.pop %v1927
        %v1929 = vsel %vm801, %v1928, 0.0
        %1930 = vadd.xlane.f32.xlu0 %v1929
        %v1931 = vpop.xlane.xlu0 %1930
        %v1932 = vrcp.pop %v1931
        %v1933 = vmul.f32 %v1928, %v1932
        %v1934 = vpack.c.bf16 %v1933, %v1933
        %1935 = vrot.lane.b32.xlu0 %v1550, 48
        %v1936 = vpop.permute.xlu0 %1935
        %v1938 = vsel %vm801, %v1934, 0
        %v1941 = vsel %vm867, %v1936, 0
        %1943 = vmatprep.subr.bf16.mxu0 0
        %1944 = vmatpush1.bf16.msra.mxu0 %v1941
        %1945 = vmatprep.subr.bf16.mxu0 0
        %1946 = vmatpush1.bf16.msra.mxu0 0
        %1947 = vmatprep.subr.bf16.mxu0 0
        %1948 = vmatpush1.bf16.msra.mxu0 0
        %1949 = vmatprep.subr.bf16.mxu0 0
        %1950 = vmatpush1.bf16.msra.mxu0 0
        %1951 = vmatprep.subr.bf16.mxu0 0
        %1952 = vmatpush1.bf16.msra.mxu0 0
        %1953 = vmatprep.subr.bf16.mxu0 0
        %1954 = vmatpush1.bf16.msra.mxu0 0
        %1955 = vmatprep.subr.bf16.mxu0 0
        %1956 = vmatpush1.bf16.msra.mxu0 0
        %1957 = vmatprep.subr.bf16.mxu0 0
        %1958 = vmatpush1.bf16.msra.mxu0 0
        %1959 = vmatprep.subr.bf16.mxu0 0
        %1960 = vmatpush1.bf16.msra.mxu0 0
        %1961 = vmatprep.subr.bf16.mxu0 0
        %1962 = vmatpush1.bf16.msra.mxu0 0
        %1963 = vmatprep.subr.bf16.mxu0 0
        %1964 = vmatpush1.bf16.msra.mxu0 0
        %1965 = vmatprep.subr.bf16.mxu0 0
        %1966 = vmatpush1.bf16.msra.mxu0 0
        %1967 = vmatprep.subr.bf16.mxu0 0
        %1968 = vmatpush1.bf16.msra.mxu0 0
        %1969 = vmatprep.subr.bf16.mxu0 0
        %1970 = vmatpush1.bf16.msra.mxu0 0
        %1971 = vmatprep.subr.bf16.mxu0 0
        %1972 = vmatpush1.bf16.msra.mxu0 0
        %1973 = vmatprep.subr.bf16.mxu0 0
        %1974 = vmatpush1.bf16.msra.mxu0 0
        %1975 = vmatprep.mubr.bf16.mxu0 0
        %1976 = vmatmul.mubr.bf16.gmra.mrb[0].mxu0 %v1938
        %v1977 = vpop.f32.mrb[0].mxu0
        %v1978 = vadd.f32 0.0, %v1977
        %v1979 = vpop.f32.mrb[0].mxu0
        %v1980 = vpop.f32.mrb[0].mxu0
        %v1981 = vpop.f32.mrb[0].mxu0
        %1982 = vdwg.mxu0
        %v1983 = vpack.c.bf16 %v1978, %v1978
        %v1985 = vsel %vm801, %v1983, 0
        %v1988 = vsel %vm867, %v1553, 0
        %1990 = vmatprep.subr.bf16.mxu0 0
        %1991 = vmatpush1.bf16.msra.mxu0 %v1988
        %1992 = vmatprep.subr.bf16.mxu0 0
        %1993 = vmatpush1.bf16.msra.mxu0 0
        %1994 = vmatprep.subr.bf16.mxu0 0
        %1995 = vmatpush1.bf16.msra.mxu0 0
        %1996 = vmatprep.subr.bf16.mxu0 0
        %1997 = vmatpush1.bf16.msra.mxu0 0
        %1998 = vmatprep.subr.bf16.mxu0 0
        %1999 = vmatpush1.bf16.msra.mxu0 0
        %2000 = vmatprep.subr.bf16.mxu0 0
        %2001 = vmatpush1.bf16.msra.mxu0 0
        %2002 = vmatprep.subr.bf16.mxu0 0
        %2003 = vmatpush1.bf16.msra.mxu0 0
        %2004 = vmatprep.subr.bf16.mxu0 0
        %2005 = vmatpush1.bf16.msra.mxu0 0
        %2006 = vmatprep.subr.bf16.mxu0 0
        %2007 = vmatpush1.bf16.msra.mxu0 0
        %2008 = vmatprep.subr.bf16.mxu0 0
        %2009 = vmatpush1.bf16.msra.mxu0 0
        %2010 = vmatprep.subr.bf16.mxu0 0
        %2011 = vmatpush1.bf16.msra.mxu0 0
        %2012 = vmatprep.subr.bf16.mxu0 0
        %2013 = vmatpush1.bf16.msra.mxu0 0
        %2014 = vmatprep.subr.bf16.mxu0 0
        %2015 = vmatpush1.bf16.msra.mxu0 0
        %2016 = vmatprep.subr.bf16.mxu0 0
        %2017 = vmatpush1.bf16.msra.mxu0 0
        %2018 = vmatprep.subr.bf16.mxu0 0
        %2019 = vmatpush1.bf16.msra.mxu0 0
        %2020 = vmatprep.subr.bf16.mxu0 0
        %2021 = vmatpush1.bf16.msra.mxu0 0
        %2022 = vmatprep.mubr.bf16.mxu0 0
        %2023 = vmatmul.mubr.bf16.gmra.mrb[0].mxu0 %v1985
        %v2024 = vpop.f32.mrb[0].mxu0
        %v2025 = vadd.f32 0.0, %v2024
        %v2026 = vpop.f32.mrb[0].mxu0
        %v2027 = vpop.f32.mrb[0].mxu0
        %v2028 = vpop.f32.mrb[0].mxu0
        %2029 = vdwg.mxu0
        %v2030 = vadd.f32 %v1867, %v2025
        %2031 = vrot.lane.b32.xlu0 %v1549, 104
        %v2032 = vpop.permute.xlu0 %2031
        %2033 = vrot.lane.b32.xlu0 %v1550, 72
        %v2034 = vpop.permute.xlu0 %2033
        %v2036 = vsel %vm801, %v2032, 0
        %v2039 = vsel %vm801, %v2034, 0
        %2041 = vmatprep.subr.bf16.mxu0 0
        %2042 = vmatpush1.bf16.xpose.msra.mxu0 %v2039
        %2043 = vmatprep.subr.bf16.mxu0 0
        %2044 = vmatpush1.bf16.xpose.msra.mxu0 0
        %2045 = vmatprep.subr.bf16.mxu0 0
        %2046 = vmatpush1.bf16.xpose.msra.mxu0 0
        %2047 = vmatprep.subr.bf16.mxu0 0
        %2048 = vmatpush1.bf16.xpose.msra.mxu0 0
        %2049 = vmatprep.subr.bf16.mxu0 0
        %2050 = vmatpush1.bf16.xpose.msra.mxu0 0
        %2051 = vmatprep.subr.bf16.mxu0 0
        %2052 = vmatpush1.bf16.xpose.msra.mxu0 0
        %2053 = vmatprep.subr.bf16.mxu0 0
        %2054 = vmatpush1.bf16.xpose.msra.mxu0 0
        %2055 = vmatprep.subr.bf16.mxu0 0
        %2056 = vmatpush1.bf16.xpose.msra.mxu0 0
        %2057 = vmatprep.subr.bf16.mxu0 0
        %2058 = vmatpush1.bf16.xpose.msra.mxu0 0
        %2059 = vmatprep.subr.bf16.mxu0 0
        %2060 = vmatpush1.bf16.xpose.msra.mxu0 0
        %2061 = vmatprep.subr.bf16.mxu0 0
        %2062 = vmatpush1.bf16.xpose.msra.mxu0 0
        %2063 = vmatprep.subr.bf16.mxu0 0
        %2064 = vmatpush1.bf16.xpose.msra.mxu0 0
        %2065 = vmatprep.subr.bf16.mxu0 0
        %2066 = vmatpush1.bf16.xpose.msra.mxu0 0
        %2067 = vmatprep.subr.bf16.mxu0 0
        %2068 = vmatpush1.bf16.xpose.msra.mxu0 0
        %2069 = vmatprep.subr.bf16.mxu0 0
        %2070 = vmatpush1.bf16.xpose.msra.mxu0 0
        %2071 = vmatprep.subr.bf16.mxu0 0
        %2072 = vmatpush1.bf16.xpose.msra.mxu0 0
        %2073 = vmatprep.mubr.bf16.mxu0 0
        %2074 = vmatmul.mubr.bf16.gmra.mrb[0].mxu0 %v2036
        %v2075 = vpop.f32.mrb[0].mxu0
        %v2076 = vadd.f32 0.0, %v2075
        %v2077 = vpop.f32.mrb[0].mxu0
        %v2078 = vpop.f32.mrb[0].mxu0
        %v2079 = vpop.f32.mrb[0].mxu0
        %2080 = vdwg.mxu0
        %v2081 = vsel %vm1604, -1e+30, %v2076
        %v2082 = vsel %vm801, %v2081, -inf
        %2083 = vmax.xlane.f32.xlu0 %v2082
        %v2084 = vpop.xlane.xlu0 %2083
        %v2085 = vsub.f32 %v2081, %v2084
        %v2086 = vmul.f32 %v2085, 1.442695
        %v2087 = vpow.pop %v2086
        %v2088 = vsel %vm801, %v2087, 0.0
        %2089 = vadd.xlane.f32.xlu0 %v2088
        %v2090 = vpop.xlane.xlu0 %2089
        %v2091 = vrcp.pop %v2090
        %v2092 = vmul.f32 %v2087, %v2091
        %v2093 = vpack.c.bf16 %v2092, %v2092
        %2094 = vrot.lane.b32.xlu0 %v1550, 40
        %v2095 = vpop.permute.xlu0 %2094
        %v2097 = vsel %vm801, %v2093, 0
        %v2100 = vsel %vm867, %v2095, 0
        %2102 = vmatprep.subr.bf16.mxu0 0
        %2103 = vmatpush1.bf16.msra.mxu0 %v2100
        %2104 = vmatprep.subr.bf16.mxu0 0
        %2105 = vmatpush1.bf16.msra.mxu0 0
        %2106 = vmatprep.subr.bf16.mxu0 0
        %2107 = vmatpush1.bf16.msra.mxu0 0
        %2108 = vmatprep.subr.bf16.mxu0 0
        %2109 = vmatpush1.bf16.msra.mxu0 0
        %2110 = vmatprep.subr.bf16.mxu0 0
        %2111 = vmatpush1.bf16.msra.mxu0 0
        %2112 = vmatprep.subr.bf16.mxu0 0
        %2113 = vmatpush1.bf16.msra.mxu0 0
        %2114 = vmatprep.subr.bf16.mxu0 0
        %2115 = vmatpush1.bf16.msra.mxu0 0
        %2116 = vmatprep.subr.bf16.mxu0 0
        %2117 = vmatpush1.bf16.msra.mxu0 0
        %2118 = vmatprep.subr.bf16.mxu0 0
        %2119 = vmatpush1.bf16.msra.mxu0 0
        %2120 = vmatprep.subr.bf16.mxu0 0
        %2121 = vmatpush1.bf16.msra.mxu0 0
        %2122 = vmatprep.subr.bf16.mxu0 0
        %2123 = vmatpush1.bf16.msra.mxu0 0
        %2124 = vmatprep.subr.bf16.mxu0 0
        %2125 = vmatpush1.bf16.msra.mxu0 0
        %2126 = vmatprep.subr.bf16.mxu0 0
        %2127 = vmatpush1.bf16.msra.mxu0 0
        %2128 = vmatprep.subr.bf16.mxu0 0
        %2129 = vmatpush1.bf16.msra.mxu0 0
        %2130 = vmatprep.subr.bf16.mxu0 0
        %2131 = vmatpush1.bf16.msra.mxu0 0
        %2132 = vmatprep.subr.bf16.mxu0 0
        %2133 = vmatpush1.bf16.msra.mxu0 0
        %2134 = vmatprep.mubr.bf16.mxu0 0
        %2135 = vmatmul.mubr.bf16.gmra.mrb[0].mxu0 %v2097
        %v2136 = vpop.f32.mrb[0].mxu0
        %v2137 = vadd.f32 0.0, %v2136
        %v2138 = vpop.f32.mrb[0].mxu0
        %v2139 = vpop.f32.mrb[0].mxu0
        %v2140 = vpop.f32.mrb[0].mxu0
        %2141 = vdwg.mxu0
        %v2142 = vpack.c.bf16 %v2137, %v2137
        %v2144 = vsel %vm801, %v2142, 0
        %v2147 = vsel %vm867, %v1554, 0
        %2149 = vmatprep.subr.bf16.mxu0 0
        %2150 = vmatpush1.bf16.msra.mxu0 %v2147
        %2151 = vmatprep.subr.bf16.mxu0 0
        %2152 = vmatpush1.bf16.msra.mxu0 0
        %2153 = vmatprep.subr.bf16.mxu0 0
        %2154 = vmatpush1.bf16.msra.mxu0 0
        %2155 = vmatprep.subr.bf16.mxu0 0
        %2156 = vmatpush1.bf16.msra.mxu0 0
        %2157 = vmatprep.subr.bf16.mxu0 0
        %2158 = vmatpush1.bf16.msra.mxu0 0
        %2159 = vmatprep.subr.bf16.mxu0 0
        %2160 = vmatpush1.bf16.msra.mxu0 0
        %2161 = vmatprep.subr.bf16.mxu0 0
        %2162 = vmatpush1.bf16.msra.mxu0 0
        %2163 = vmatprep.subr.bf16.mxu0 0
        %2164 = vmatpush1.bf16.msra.mxu0 0
        %2165 = vmatprep.subr.bf16.mxu0 0
        %2166 = vmatpush1.bf16.msra.mxu0 0
        %2167 = vmatprep.subr.bf16.mxu0 0
        %2168 = vmatpush1.bf16.msra.mxu0 0
        %2169 = vmatprep.subr.bf16.mxu0 0
        %2170 = vmatpush1.bf16.msra.mxu0 0
        %2171 = vmatprep.subr.bf16.mxu0 0
        %2172 = vmatpush1.bf16.msra.mxu0 0
        %2173 = vmatprep.subr.bf16.mxu0 0
        %2174 = vmatpush1.bf16.msra.mxu0 0
        %2175 = vmatprep.subr.bf16.mxu0 0
        %2176 = vmatpush1.bf16.msra.mxu0 0
        %2177 = vmatprep.subr.bf16.mxu0 0
        %2178 = vmatpush1.bf16.msra.mxu0 0
        %2179 = vmatprep.subr.bf16.mxu0 0
        %2180 = vmatpush1.bf16.msra.mxu0 0
        %2181 = vmatprep.mubr.bf16.mxu0 0
        %2182 = vmatmul.mubr.bf16.gmra.mrb[0].mxu0 %v2144
        %v2183 = vpop.f32.mrb[0].mxu0
        %v2184 = vadd.f32 0.0, %v2183
        %v2185 = vpop.f32.mrb[0].mxu0
        %v2186 = vpop.f32.mrb[0].mxu0
        %v2187 = vpop.f32.mrb[0].mxu0
        %2188 = vdwg.mxu0
        %v2189 = vadd.f32 %v2030, %v2184
        %v2190 = vld [vmem:[%s10] sm:$0x1]
        %v2192 = vlaneseq
        %v2193 = vshrl.u32 %v2192, 7
        %v2194 = vsub.s32 0, %v2193
        %v2195 = vrot.slane %v2190, %v2194
        %v2197 = vadd.f32 %v2189, %v2195
        %v2198 = vadd.f32 %v1480, %v2197
        %v2199 = vld [vmem:[%s17] sm:$0x1]
        %v2200 = vld [vmem:[%s18] sm:$0x1]
        %v2201 = vsel %vm747, %v2198, 0.0
        %2202 = vadd.xlane.f32.xlu0 %v2201
        %v2203 = vpop.xlane.xlu0 %2202
        %v2204 = vmul.f32 %v2203, %v1449
        %v2205 = vsub.f32 %v2198, %v2204
        %v2206 = vmul.f32 %v2205, %v2205
        %v2207 = vsel %vm747, %v2206, 0.0
        %2208 = vadd.xlane.f32.xlu0 %v2207
        %v2209 = vpop.xlane.xlu0 %2208
        %v2210 = vmul.f32 %v2209, 0.032258064
        %v2211 = vrsqrt.pop %v2210
        %v2212 = vmul.f32 %v2210, %v2211
        %vm2213 = vcmp.eq.f32.partialorder %v2210, inf
        %v2214 = vsel %vm2213, %v2210, %v2212
        %vm2215 = vcmp.eq.f32.partialorder %v2210, 0.0
        %v2216 = vand.u32 %v2210, 2147483648
        %v2217 = vsel %vm2215, %v2216, %v2214
        %v2218 = vadd.f32 %v2217, 1e-06
        %v2219 = vrcp.pop %v2218
        %v2221 = vlaneseq
        %v2222 = vshrl.u32 %v2221, 7
        %v2223 = vsub.s32 0, %v2222
        %v2224 = vrot.slane %v2199, %v2223
        %v2226 = vmul.f32 %v2224, %v2205
        %v2227 = vmul.f32 %v2226, %v2219
        %v2229 = vlaneseq
        %v2230 = vshrl.u32 %v2229, 7
        %v2231 = vsub.s32 0, %v2230
        %v2232 = vrot.slane %v2200, %v2231
        %v2234 = vadd.f32 %v2227, %v2232
        %v2235 = vpack.c.bf16 %v2234, %v2234
        %v2236 = vld [vmem:[#allocation10] sm:$0xf]
        %v2237 = vld [vmem:[#allocation10 + $0x4] sm:$0xf]
        %v2238 = vld [vmem:[#allocation10 + $0x8] sm:$0xf]
        %v2239 = vld [vmem:[#allocation10 + $0xc] sm:$0xf]
        %v2240 = vld [vmem:[%s12] sm:$0x1]
        %v2242 = vlaneseq
        %v2243 = vshrl.u32 %v2242, 7
        %v2244 = vsub.s32 0, %v2243
        %v2245 = vrot.slane %v2240, %v2244
        %v2251 = vunpack.c.l.b16 %v2236
        %v2252 = vunpack.c.l.b16 %v2237
        %v2253 = vunpack.c.l.b16 %v2238
        %v2254 = vunpack.c.l.b16 %v2239
        %v2255 = vpack.c.b16 %v2252, %v2251
        %v2256 = vpack.c.b16 %v2254, %v2253
        %v2260 = vsel %vm747, %v2235, 0
        %2262 = vmatprep.subr.bf16.mxu0 0
        %2263 = vmatpush1.bf16.msra.mxu0 %v2255
        %2264 = vmatprep.subr.bf16.mxu0 0
        %2265 = vmatpush1.bf16.msra.mxu0 %v2256
        %2266 = vmatprep.subr.bf16.mxu0 0
        %2267 = vmatpush1.bf16.msra.mxu0 0
        %2268 = vmatprep.subr.bf16.mxu0 0
        %2269 = vmatpush1.bf16.msra.mxu0 0
        %2270 = vmatprep.subr.bf16.mxu0 0
        %2271 = vmatpush1.bf16.msra.mxu0 0
        %2272 = vmatprep.subr.bf16.mxu0 0
        %2273 = vmatpush1.bf16.msra.mxu0 0
        %2274 = vmatprep.subr.bf16.mxu0 0
        %2275 = vmatpush1.bf16.msra.mxu0 0
        %2276 = vmatprep.subr.bf16.mxu0 0
        %2277 = vmatpush1.bf16.msra.mxu0 0
        %2278 = vmatprep.subr.bf16.mxu0 0
        %2279 = vmatpush1.bf16.msra.mxu0 0
        %2280 = vmatprep.subr.bf16.mxu0 0
        %2281 = vmatpush1.bf16.msra.mxu0 0
        %2282 = vmatprep.subr.bf16.mxu0 0
        %2283 = vmatpush1.bf16.msra.mxu0 0
        %2284 = vmatprep.subr.bf16.mxu0 0
        %2285 = vmatpush1.bf16.msra.mxu0 0
        %2286 = vmatprep.subr.bf16.mxu0 0
        %2287 = vmatpush1.bf16.msra.mxu0 0
        %2288 = vmatprep.subr.bf16.mxu0 0
        %2289 = vmatpush1.bf16.msra.mxu0 0
        %2290 = vmatprep.subr.bf16.mxu0 0
        %2291 = vmatpush1.bf16.msra.mxu0 0
        %2292 = vmatprep.subr.bf16.mxu0 0
        %2293 = vmatpush1.bf16.msra.mxu0 0
        %2294 = vmatprep.mubr.bf16.mxu0 0
        %2295 = vmatmul.mubr.bf16.gmra.mrb[0].mxu0 %v2260
        %v2296 = vpop.f32.mrb[0].mxu0
        %v2297 = vadd.f32 %v2245, %v2296
        %v2298 = vpop.f32.mrb[0].mxu0
        %v2299 = vpop.f32.mrb[0].mxu0
        %v2300 = vpop.f32.mrb[0].mxu0
        %2301 = vdwg.mxu0
        %v2302 = vmax.f32 %v2297, 0.0
        %v2303 = vpack.c.bf16 %v2302, %v2302
        %v2304 = vld [vmem:[%s13] sm:$0xf]
        %v2305 = vld [vmem:[%s13 + $0x4] sm:$0xf]
        %v2306 = vld [vmem:[%s13 + $0x8] sm:$0xf]
        %v2307 = vld [vmem:[%s13 + $0xc] sm:$0xf]
        %v2308 = vld [vmem:[%s13 + $0x10] sm:$0xf]
        %v2309 = vld [vmem:[%s13 + $0x14] sm:$0xf]
        %v2310 = vld [vmem:[%s13 + $0x18] sm:$0xf]
        %v2311 = vld [vmem:[%s13 + $0x1c] sm:$0xf]
        %v2312 = vld [vmem:[%s14] sm:$0x1]
        %v2314 = vlaneseq
        %v2315 = vshrl.u32 %v2314, 7
        %v2316 = vsub.s32 0, %v2315
        %v2317 = vrot.slane %v2312, %v2316
        %v2327 = vunpack.c.l.b16 %v2304
        %v2328 = vunpack.c.l.b16 %v2305
        %v2329 = vunpack.c.l.b16 %v2306
        %v2330 = vunpack.c.l.b16 %v2307
        %v2331 = vunpack.c.l.b16 %v2308
        %v2332 = vunpack.c.l.b16 %v2309
        %v2333 = vunpack.c.l.b16 %v2310
        %v2334 = vunpack.c.l.b16 %v2311
        %v2335 = vpack.c.b16 %v2328, %v2327
        %v2336 = vpack.c.b16 %v2330, %v2329
        %v2337 = vpack.c.b16 %v2332, %v2331
        %v2338 = vpack.c.b16 %v2334, %v2333
        %vm2343 = vcmask 523264
        %v2345 = vsel %vm2343, %v2303, 0
        %2347 = vmatprep.subr.bf16.mxu0 0
        %2348 = vmatpush1.bf16.msra.mxu0 %v2335
        %2349 = vmatprep.subr.bf16.mxu0 0
        %2350 = vmatpush1.bf16.msra.mxu0 %v2336
        %2351 = vmatprep.subr.bf16.mxu0 0
        %2352 = vmatpush1.bf16.msra.mxu0 %v2337
        %2353 = vmatprep.subr.bf16.mxu0 0
        %2354 = vmatpush1.bf16.msra.mxu0 %v2338
        %2355 = vmatprep.subr.bf16.mxu0 0
        %2356 = vmatpush1.bf16.msra.mxu0 0
        %2357 = vmatprep.subr.bf16.mxu0 0
        %2358 = vmatpush1.bf16.msra.mxu0 0
        %2359 = vmatprep.subr.bf16.mxu0 0
        %2360 = vmatpush1.bf16.msra.mxu0 0
        %2361 = vmatprep.subr.bf16.mxu0 0
        %2362 = vmatpush1.bf16.msra.mxu0 0
        %2363 = vmatprep.subr.bf16.mxu0 0
        %2364 = vmatpush1.bf16.msra.mxu0 0
        %2365 = vmatprep.subr.bf16.mxu0 0
        %2366 = vmatpush1.bf16.msra.mxu0 0
        %2367 = vmatprep.subr.bf16.mxu0 0
        %2368 = vmatpush1.bf16.msra.mxu0 0
        %2369 = vmatprep.subr.bf16.mxu0 0
        %2370 = vmatpush1.bf16.msra.mxu0 0
        %2371 = vmatprep.subr.bf16.mxu0 0
        %2372 = vmatpush1.bf16.msra.mxu0 0
        %2373 = vmatprep.subr.bf16.mxu0 0
        %2374 = vmatpush1.bf16.msra.mxu0 0
        %2375 = vmatprep.subr.bf16.mxu0 0
        %2376 = vmatpush1.bf16.msra.mxu0 0
        %2377 = vmatprep.subr.bf16.mxu0 0
        %2378 = vmatpush1.bf16.msra.mxu0 0
        %2379 = vmatprep.mubr.bf16.mxu0 0
        %2380 = vmatmul.mubr.bf16.gmra.mrb[0].mxu0 %v2345
        %v2381 = vpop.f32.mrb[0].mxu0
        %v2382 = vadd.f32 %v2317, %v2381
        %v2383 = vpop.f32.mrb[0].mxu0
        %v2384 = vpop.f32.mrb[0].mxu0
        %v2385 = vpop.f32.mrb[0].mxu0
        %2386 = vdwg.mxu0
        %v2387 = vadd.f32 %v2234, %v2382
        %v2388 = vld [vmem:[%s19] sm:$0x1]
        %v2389 = vld [vmem:[%s20] sm:$0x1]
        %v2390 = vsel %vm747, %v2387, 0.0
        %2391 = vadd.xlane.f32.xlu0 %v2390
        %v2392 = vpop.xlane.xlu0 %2391
        %v2393 = vmul.f32 %v2392, %v1449
        %v2394 = vsub.f32 %v2387, %v2393
        %v2395 = vmul.f32 %v2394, %v2394
        %v2396 = vsel %vm747, %v2395, 0.0
        %2397 = vadd.xlane.f32.xlu0 %v2396
        %v2398 = vpop.xlane.xlu0 %2397
        %v2399 = vmul.f32 %v2398, 0.032258064
        %v2400 = vrsqrt.pop %v2399
        %v2401 = vmul.f32 %v2399, %v2400
        %vm2402 = vcmp.eq.f32.partialorder %v2399, inf
        %v2403 = vsel %vm2402, %v2399, %v2401
        %vm2404 = vcmp.eq.f32.partialorder %v2399, 0.0
        %v2405 = vand.u32 %v2399, 2147483648
        %v2406 = vsel %vm2404, %v2405, %v2403
        %v2407 = vadd.f32 %v2406, 1e-06
        %v2408 = vrcp.pop %v2407
        %v2410 = vlaneseq
        %v2411 = vshrl.u32 %v2410, 7
        %v2412 = vsub.s32 0, %v2411
        %v2413 = vrot.slane %v2388, %v2412
        %v2415 = vmul.f32 %v2413, %v2394
        %v2416 = vmul.f32 %v2415, %v2408
        %v2418 = vlaneseq
        %v2419 = vshrl.u32 %v2418, 7
        %v2420 = vsub.s32 0, %v2419
        %v2421 = vrot.slane %v2389, %v2420
        %v2423 = vadd.f32 %v2416, %v2421
        %2424 = vst.msk [vmem:[%s714] sm:$0xff] %vm747, %v2423
        %s2425 = sand.u32 %s492, 1
        %s2426 = scalar_lea.sflag [#allocation4], %s2425
        %s2427 = sand.u32 %s492, 1
        %s2428 = smul.addr %s2427, 8
        %s2429 = scalar_lea.vmem [#allocation11], %s2428
        // Predicated region
        $region125: #{tpu_custom_call.1} parent=103 // pred_check
          %p2430 = pneg %p502
        $region126: #{tpu_custom_call.1} parent=103 // pred_check_branch
          %2432 = sbr.rel (%p2430) target = $region128
        $region127: #{tpu_custom_call.1} parent=103 // pred_region
          %s2434 = ssub.s32 128, 128
          %2435 = vsyncadd %s2426, %s2434
          %s2436 = smul.addr %s38, 128
          %s2437 = scalar_lea.hbm %s21, %s2436
          %s2439 = sshll.u32 %s2429, 4
          %s2440 = int_to_ptr.vmem [resolvable:$true] %s2439
          %2442 = dma.vmem_to_hbm [thread:$0]  %s2440, 128, %s2437, %s2426
        $region128: #{tpu_custom_call.1} parent=103 // pred_fallthru
          _
      $region104: #{tpu_custom_call.1} parent=5 // pred_fallthru
        _
      %p2443 = scmp.le.s32.totalorder 2, %s33
      // Predicated region
      $region129: #{tpu_custom_call.1} parent=5 // pred_check
        %p2444 = pneg %p2443
      $region130: #{tpu_custom_call.1} parent=5 // pred_check_branch
        %2446 = sbr.rel (%p2444) target = $region132
      $region131: #{tpu_custom_call.1} parent=5 // pred_region
        %s2447 = ssub.s32 %s33, 2
        // Predicated region
        $region133: #{tpu_custom_call.1} parent=131 // pred_check
          %p2448 = pneg %p508
        $region134: #{tpu_custom_call.1} parent=131 // pred_check_branch
          %2450 = sbr.rel (%p2448) target = $region136
        $region135: #{tpu_custom_call.1} parent=131 // pred_region
          %s2451 = sand.u32 %s493, 1
          %s2452 = scalar_lea.sflag [#allocation4], %s2451
          %s2453 = sand.u32 %s493, 1
          %s2454 = smul.addr %s2453, 8
          %s2455 = scalar_lea.vmem [#allocation11], %s2454
          %2456 = dma.done %s2452, 128
        $region136: #{tpu_custom_call.1} parent=131 // pred_fallthru
          _
      $region132: #{tpu_custom_call.1} parent=5 // pred_fallthru
        _
    $region6: #{tpu_custom_call.1} parent=1 // loop_footer
      %s37 = sadd.s32 1, %s33
    $region7: #{tpu_custom_call.1} parent=1 // loop_footer_branch
      %32 = sbr.rel target = $region3
    $region8: #{tpu_custom_call.1} parent=1 // loop_exit
      _
    %2457 = vsyncpa [#allocation3], 1
    %s2458 = scalar_lea.sflag [#allocation3], 1
    %2459 = vsyncpa %s2458, 1
    %2460 = vsyncpa [#allocation6], 1
    %2461 = vsyncpa [#allocation9], 1
    %2462 = vsyncpa [#allocation4], 1
    %s2463 = scalar_lea.sflag [#allocation4], 1
    %2464 = vsyncpa %s2463, 1

</llo_original>
